<compile_context>
chip_gen: v7x
topology: tpu7x:2x2x1
jax: 0.10.0
libtpu: 0.0.40
codegen_flags: <defaults>
</compile_context>

<pallas_src>
import functools

import jax
import jax.numpy as jnp
from jax.experimental import pallas as pl
from jax.experimental.pallas import tpu as pltpu


# ----------------------------------------------------------------------------
# helpers (mirror the PyTorch module's padding logic, incl. negative = crop)
# ----------------------------------------------------------------------------
def padding_to_multiple_of(n, mult):
    r = n % mult
    return 0 if r == 0 else mult - r


def _pad_axis(x, left, right, axis):
    """torch.nn.functional.pad-style padding on one axis; negatives crop."""
    if left < 0:
        x = jax.lax.slice_in_dim(x, -left, x.shape[axis], axis=axis)
        left = 0
    if right < 0:
        x = jax.lax.slice_in_dim(x, 0, x.shape[axis] + right, axis=axis)
        right = 0
    if left > 0 or right > 0:
        pads = [(0, 0)] * x.ndim
        pads[axis] = (left, right)
        x = jnp.pad(x, pads)
    return x


def _prepare_chunks(seq, context, *, chunk_size, context_chunk_size,
                    has_start_token, context_has_start_token):
    """Pad + chunk exactly like the PyTorch forward; returns chunked tensors
    plus the output re-padding amounts."""
    b, _, dim = seq.shape
    cdim = context.shape[-1]
    seq_len = seq.shape[-2] - (1 if has_start_token else 0)
    context_len = context.shape[-2] - (1 if context_has_start_token else 0)

    seq_left_pad = -1 if has_start_token else 0
    seq_right_pad = padding_to_multiple_of(seq_len, chunk_size)
    seq_out_left_pad = -seq_left_pad
    seq_out_right_pad = -seq_right_pad
    # NOTE: mirrors the module literally (conditions on context_chunk_size,
    # not on context_has_start_token) — intentional fidelity to the spec.
    context_left_pad = context_chunk_size - (1 if context_chunk_size else 0)
    context_right_pad = padding_to_multiple_of(context_len, context_chunk_size)

    seq_p = _pad_axis(seq, seq_left_pad, seq_right_pad, axis=1)
    ctx_p = _pad_axis(context, context_left_pad, context_right_pad, axis=1)

    seq_c = seq_p.reshape(b, -1, chunk_size, dim)
    ctx_c = ctx_p.reshape(b, -1, context_chunk_size, cdim)

    n_seq, n_ctx = seq_c.shape[1], ctx_c.shape[1]
    if n_seq <= n_ctx:
        ctx_c = ctx_c[:, :n_seq]
    else:
        seq_c = seq_c[:, :n_ctx]
        seq_out_right_pad += chunk_size * (n_seq - n_ctx)

    return seq_c, ctx_c, seq_out_left_pad, seq_out_right_pad


# ----------------------------------------------------------------------------
# fused multi-chunk cross-attention kernel (one grid step = NC chunks)
# ----------------------------------------------------------------------------
def _cross_attn_block_kernel(seq_ref, ctx_ref, wq_ref, wk_ref, wv_ref,
                             wout_ref, nullk_ref, nullv_ref, thw_ref, thb_ref,
                             out_ref, *, heads, dim_head, scale):
    nc, cs, dim = seq_ref.shape
    _, cc, cdim = ctx_ref.shape
    rows_q = nc * cs
    rows_kv = nc * cc
    proj_dtype = wq_ref.dtype          # f32 by default, bf16 if requested

    # --- dense projections: collapse the chunk dim into M (free reshape) ----
    x = seq_ref[...].reshape(rows_q, dim).astype(proj_dtype)
    ctx = ctx_ref[...].reshape(rows_kv, cdim).astype(proj_dtype)

    q = jnp.dot(x, wq_ref[...], preferred_element_type=jnp.float32) * scale
    k = jnp.dot(ctx, wk_ref[...], preferred_element_type=jnp.float32)
    v = jnp.dot(ctx, wv_ref[...], preferred_element_type=jnp.float32)

    # --- per-head attention with decomposed null column (no concats) --------
    attn_heads = []        # (nc, cs, cc) fp32 normalized attention (real cols)
    attn_null = []         # (nc, cs)     fp32 normalized null-column weight
    v_heads = []           # (nc, cc, dh) fp32 values
    for h in range(heads):                      # short static unroll
        sl = slice(h * dim_head, (h + 1) * dim_head)
        q_h = q[:, sl].reshape(nc, cs, dim_head)
        k_h = k[:, sl].reshape(nc, cc, dim_head)
        v_h = v[:, sl].reshape(nc, cc, dim_head)
        null_k_h = nullk_ref[h:h + 1, :]                       # (1, dh)

        sim = jnp.einsum('ncd,nkd->nck', q_h, k_h,
                         preferred_element_type=jnp.float32)   # (nc, cs, cc)
        null_logit = jnp.sum(q_h * null_k_h[None, :, :], axis=-1)  # (nc, cs)

        m = jnp.maximum(jnp.max(sim, axis=-1), null_logit)     # (nc, cs)
        p = jnp.exp(sim - m[..., None])
        p_null = jnp.exp(null_logit - m)
        inv = 1.0 / (jnp.sum(p, axis=-1) + p_null)             # exact fp32
        attn_heads.append(p * inv[..., None])
        attn_null.append(p_null * inv)
        v_heads.append(v_h)

    # --- talking heads + attn@V + output projection (accumulate into Wout) --
    acc = jnp.zeros((rows_q, dim), jnp.float32)
    for g in range(heads):
        mixed = attn_heads[0] * thw_ref[g, 0]
        mixed_null = attn_null[0] * thw_ref[g, 0]
        for h in range(1, heads):
            mixed = mixed + attn_heads[h] * thw_ref[g, h]
            mixed_null = mixed_null + attn_null[h] * thw_ref[g, h]
        bias = thb_ref[g]
        mixed = mixed + bias            # bias hits null column too (= module)
        mixed_null = mixed_null + bias

        o_g = jnp.einsum('nck,nkd->ncd', mixed, v_heads[g],
                         preferred_element_type=jnp.float32)    # (nc, cs, dh)
        null_v_g = nullv_ref[g:g + 1, :]                        # (1, dh)
        o_g = o_g + mixed_null[..., None] * null_v_g[None, :, :]

        acc = acc + jnp.dot(
            o_g.reshape(rows_q, dim_head).astype(wout_ref.dtype),
            wout_ref[g], preferred_element_type=jnp.float32)    # (rows_q, dim)

    out_ref[...] = acc.reshape(nc, cs, dim).astype(out_ref.dtype)


# ----------------------------------------------------------------------------
# wrapper (forward pass)
# ----------------------------------------------------------------------------
def cross_modality_cross_attention(seq, context, params, *, chunk_size,
                                   context_chunk_size, heads, dim_head,
                                   has_start_token=True,
                                   context_has_start_token=True,
                                   nc_target=64,
                                   projection_dtype=jnp.float32):
    # TODO(synk): norm/norm_context (LayerNorm), dropout>0, and mask/context_mask
    # handling are not implemented; this matches the module defaults
    # (Identity norms, dropout=0.0, masks=None).
    b, _, dim = seq.shape
    context_dim = context.shape[-1]
    inner = heads * dim_head
    scale = dim_head ** -0.5

    seq_c, ctx_c, out_left_pad, out_right_pad = _prepare_chunks(
        seq, context, chunk_size=chunk_size,
        context_chunk_size=context_chunk_size,
        has_start_token=has_start_token,
        context_has_start_token=context_has_start_token)

    n = seq_c.shape[1]
    if n == 0:
        return jnp.zeros(seq.shape, seq.dtype)

    bn = b * n
    # Batch NC chunks per grid step; keep >= 2 grid steps (when possible) so
    # the "parallel" grid axis can shard across v7x's two TensorCores.
    steps = max(pl.cdiv(bn, nc_target), 2 if bn >= 2 else 1)
    nc = pl.cdiv(bn, steps)
    bn_pad = steps * nc

    seq_flat = seq_c.reshape(bn, chunk_size, dim)
    ctx_flat = ctx_c.reshape(bn, context_chunk_size, context_dim)
    if bn_pad != bn:
        seq_flat = jnp.pad(seq_flat, ((0, bn_pad - bn), (0, 0), (0, 0)))
        ctx_flat = jnp.pad(ctx_flat, ((0, bn_pad - bn), (0, 0), (0, 0)))

    # Pre-split weights outside the kernel (layout plumbing, done once):
    #   Wkv -> Wk, Wv (two full-lane-width matmuls instead of a lane slice)
    #   Wout -> (heads, dim_head, dim) so per-head blocks are leading-dim reads
    wq = params["wq"].astype(projection_dtype)
    wk = params["wkv"][:, :inner].astype(projection_dtype)
    wv = params["wkv"][:, inner:].astype(projection_dtype)
    wout3 = params["wout"].reshape(heads, dim_head, dim).astype(projection_dtype)

    kernel = functools.partial(_cross_attn_block_kernel, heads=heads,
                               dim_head=dim_head, scale=scale)

    out_flat = pl.pallas_call(
        kernel,
        out_shape=jax.ShapeDtypeStruct((bn_pad, chunk_size, dim), seq.dtype),
        grid_spec=pltpu.PrefetchScalarGridSpec(
            num_scalar_prefetch=0,
            grid=(steps,),
            in_specs=[
                pl.BlockSpec((nc, chunk_size, dim), lambda i: (i, 0, 0)),
                pl.BlockSpec((nc, context_chunk_size, context_dim),
                             lambda i: (i, 0, 0)),
                # VMEM-resident weights (constant index_map). For very large
                # dim, add pipeline_mode=pl.Buffered(1) / a K-reduction axis.
                pl.BlockSpec((dim, inner), lambda i: (0, 0)),           # Wq
                pl.BlockSpec((context_dim, inner), lambda i: (0, 0)),   # Wk
                pl.BlockSpec((context_dim, inner), lambda i: (0, 0)),   # Wv
                pl.BlockSpec((heads, dim_head, dim), lambda i: (0, 0, 0)),  # Wout
                pl.BlockSpec((heads, dim_head), lambda i: (0, 0)),      # null_k
                pl.BlockSpec((heads, dim_head), lambda i: (0, 0)),      # null_v
                pl.BlockSpec(memory_space=pltpu.MemorySpace.SMEM),      # th_w
                pl.BlockSpec(memory_space=pltpu.MemorySpace.SMEM),      # th_b
            ],
            out_specs=pl.BlockSpec((nc, chunk_size, dim), lambda i: (i, 0, 0)),
        ),
        compiler_params=pltpu.CompilerParams(
            dimension_semantics=("parallel",),
            vmem_limit_bytes=32 * 1024 * 1024),
    )(seq_flat, ctx_flat, wq, wk, wv, wout3,
      params["null_k"], params["null_v"], params["th_w"], params["th_b"])

    out = out_flat[:bn].reshape(b, n * chunk_size, dim)
    out = _pad_axis(out, out_left_pad, out_right_pad, axis=1)
    return out


# ----------------------------------------------------------------------------
# pure-JAX reference (mirrors the PyTorch forward) for correctness checking
# ----------------------------------------------------------------------------
def _reference_forward(seq, context, params, *, chunk_size, context_chunk_size,
                       heads, dim_head, has_start_token=True,
                       context_has_start_token=True):
    hp = jax.lax.Precision.HIGHEST
    b, _, _ = seq.shape
    inner = heads * dim_head
    scale = dim_head ** -0.5

    seq_c, ctx_c, lp, rp = _prepare_chunks(
        seq, context, chunk_size=chunk_size,
        context_chunk_size=context_chunk_size,
        has_start_token=has_start_token,
        context_has_start_token=context_has_start_token)
    n = seq_c.shape[1]
    if n == 0:
        return jnp.zeros(seq.shape, seq.dtype)

    q = jnp.einsum('bncd,de->bnce', seq_c, params['wq'], precision=hp)
    kv = jnp.einsum('bncd,de->bnce', ctx_c, params['wkv'], precision=hp)
    k, v = kv[..., :inner], kv[..., inner:]

    def split_heads(t):
        b_, n_, c_, _ = t.shape
        return t.reshape(b_, n_, c_, heads, dim_head).transpose(0, 3, 1, 2, 4)

    qh, kh, vh = map(split_heads, (q, k, v))
    qh = qh * scale
    nk = jnp.broadcast_to(params['null_k'][None, :, None, None, :],
                          (b, heads, n, 1, dim_head))
    nv = jnp.broadcast_to(params['null_v'][None, :, None, None, :],
                          (b, heads, n, 1, dim_head))
    kh = jnp.concatenate([nk, kh], axis=-2)
    vh = jnp.concatenate([nv, vh], axis=-2)

    sim = jnp.einsum('bhnid,bhnjd->bhnij', qh, kh, precision=hp)
    attn = jax.nn.softmax(sim.astype(jnp.float32), axis=-1)
    attn = jnp.einsum('gh,bhnij->bgnij', params['th_w'], attn, precision=hp)
    attn = attn + params['th_b'][None, :, None, None, None]
    out = jnp.einsum('bhnij,bhnjd->bhnid', attn, vh, precision=hp)
    out = out.transpose(0, 2, 3, 1, 4).reshape(b, n * chunk_size, inner)
    out = jnp.einsum('bcd,de->bce', out, params['wout'], precision=hp)
    out = _pad_axis(out, lp, rp, axis=1)
    return out


def init_params(key, *, dim, context_dim, heads, dim_head):
    inner = heads * dim_head
    ks = jax.random.split(key, 7)

    def scaled(k, shape, fan_in):
        return jax.random.normal(k, shape, jnp.float32) / jnp.sqrt(fan_in)

    return dict(
        wq=scaled(ks[0], (dim, inner), dim),
        wkv=scaled(ks[1], (context_dim, 2 * inner), context_dim),
        wout=scaled(ks[2], (inner, dim), inner),
        null_k=jax.random.normal(ks[3], (heads, dim_head), jnp.float32),
        null_v=jax.random.normal(ks[4], (heads, dim_head), jnp.float32),
        th_w=scaled(ks[5], (heads, heads), heads),
        th_b=scaled(ks[6], (heads,), heads),
    )


if __name__ == "__main__":
    key = jax.random.PRNGKey(0)
    k_par, k_seq, k_ctx = jax.random.split(key, 3)

    # small but TPU-friendly config (dim multiple of 128 for lane-dense stores)
    dim = 128
    context_dim = 64
    heads = 4
    dim_head = 32
    chunk_size = 8
    context_chunk_size = 16
    batch = 2
    seq_tokens = 1 + 32      # start token + 32 tokens -> 4 chunks of 8
    ctx_tokens = 1 + 50      # start token + 50 tokens -> padded to chunks of 16

    params = init_params(k_par, dim=dim, context_dim=context_dim,
                         heads=heads, dim_head=dim_head)
    seq = jax.random.normal(k_seq, (batch, seq_tokens, dim), jnp.float32)
    context = jax.random.normal(k_ctx, (batch, ctx_tokens, context_dim),
                                jnp.float32)

    cfg = dict(chunk_size=chunk_size, context_chunk_size=context_chunk_size,
               heads=heads, dim_head=dim_head,
               has_start_token=True, context_has_start_token=True)

    out = cross_modality_cross_attention(seq, context, params, **cfg)
    out = jax.block_until_ready(out)

    ref = _reference_forward(seq, context, params, **cfg)
    assert out.shape == seq.shape, (out.shape, seq.shape)
    max_err = float(jnp.max(jnp.abs(out - ref)))
    assert jnp.allclose(out, ref, atol=2e-3, rtol=2e-3), max_err

    print("KERNEL_OK")
</pallas_src>

<mosaic_0001>
module attributes {stable_mosaic.version = 11 : i64} {
  func.func @_cross_attn_block_kernel(%arg0: i32, %arg1: memref<4x8x128xf32, #tpu.memory_space<vmem>>, %arg2: memref<4x16x64xf32, #tpu.memory_space<vmem>>, %arg3: memref<128x128xf32, #tpu.memory_space<vmem>>, %arg4: memref<64x128xf32, #tpu.memory_space<vmem>>, %arg5: memref<64x128xf32, #tpu.memory_space<vmem>>, %arg6: memref<4x32x128xf32, #tpu.memory_space<vmem>>, %arg7: memref<4x32xf32, #tpu.memory_space<vmem>>, %arg8: memref<4x32xf32, #tpu.memory_space<vmem>>, %arg9: memref<4x4xf32, #tpu.memory_space<smem>>, %arg10: memref<4xf32, #tpu.memory_space<smem>>, %arg11: memref<4x8x128xf32, #tpu.memory_space<vmem>>) attributes {dimension_semantics = [#tpu.dimension_semantics<parallel>], iteration_bounds = array<i64: 2>, scalar_prefetch = 0 : i64, scratch_operands = 0 : i64, tpu.core_type = #tpu.core_type<tc>, window_params = [{transform_indices = @transform_0, window_bounds = array<i64: 4, 8, 128>}, {transform_indices = @transform_1, window_bounds = array<i64: 4, 16, 64>}, {pipeline_mode = #tpu.pipeline_mode<synchronous>, transform_indices = @transform_2, window_bounds = array<i64: 128, 128>}, {pipeline_mode = #tpu.pipeline_mode<synchronous>, transform_indices = @transform_3, window_bounds = array<i64: 64, 128>}, {pipeline_mode = #tpu.pipeline_mode<synchronous>, transform_indices = @transform_4, window_bounds = array<i64: 64, 128>}, {pipeline_mode = #tpu.pipeline_mode<synchronous>, transform_indices = @transform_5, window_bounds = array<i64: 4, 32, 128>}, {pipeline_mode = #tpu.pipeline_mode<synchronous>, transform_indices = @transform_6, window_bounds = array<i64: 4, 32>}, {pipeline_mode = #tpu.pipeline_mode<synchronous>, transform_indices = @transform_7, window_bounds = array<i64: 4, 32>}, {transform_indices = @transform_8, window_bounds = array<i64: 4, 4>}, {transform_indices = @transform_9, window_bounds = array<i64: 4>}, {transform_indices = @transform_10, window_bounds = array<i64: 4, 8, 128>}]} {
    %c0 = arith.constant 0 : index
    %c0_0 = arith.constant 0 : index
    %c0_1 = arith.constant 0 : index
    %0 = vector.load %arg1[%c0, %c0_0, %c0_1] : memref<4x8x128xf32, #tpu.memory_space<vmem>>, vector<4x8x128xf32>
    %1 = vector.shape_cast %0 : vector<4x8x128xf32> to vector<32x128xf32>
    %c0_2 = arith.constant 0 : index
    %c0_3 = arith.constant 0 : index
    %c0_4 = arith.constant 0 : index
    %2 = vector.load %arg2[%c0_2, %c0_3, %c0_4] : memref<4x16x64xf32, #tpu.memory_space<vmem>>, vector<4x16x64xf32>
    %3 = vector.shape_cast %2 : vector<4x16x64xf32> to vector<64x64xf32>
    %c0_5 = arith.constant 0 : index
    %c0_6 = arith.constant 0 : index
    %4 = vector.load %arg3[%c0_5, %c0_6] : memref<128x128xf32, #tpu.memory_space<vmem>>, vector<128x128xf32>
    %cst = arith.constant dense<0.000000e+00> : vector<32x128xf32>
    %5 = tpu.matmul %1, %4, %cst {dimension_numbers = #tpu.dot_dimension_numbers<[1], [0], [0], [1], [0, 0, 1, 1], [], []>} : vector<32x128xf32>, vector<128x128xf32>, vector<32x128xf32> -> vector<32x128xf32>
    %cst_7 = arith.constant 0.176776692 : f32
    %6 = vector.broadcast %cst_7 : f32 to vector<32x128xf32>
    %7 = arith.mulf %5, %6 : vector<32x128xf32>
    %c0_8 = arith.constant 0 : index
    %c0_9 = arith.constant 0 : index
    %8 = vector.load %arg4[%c0_8, %c0_9] : memref<64x128xf32, #tpu.memory_space<vmem>>, vector<64x128xf32>
    %cst_10 = arith.constant dense<0.000000e+00> : vector<64x128xf32>
    %9 = tpu.matmul %3, %8, %cst_10 {dimension_numbers = #tpu.dot_dimension_numbers<[1], [0], [0], [1], [0, 0, 1, 1], [], []>} : vector<64x64xf32>, vector<64x128xf32>, vector<64x128xf32> -> vector<64x128xf32>
    %c0_11 = arith.constant 0 : index
    %c0_12 = arith.constant 0 : index
    %10 = vector.load %arg5[%c0_11, %c0_12] : memref<64x128xf32, #tpu.memory_space<vmem>>, vector<64x128xf32>
    %cst_13 = arith.constant dense<0.000000e+00> : vector<64x128xf32>
    %11 = tpu.matmul %3, %10, %cst_13 {dimension_numbers = #tpu.dot_dimension_numbers<[1], [0], [0], [1], [0, 0, 1, 1], [], []>} : vector<64x64xf32>, vector<64x128xf32>, vector<64x128xf32> -> vector<64x128xf32>
    %12 = vector.extract_strided_slice %7 {offsets = [0, 0], sizes = [32, 32], strides = [1, 1]} : vector<32x128xf32> to vector<32x32xf32>
    %13 = vector.shape_cast %12 : vector<32x32xf32> to vector<4x8x32xf32>
    %14 = vector.extract_strided_slice %9 {offsets = [0, 0], sizes = [64, 32], strides = [1, 1]} : vector<64x128xf32> to vector<64x32xf32>
    %15 = vector.shape_cast %14 : vector<64x32xf32> to vector<4x16x32xf32>
    %16 = vector.extract_strided_slice %11 {offsets = [0, 0], sizes = [64, 32], strides = [1, 1]} : vector<64x128xf32> to vector<64x32xf32>
    %17 = vector.shape_cast %16 : vector<64x32xf32> to vector<4x16x32xf32>
    %c0_14 = arith.constant 0 : index
    %c0_15 = arith.constant 0 : index
    %18 = vector.load %arg7[%c0_14, %c0_15] : memref<4x32xf32, #tpu.memory_space<vmem>>, vector<1x32xf32>
    "tpu.trace_start"() <{level = 10 : i32, message = "ncd,nkd->nck"}> : () -> ()
    %cst_16 = arith.constant dense<0.000000e+00> : vector<4x8x16xf32>
    %19 = tpu.matmul %13, %15, %cst_16 {dimension_numbers = #tpu.dot_dimension_numbers<[2], [2], [1], [1], [0, 0, 0, 1, 1, 1], [0], [0]>} : vector<4x8x32xf32>, vector<4x16x32xf32>, vector<4x8x16xf32> -> vector<4x8x16xf32>
    "tpu.trace_stop"() : () -> ()
    %20 = vector.shape_cast %18 : vector<1x32xf32> to vector<1x1x32xf32>
    %21 = vector.broadcast %20 : vector<1x1x32xf32> to vector<4x8x32xf32>
    %22 = arith.mulf %13, %21 : vector<4x8x32xf32>
    %cst_17 = arith.constant dense<0.000000e+00> : vector<4x8xf32>
    %23 = vector.multi_reduction <add>, %22, %cst_17 [2] : vector<4x8x32xf32> to vector<4x8xf32>
    %cst_18 = arith.constant dense<0xFF800000> : vector<4x8xf32>
    %24 = vector.multi_reduction <maximumf>, %19, %cst_18 [2] : vector<4x8x16xf32> to vector<4x8xf32>
    %25 = arith.maximumf %24, %23 : vector<4x8xf32>
    %26 = vector.shape_cast %25 : vector<4x8xf32> to vector<4x8x1xf32>
    %27 = vector.broadcast %26 : vector<4x8x1xf32> to vector<4x8x16xf32>
    %28 = arith.subf %19, %27 : vector<4x8x16xf32>
    %29 = math.exp %28 : vector<4x8x16xf32>
    %30 = arith.subf %23, %25 : vector<4x8xf32>
    %31 = math.exp %30 : vector<4x8xf32>
    %cst_19 = arith.constant dense<0.000000e+00> : vector<4x8xf32>
    %32 = vector.multi_reduction <add>, %29, %cst_19 [2] : vector<4x8x16xf32> to vector<4x8xf32>
    %33 = arith.addf %32, %31 : vector<4x8xf32>
    %cst_20 = arith.constant 1.000000e+00 : f32
    %34 = vector.broadcast %cst_20 : f32 to vector<4x8xf32>
    %35 = arith.divf %34, %33 : vector<4x8xf32>
    %36 = vector.shape_cast %35 : vector<4x8xf32> to vector<4x8x1xf32>
    %37 = vector.broadcast %36 : vector<4x8x1xf32> to vector<4x8x16xf32>
    %38 = arith.mulf %29, %37 : vector<4x8x16xf32>
    %39 = arith.mulf %31, %35 : vector<4x8xf32>
    %40 = vector.extract_strided_slice %7 {offsets = [0, 32], sizes = [32, 32], strides = [1, 1]} : vector<32x128xf32> to vector<32x32xf32>
    %41 = vector.shape_cast %40 : vector<32x32xf32> to vector<4x8x32xf32>
    %42 = vector.extract_strided_slice %9 {offsets = [0, 32], sizes = [64, 32], strides = [1, 1]} : vector<64x128xf32> to vector<64x32xf32>
    %43 = vector.shape_cast %42 : vector<64x32xf32> to vector<4x16x32xf32>
    %44 = vector.extract_strided_slice %11 {offsets = [0, 32], sizes = [64, 32], strides = [1, 1]} : vector<64x128xf32> to vector<64x32xf32>
    %45 = vector.shape_cast %44 : vector<64x32xf32> to vector<4x16x32xf32>
    %c1 = arith.constant 1 : index
    %c0_21 = arith.constant 0 : index
    %46 = vector.load %arg7[%c1, %c0_21] : memref<4x32xf32, #tpu.memory_space<vmem>>, vector<1x32xf32>
    "tpu.trace_start"() <{level = 10 : i32, message = "ncd,nkd->nck"}> : () -> ()
    %cst_22 = arith.constant dense<0.000000e+00> : vector<4x8x16xf32>
    %47 = tpu.matmul %41, %43, %cst_22 {dimension_numbers = #tpu.dot_dimension_numbers<[2], [2], [1], [1], [0, 0, 0, 1, 1, 1], [0], [0]>} : vector<4x8x32xf32>, vector<4x16x32xf32>, vector<4x8x16xf32> -> vector<4x8x16xf32>
    "tpu.trace_stop"() : () -> ()
    %48 = vector.shape_cast %46 : vector<1x32xf32> to vector<1x1x32xf32>
    %49 = vector.broadcast %48 : vector<1x1x32xf32> to vector<4x8x32xf32>
    %50 = arith.mulf %41, %49 : vector<4x8x32xf32>
    %cst_23 = arith.constant dense<0.000000e+00> : vector<4x8xf32>
    %51 = vector.multi_reduction <add>, %50, %cst_23 [2] : vector<4x8x32xf32> to vector<4x8xf32>
    %cst_24 = arith.constant dense<0xFF800000> : vector<4x8xf32>
    %52 = vector.multi_reduction <maximumf>, %47, %cst_24 [2] : vector<4x8x16xf32> to vector<4x8xf32>
    %53 = arith.maximumf %52, %51 : vector<4x8xf32>
    %54 = vector.shape_cast %53 : vector<4x8xf32> to vector<4x8x1xf32>
    %55 = vector.broadcast %54 : vector<4x8x1xf32> to vector<4x8x16xf32>
    %56 = arith.subf %47, %55 : vector<4x8x16xf32>
    %57 = math.exp %56 : vector<4x8x16xf32>
    %58 = arith.subf %51, %53 : vector<4x8xf32>
    %59 = math.exp %58 : vector<4x8xf32>
    %cst_25 = arith.constant dense<0.000000e+00> : vector<4x8xf32>
    %60 = vector.multi_reduction <add>, %57, %cst_25 [2] : vector<4x8x16xf32> to vector<4x8xf32>
    %61 = arith.addf %60, %59 : vector<4x8xf32>
    %cst_26 = arith.constant 1.000000e+00 : f32
    %62 = vector.broadcast %cst_26 : f32 to vector<4x8xf32>
    %63 = arith.divf %62, %61 : vector<4x8xf32>
    %64 = vector.shape_cast %63 : vector<4x8xf32> to vector<4x8x1xf32>
    %65 = vector.broadcast %64 : vector<4x8x1xf32> to vector<4x8x16xf32>
    %66 = arith.mulf %57, %65 : vector<4x8x16xf32>
    %67 = arith.mulf %59, %63 : vector<4x8xf32>
    %68 = vector.extract_strided_slice %7 {offsets = [0, 64], sizes = [32, 32], strides = [1, 1]} : vector<32x128xf32> to vector<32x32xf32>
    %69 = vector.shape_cast %68 : vector<32x32xf32> to vector<4x8x32xf32>
    %70 = vector.extract_strided_slice %9 {offsets = [0, 64], sizes = [64, 32], strides = [1, 1]} : vector<64x128xf32> to vector<64x32xf32>
    %71 = vector.shape_cast %70 : vector<64x32xf32> to vector<4x16x32xf32>
    %72 = vector.extract_strided_slice %11 {offsets = [0, 64], sizes = [64, 32], strides = [1, 1]} : vector<64x128xf32> to vector<64x32xf32>
    %73 = vector.shape_cast %72 : vector<64x32xf32> to vector<4x16x32xf32>
    %c2 = arith.constant 2 : index
    %c0_27 = arith.constant 0 : index
    %74 = vector.load %arg7[%c2, %c0_27] : memref<4x32xf32, #tpu.memory_space<vmem>>, vector<1x32xf32>
    "tpu.trace_start"() <{level = 10 : i32, message = "ncd,nkd->nck"}> : () -> ()
    %cst_28 = arith.constant dense<0.000000e+00> : vector<4x8x16xf32>
    %75 = tpu.matmul %69, %71, %cst_28 {dimension_numbers = #tpu.dot_dimension_numbers<[2], [2], [1], [1], [0, 0, 0, 1, 1, 1], [0], [0]>} : vector<4x8x32xf32>, vector<4x16x32xf32>, vector<4x8x16xf32> -> vector<4x8x16xf32>
    "tpu.trace_stop"() : () -> ()
    %76 = vector.shape_cast %74 : vector<1x32xf32> to vector<1x1x32xf32>
    %77 = vector.broadcast %76 : vector<1x1x32xf32> to vector<4x8x32xf32>
    %78 = arith.mulf %69, %77 : vector<4x8x32xf32>
    %cst_29 = arith.constant dense<0.000000e+00> : vector<4x8xf32>
    %79 = vector.multi_reduction <add>, %78, %cst_29 [2] : vector<4x8x32xf32> to vector<4x8xf32>
    %cst_30 = arith.constant dense<0xFF800000> : vector<4x8xf32>
    %80 = vector.multi_reduction <maximumf>, %75, %cst_30 [2] : vector<4x8x16xf32> to vector<4x8xf32>
    %81 = arith.maximumf %80, %79 : vector<4x8xf32>
    %82 = vector.shape_cast %81 : vector<4x8xf32> to vector<4x8x1xf32>
    %83 = vector.broadcast %82 : vector<4x8x1xf32> to vector<4x8x16xf32>
    %84 = arith.subf %75, %83 : vector<4x8x16xf32>
    %85 = math.exp %84 : vector<4x8x16xf32>
    %86 = arith.subf %79, %81 : vector<4x8xf32>
    %87 = math.exp %86 : vector<4x8xf32>
    %cst_31 = arith.constant dense<0.000000e+00> : vector<4x8xf32>
    %88 = vector.multi_reduction <add>, %85, %cst_31 [2] : vector<4x8x16xf32> to vector<4x8xf32>
    %89 = arith.addf %88, %87 : vector<4x8xf32>
    %cst_32 = arith.constant 1.000000e+00 : f32
    %90 = vector.broadcast %cst_32 : f32 to vector<4x8xf32>
    %91 = arith.divf %90, %89 : vector<4x8xf32>
    %92 = vector.shape_cast %91 : vector<4x8xf32> to vector<4x8x1xf32>
    %93 = vector.broadcast %92 : vector<4x8x1xf32> to vector<4x8x16xf32>
    %94 = arith.mulf %85, %93 : vector<4x8x16xf32>
    %95 = arith.mulf %87, %91 : vector<4x8xf32>
    %96 = vector.extract_strided_slice %7 {offsets = [0, 96], sizes = [32, 32], strides = [1, 1]} : vector<32x128xf32> to vector<32x32xf32>
    %97 = vector.shape_cast %96 : vector<32x32xf32> to vector<4x8x32xf32>
    %98 = vector.extract_strided_slice %9 {offsets = [0, 96], sizes = [64, 32], strides = [1, 1]} : vector<64x128xf32> to vector<64x32xf32>
    %99 = vector.shape_cast %98 : vector<64x32xf32> to vector<4x16x32xf32>
    %100 = vector.extract_strided_slice %11 {offsets = [0, 96], sizes = [64, 32], strides = [1, 1]} : vector<64x128xf32> to vector<64x32xf32>
    %101 = vector.shape_cast %100 : vector<64x32xf32> to vector<4x16x32xf32>
    %c3 = arith.constant 3 : index
    %c0_33 = arith.constant 0 : index
    %102 = vector.load %arg7[%c3, %c0_33] : memref<4x32xf32, #tpu.memory_space<vmem>>, vector<1x32xf32>
    "tpu.trace_start"() <{level = 10 : i32, message = "ncd,nkd->nck"}> : () -> ()
    %cst_34 = arith.constant dense<0.000000e+00> : vector<4x8x16xf32>
    %103 = tpu.matmul %97, %99, %cst_34 {dimension_numbers = #tpu.dot_dimension_numbers<[2], [2], [1], [1], [0, 0, 0, 1, 1, 1], [0], [0]>} : vector<4x8x32xf32>, vector<4x16x32xf32>, vector<4x8x16xf32> -> vector<4x8x16xf32>
    "tpu.trace_stop"() : () -> ()
    %104 = vector.shape_cast %102 : vector<1x32xf32> to vector<1x1x32xf32>
    %105 = vector.broadcast %104 : vector<1x1x32xf32> to vector<4x8x32xf32>
    %106 = arith.mulf %97, %105 : vector<4x8x32xf32>
    %cst_35 = arith.constant dense<0.000000e+00> : vector<4x8xf32>
    %107 = vector.multi_reduction <add>, %106, %cst_35 [2] : vector<4x8x32xf32> to vector<4x8xf32>
    %cst_36 = arith.constant dense<0xFF800000> : vector<4x8xf32>
    %108 = vector.multi_reduction <maximumf>, %103, %cst_36 [2] : vector<4x8x16xf32> to vector<4x8xf32>
    %109 = arith.maximumf %108, %107 : vector<4x8xf32>
    %110 = vector.shape_cast %109 : vector<4x8xf32> to vector<4x8x1xf32>
    %111 = vector.broadcast %110 : vector<4x8x1xf32> to vector<4x8x16xf32>
    %112 = arith.subf %103, %111 : vector<4x8x16xf32>
    %113 = math.exp %112 : vector<4x8x16xf32>
    %114 = arith.subf %107, %109 : vector<4x8xf32>
    %115 = math.exp %114 : vector<4x8xf32>
    %cst_37 = arith.constant dense<0.000000e+00> : vector<4x8xf32>
    %116 = vector.multi_reduction <add>, %113, %cst_37 [2] : vector<4x8x16xf32> to vector<4x8xf32>
    %117 = arith.addf %116, %115 : vector<4x8xf32>
    %cst_38 = arith.constant 1.000000e+00 : f32
    %118 = vector.broadcast %cst_38 : f32 to vector<4x8xf32>
    %119 = arith.divf %118, %117 : vector<4x8xf32>
    %120 = vector.shape_cast %119 : vector<4x8xf32> to vector<4x8x1xf32>
    %121 = vector.broadcast %120 : vector<4x8x1xf32> to vector<4x8x16xf32>
    %122 = arith.mulf %113, %121 : vector<4x8x16xf32>
    %123 = arith.mulf %115, %119 : vector<4x8xf32>
    %cst_39 = arith.constant 0.000000e+00 : f32
    %124 = vector.broadcast %cst_39 : f32 to vector<32x128xf32>
    %c0_40 = arith.constant 0 : index
    %c0_41 = arith.constant 0 : index
    %125 = memref.load %arg9[%c0_40, %c0_41] : memref<4x4xf32, #tpu.memory_space<smem>>
    %126 = vector.broadcast %125 : f32 to vector<4x8x16xf32>
    %127 = arith.mulf %38, %126 : vector<4x8x16xf32>
    %c0_42 = arith.constant 0 : index
    %c0_43 = arith.constant 0 : index
    %128 = memref.load %arg9[%c0_42, %c0_43] : memref<4x4xf32, #tpu.memory_space<smem>>
    %129 = vector.broadcast %128 : f32 to vector<4x8xf32>
    %130 = arith.mulf %39, %129 : vector<4x8xf32>
    %c0_44 = arith.constant 0 : index
    %c1_45 = arith.constant 1 : index
    %131 = memref.load %arg9[%c0_44, %c1_45] : memref<4x4xf32, #tpu.memory_space<smem>>
    %132 = vector.broadcast %131 : f32 to vector<4x8x16xf32>
    %133 = arith.mulf %66, %132 : vector<4x8x16xf32>
    %134 = arith.addf %127, %133 : vector<4x8x16xf32>
    %c0_46 = arith.constant 0 : index
    %c1_47 = arith.constant 1 : index
    %135 = memref.load %arg9[%c0_46, %c1_47] : memref<4x4xf32, #tpu.memory_space<smem>>
    %136 = vector.broadcast %135 : f32 to vector<4x8xf32>
    %137 = arith.mulf %67, %136 : vector<4x8xf32>
    %138 = arith.addf %130, %137 : vector<4x8xf32>
    %c0_48 = arith.constant 0 : index
    %c2_49 = arith.constant 2 : index
    %139 = memref.load %arg9[%c0_48, %c2_49] : memref<4x4xf32, #tpu.memory_space<smem>>
    %140 = vector.broadcast %139 : f32 to vector<4x8x16xf32>
    %141 = arith.mulf %94, %140 : vector<4x8x16xf32>
    %142 = arith.addf %134, %141 : vector<4x8x16xf32>
    %c0_50 = arith.constant 0 : index
    %c2_51 = arith.constant 2 : index
    %143 = memref.load %arg9[%c0_50, %c2_51] : memref<4x4xf32, #tpu.memory_space<smem>>
    %144 = vector.broadcast %143 : f32 to vector<4x8xf32>
    %145 = arith.mulf %95, %144 : vector<4x8xf32>
    %146 = arith.addf %138, %145 : vector<4x8xf32>
    %c0_52 = arith.constant 0 : index
    %c3_53 = arith.constant 3 : index
    %147 = memref.load %arg9[%c0_52, %c3_53] : memref<4x4xf32, #tpu.memory_space<smem>>
    %148 = vector.broadcast %147 : f32 to vector<4x8x16xf32>
    %149 = arith.mulf %122, %148 : vector<4x8x16xf32>
    %150 = arith.addf %142, %149 : vector<4x8x16xf32>
    %c0_54 = arith.constant 0 : index
    %c3_55 = arith.constant 3 : index
    %151 = memref.load %arg9[%c0_54, %c3_55] : memref<4x4xf32, #tpu.memory_space<smem>>
    %152 = vector.broadcast %151 : f32 to vector<4x8xf32>
    %153 = arith.mulf %123, %152 : vector<4x8xf32>
    %154 = arith.addf %146, %153 : vector<4x8xf32>
    %c0_56 = arith.constant 0 : index
    %155 = memref.load %arg10[%c0_56] : memref<4xf32, #tpu.memory_space<smem>>
    %156 = vector.broadcast %155 : f32 to vector<4x8x16xf32>
    %157 = arith.addf %150, %156 : vector<4x8x16xf32>
    %158 = vector.broadcast %155 : f32 to vector<4x8xf32>
    %159 = arith.addf %154, %158 : vector<4x8xf32>
    "tpu.trace_start"() <{level = 10 : i32, message = "nck,nkd->ncd"}> : () -> ()
    %cst_57 = arith.constant dense<0.000000e+00> : vector<4x8x32xf32>
    %160 = tpu.matmul %157, %17, %cst_57 {dimension_numbers = #tpu.dot_dimension_numbers<[2], [1], [1], [2], [0, 0, 0, 1, 1, 2], [0], [0]>} : vector<4x8x16xf32>, vector<4x16x32xf32>, vector<4x8x32xf32> -> vector<4x8x32xf32>
    "tpu.trace_stop"() : () -> ()
    %c0_58 = arith.constant 0 : index
    %c0_59 = arith.constant 0 : index
    %161 = vector.load %arg8[%c0_58, %c0_59] : memref<4x32xf32, #tpu.memory_space<vmem>>, vector<1x32xf32>
    %162 = vector.shape_cast %159 : vector<4x8xf32> to vector<4x8x1xf32>
    %163 = vector.shape_cast %161 : vector<1x32xf32> to vector<1x1x32xf32>
    %164 = vector.broadcast %162 : vector<4x8x1xf32> to vector<4x8x32xf32>
    %165 = vector.broadcast %163 : vector<1x1x32xf32> to vector<4x8x32xf32>
    %166 = arith.mulf %164, %165 : vector<4x8x32xf32>
    %167 = arith.addf %160, %166 : vector<4x8x32xf32>
    %168 = vector.shape_cast %167 : vector<4x8x32xf32> to vector<32x32xf32>
    %c0_60 = arith.constant 0 : index
    %c0_61 = arith.constant 0 : index
    %c0_62 = arith.constant 0 : index
    %169 = vector.load %arg6[%c0_60, %c0_61, %c0_62] : memref<4x32x128xf32, #tpu.memory_space<vmem>>, vector<1x32x128xf32>
    %170 = vector.shape_cast %169 : vector<1x32x128xf32> to vector<32x128xf32>
    %cst_63 = arith.constant dense<0.000000e+00> : vector<32x128xf32>
    %171 = tpu.matmul %168, %170, %cst_63 {dimension_numbers = #tpu.dot_dimension_numbers<[1], [0], [0], [1], [0, 0, 1, 1], [], []>} : vector<32x32xf32>, vector<32x128xf32>, vector<32x128xf32> -> vector<32x128xf32>
    %172 = arith.addf %124, %171 : vector<32x128xf32>
    %c1_64 = arith.constant 1 : index
    %c0_65 = arith.constant 0 : index
    %173 = memref.load %arg9[%c1_64, %c0_65] : memref<4x4xf32, #tpu.memory_space<smem>>
    %174 = vector.broadcast %173 : f32 to vector<4x8x16xf32>
    %175 = arith.mulf %38, %174 : vector<4x8x16xf32>
    %c1_66 = arith.constant 1 : index
    %c0_67 = arith.constant 0 : index
    %176 = memref.load %arg9[%c1_66, %c0_67] : memref<4x4xf32, #tpu.memory_space<smem>>
    %177 = vector.broadcast %176 : f32 to vector<4x8xf32>
    %178 = arith.mulf %39, %177 : vector<4x8xf32>
    %c1_68 = arith.constant 1 : index
    %c1_69 = arith.constant 1 : index
    %179 = memref.load %arg9[%c1_68, %c1_69] : memref<4x4xf32, #tpu.memory_space<smem>>
    %180 = vector.broadcast %179 : f32 to vector<4x8x16xf32>
    %181 = arith.mulf %66, %180 : vector<4x8x16xf32>
    %182 = arith.addf %175, %181 : vector<4x8x16xf32>
    %c1_70 = arith.constant 1 : index
    %c1_71 = arith.constant 1 : index
    %183 = memref.load %arg9[%c1_70, %c1_71] : memref<4x4xf32, #tpu.memory_space<smem>>
    %184 = vector.broadcast %183 : f32 to vector<4x8xf32>
    %185 = arith.mulf %67, %184 : vector<4x8xf32>
    %186 = arith.addf %178, %185 : vector<4x8xf32>
    %c1_72 = arith.constant 1 : index
    %c2_73 = arith.constant 2 : index
    %187 = memref.load %arg9[%c1_72, %c2_73] : memref<4x4xf32, #tpu.memory_space<smem>>
    %188 = vector.broadcast %187 : f32 to vector<4x8x16xf32>
    %189 = arith.mulf %94, %188 : vector<4x8x16xf32>
    %190 = arith.addf %182, %189 : vector<4x8x16xf32>
    %c1_74 = arith.constant 1 : index
    %c2_75 = arith.constant 2 : index
    %191 = memref.load %arg9[%c1_74, %c2_75] : memref<4x4xf32, #tpu.memory_space<smem>>
    %192 = vector.broadcast %191 : f32 to vector<4x8xf32>
    %193 = arith.mulf %95, %192 : vector<4x8xf32>
    %194 = arith.addf %186, %193 : vector<4x8xf32>
    %c1_76 = arith.constant 1 : index
    %c3_77 = arith.constant 3 : index
    %195 = memref.load %arg9[%c1_76, %c3_77] : memref<4x4xf32, #tpu.memory_space<smem>>
    %196 = vector.broadcast %195 : f32 to vector<4x8x16xf32>
    %197 = arith.mulf %122, %196 : vector<4x8x16xf32>
    %198 = arith.addf %190, %197 : vector<4x8x16xf32>
    %c1_78 = arith.constant 1 : index
    %c3_79 = arith.constant 3 : index
    %199 = memref.load %arg9[%c1_78, %c3_79] : memref<4x4xf32, #tpu.memory_space<smem>>
    %200 = vector.broadcast %199 : f32 to vector<4x8xf32>
    %201 = arith.mulf %123, %200 : vector<4x8xf32>
    %202 = arith.addf %194, %201 : vector<4x8xf32>
    %c1_80 = arith.constant 1 : index
    %203 = memref.load %arg10[%c1_80] : memref<4xf32, #tpu.memory_space<smem>>
    %204 = vector.broadcast %203 : f32 to vector<4x8x16xf32>
    %205 = arith.addf %198, %204 : vector<4x8x16xf32>
    %206 = vector.broadcast %203 : f32 to vector<4x8xf32>
    %207 = arith.addf %202, %206 : vector<4x8xf32>
    "tpu.trace_start"() <{level = 10 : i32, message = "nck,nkd->ncd"}> : () -> ()
    %cst_81 = arith.constant dense<0.000000e+00> : vector<4x8x32xf32>
    %208 = tpu.matmul %205, %45, %cst_81 {dimension_numbers = #tpu.dot_dimension_numbers<[2], [1], [1], [2], [0, 0, 0, 1, 1, 2], [0], [0]>} : vector<4x8x16xf32>, vector<4x16x32xf32>, vector<4x8x32xf32> -> vector<4x8x32xf32>
    "tpu.trace_stop"() : () -> ()
    %c1_82 = arith.constant 1 : index
    %c0_83 = arith.constant 0 : index
    %209 = vector.load %arg8[%c1_82, %c0_83] : memref<4x32xf32, #tpu.memory_space<vmem>>, vector<1x32xf32>
    %210 = vector.shape_cast %207 : vector<4x8xf32> to vector<4x8x1xf32>
    %211 = vector.shape_cast %209 : vector<1x32xf32> to vector<1x1x32xf32>
    %212 = vector.broadcast %210 : vector<4x8x1xf32> to vector<4x8x32xf32>
    %213 = vector.broadcast %211 : vector<1x1x32xf32> to vector<4x8x32xf32>
    %214 = arith.mulf %212, %213 : vector<4x8x32xf32>
    %215 = arith.addf %208, %214 : vector<4x8x32xf32>
    %216 = vector.shape_cast %215 : vector<4x8x32xf32> to vector<32x32xf32>
    %c1_84 = arith.constant 1 : index
    %c0_85 = arith.constant 0 : index
    %c0_86 = arith.constant 0 : index
    %217 = vector.load %arg6[%c1_84, %c0_85, %c0_86] : memref<4x32x128xf32, #tpu.memory_space<vmem>>, vector<1x32x128xf32>
    %218 = vector.shape_cast %217 : vector<1x32x128xf32> to vector<32x128xf32>
    %cst_87 = arith.constant dense<0.000000e+00> : vector<32x128xf32>
    %219 = tpu.matmul %216, %218, %cst_87 {dimension_numbers = #tpu.dot_dimension_numbers<[1], [0], [0], [1], [0, 0, 1, 1], [], []>} : vector<32x32xf32>, vector<32x128xf32>, vector<32x128xf32> -> vector<32x128xf32>
    %220 = arith.addf %172, %219 : vector<32x128xf32>
    %c2_88 = arith.constant 2 : index
    %c0_89 = arith.constant 0 : index
    %221 = memref.load %arg9[%c2_88, %c0_89] : memref<4x4xf32, #tpu.memory_space<smem>>
    %222 = vector.broadcast %221 : f32 to vector<4x8x16xf32>
    %223 = arith.mulf %38, %222 : vector<4x8x16xf32>
    %c2_90 = arith.constant 2 : index
    %c0_91 = arith.constant 0 : index
    %224 = memref.load %arg9[%c2_90, %c0_91] : memref<4x4xf32, #tpu.memory_space<smem>>
    %225 = vector.broadcast %224 : f32 to vector<4x8xf32>
    %226 = arith.mulf %39, %225 : vector<4x8xf32>
    %c2_92 = arith.constant 2 : index
    %c1_93 = arith.constant 1 : index
    %227 = memref.load %arg9[%c2_92, %c1_93] : memref<4x4xf32, #tpu.memory_space<smem>>
    %228 = vector.broadcast %227 : f32 to vector<4x8x16xf32>
    %229 = arith.mulf %66, %228 : vector<4x8x16xf32>
    %230 = arith.addf %223, %229 : vector<4x8x16xf32>
    %c2_94 = arith.constant 2 : index
    %c1_95 = arith.constant 1 : index
    %231 = memref.load %arg9[%c2_94, %c1_95] : memref<4x4xf32, #tpu.memory_space<smem>>
    %232 = vector.broadcast %231 : f32 to vector<4x8xf32>
    %233 = arith.mulf %67, %232 : vector<4x8xf32>
    %234 = arith.addf %226, %233 : vector<4x8xf32>
    %c2_96 = arith.constant 2 : index
    %c2_97 = arith.constant 2 : index
    %235 = memref.load %arg9[%c2_96, %c2_97] : memref<4x4xf32, #tpu.memory_space<smem>>
    %236 = vector.broadcast %235 : f32 to vector<4x8x16xf32>
    %237 = arith.mulf %94, %236 : vector<4x8x16xf32>
    %238 = arith.addf %230, %237 : vector<4x8x16xf32>
    %c2_98 = arith.constant 2 : index
    %c2_99 = arith.constant 2 : index
    %239 = memref.load %arg9[%c2_98, %c2_99] : memref<4x4xf32, #tpu.memory_space<smem>>
    %240 = vector.broadcast %239 : f32 to vector<4x8xf32>
    %241 = arith.mulf %95, %240 : vector<4x8xf32>
    %242 = arith.addf %234, %241 : vector<4x8xf32>
    %c2_100 = arith.constant 2 : index
    %c3_101 = arith.constant 3 : index
    %243 = memref.load %arg9[%c2_100, %c3_101] : memref<4x4xf32, #tpu.memory_space<smem>>
    %244 = vector.broadcast %243 : f32 to vector<4x8x16xf32>
    %245 = arith.mulf %122, %244 : vector<4x8x16xf32>
    %246 = arith.addf %238, %245 : vector<4x8x16xf32>
    %c2_102 = arith.constant 2 : index
    %c3_103 = arith.constant 3 : index
    %247 = memref.load %arg9[%c2_102, %c3_103] : memref<4x4xf32, #tpu.memory_space<smem>>
    %248 = vector.broadcast %247 : f32 to vector<4x8xf32>
    %249 = arith.mulf %123, %248 : vector<4x8xf32>
    %250 = arith.addf %242, %249 : vector<4x8xf32>
    %c2_104 = arith.constant 2 : index
    %251 = memref.load %arg10[%c2_104] : memref<4xf32, #tpu.memory_space<smem>>
    %252 = vector.broadcast %251 : f32 to vector<4x8x16xf32>
    %253 = arith.addf %246, %252 : vector<4x8x16xf32>
    %254 = vector.broadcast %251 : f32 to vector<4x8xf32>
    %255 = arith.addf %250, %254 : vector<4x8xf32>
    "tpu.trace_start"() <{level = 10 : i32, message = "nck,nkd->ncd"}> : () -> ()
    %cst_105 = arith.constant dense<0.000000e+00> : vector<4x8x32xf32>
    %256 = tpu.matmul %253, %73, %cst_105 {dimension_numbers = #tpu.dot_dimension_numbers<[2], [1], [1], [2], [0, 0, 0, 1, 1, 2], [0], [0]>} : vector<4x8x16xf32>, vector<4x16x32xf32>, vector<4x8x32xf32> -> vector<4x8x32xf32>
    "tpu.trace_stop"() : () -> ()
    %c2_106 = arith.constant 2 : index
    %c0_107 = arith.constant 0 : index
    %257 = vector.load %arg8[%c2_106, %c0_107] : memref<4x32xf32, #tpu.memory_space<vmem>>, vector<1x32xf32>
    %258 = vector.shape_cast %255 : vector<4x8xf32> to vector<4x8x1xf32>
    %259 = vector.shape_cast %257 : vector<1x32xf32> to vector<1x1x32xf32>
    %260 = vector.broadcast %258 : vector<4x8x1xf32> to vector<4x8x32xf32>
    %261 = vector.broadcast %259 : vector<1x1x32xf32> to vector<4x8x32xf32>
    %262 = arith.mulf %260, %261 : vector<4x8x32xf32>
    %263 = arith.addf %256, %262 : vector<4x8x32xf32>
    %264 = vector.shape_cast %263 : vector<4x8x32xf32> to vector<32x32xf32>
    %c2_108 = arith.constant 2 : index
    %c0_109 = arith.constant 0 : index
    %c0_110 = arith.constant 0 : index
    %265 = vector.load %arg6[%c2_108, %c0_109, %c0_110] : memref<4x32x128xf32, #tpu.memory_space<vmem>>, vector<1x32x128xf32>
    %266 = vector.shape_cast %265 : vector<1x32x128xf32> to vector<32x128xf32>
    %cst_111 = arith.constant dense<0.000000e+00> : vector<32x128xf32>
    %267 = tpu.matmul %264, %266, %cst_111 {dimension_numbers = #tpu.dot_dimension_numbers<[1], [0], [0], [1], [0, 0, 1, 1], [], []>} : vector<32x32xf32>, vector<32x128xf32>, vector<32x128xf32> -> vector<32x128xf32>
    %268 = arith.addf %220, %267 : vector<32x128xf32>
    %c3_112 = arith.constant 3 : index
    %c0_113 = arith.constant 0 : index
    %269 = memref.load %arg9[%c3_112, %c0_113] : memref<4x4xf32, #tpu.memory_space<smem>>
    %270 = vector.broadcast %269 : f32 to vector<4x8x16xf32>
    %271 = arith.mulf %38, %270 : vector<4x8x16xf32>
    %c3_114 = arith.constant 3 : index
    %c0_115 = arith.constant 0 : index
    %272 = memref.load %arg9[%c3_114, %c0_115] : memref<4x4xf32, #tpu.memory_space<smem>>
    %273 = vector.broadcast %272 : f32 to vector<4x8xf32>
    %274 = arith.mulf %39, %273 : vector<4x8xf32>
    %c3_116 = arith.constant 3 : index
    %c1_117 = arith.constant 1 : index
    %275 = memref.load %arg9[%c3_116, %c1_117] : memref<4x4xf32, #tpu.memory_space<smem>>
    %276 = vector.broadcast %275 : f32 to vector<4x8x16xf32>
    %277 = arith.mulf %66, %276 : vector<4x8x16xf32>
    %278 = arith.addf %271, %277 : vector<4x8x16xf32>
    %c3_118 = arith.constant 3 : index
    %c1_119 = arith.constant 1 : index
    %279 = memref.load %arg9[%c3_118, %c1_119] : memref<4x4xf32, #tpu.memory_space<smem>>
    %280 = vector.broadcast %279 : f32 to vector<4x8xf32>
    %281 = arith.mulf %67, %280 : vector<4x8xf32>
    %282 = arith.addf %274, %281 : vector<4x8xf32>
    %c3_120 = arith.constant 3 : index
    %c2_121 = arith.constant 2 : index
    %283 = memref.load %arg9[%c3_120, %c2_121] : memref<4x4xf32, #tpu.memory_space<smem>>
    %284 = vector.broadcast %283 : f32 to vector<4x8x16xf32>
    %285 = arith.mulf %94, %284 : vector<4x8x16xf32>
    %286 = arith.addf %278, %285 : vector<4x8x16xf32>
    %c3_122 = arith.constant 3 : index
    %c2_123 = arith.constant 2 : index
    %287 = memref.load %arg9[%c3_122, %c2_123] : memref<4x4xf32, #tpu.memory_space<smem>>
    %288 = vector.broadcast %287 : f32 to vector<4x8xf32>
    %289 = arith.mulf %95, %288 : vector<4x8xf32>
    %290 = arith.addf %282, %289 : vector<4x8xf32>
    %c3_124 = arith.constant 3 : index
    %c3_125 = arith.constant 3 : index
    %291 = memref.load %arg9[%c3_124, %c3_125] : memref<4x4xf32, #tpu.memory_space<smem>>
    %292 = vector.broadcast %291 : f32 to vector<4x8x16xf32>
    %293 = arith.mulf %122, %292 : vector<4x8x16xf32>
    %294 = arith.addf %286, %293 : vector<4x8x16xf32>
    %c3_126 = arith.constant 3 : index
    %c3_127 = arith.constant 3 : index
    %295 = memref.load %arg9[%c3_126, %c3_127] : memref<4x4xf32, #tpu.memory_space<smem>>
    %296 = vector.broadcast %295 : f32 to vector<4x8xf32>
    %297 = arith.mulf %123, %296 : vector<4x8xf32>
    %298 = arith.addf %290, %297 : vector<4x8xf32>
    %c3_128 = arith.constant 3 : index
    %299 = memref.load %arg10[%c3_128] : memref<4xf32, #tpu.memory_space<smem>>
    %300 = vector.broadcast %299 : f32 to vector<4x8x16xf32>
    %301 = arith.addf %294, %300 : vector<4x8x16xf32>
    %302 = vector.broadcast %299 : f32 to vector<4x8xf32>
    %303 = arith.addf %298, %302 : vector<4x8xf32>
    "tpu.trace_start"() <{level = 10 : i32, message = "nck,nkd->ncd"}> : () -> ()
    %cst_129 = arith.constant dense<0.000000e+00> : vector<4x8x32xf32>
    %304 = tpu.matmul %301, %101, %cst_129 {dimension_numbers = #tpu.dot_dimension_numbers<[2], [1], [1], [2], [0, 0, 0, 1, 1, 2], [0], [0]>} : vector<4x8x16xf32>, vector<4x16x32xf32>, vector<4x8x32xf32> -> vector<4x8x32xf32>
    "tpu.trace_stop"() : () -> ()
    %c3_130 = arith.constant 3 : index
    %c0_131 = arith.constant 0 : index
    %305 = vector.load %arg8[%c3_130, %c0_131] : memref<4x32xf32, #tpu.memory_space<vmem>>, vector<1x32xf32>
    %306 = vector.shape_cast %303 : vector<4x8xf32> to vector<4x8x1xf32>
    %307 = vector.shape_cast %305 : vector<1x32xf32> to vector<1x1x32xf32>
    %308 = vector.broadcast %306 : vector<4x8x1xf32> to vector<4x8x32xf32>
    %309 = vector.broadcast %307 : vector<1x1x32xf32> to vector<4x8x32xf32>
    %310 = arith.mulf %308, %309 : vector<4x8x32xf32>
    %311 = arith.addf %304, %310 : vector<4x8x32xf32>
    %312 = vector.shape_cast %311 : vector<4x8x32xf32> to vector<32x32xf32>
    %c3_132 = arith.constant 3 : index
    %c0_133 = arith.constant 0 : index
    %c0_134 = arith.constant 0 : index
    %313 = vector.load %arg6[%c3_132, %c0_133, %c0_134] : memref<4x32x128xf32, #tpu.memory_space<vmem>>, vector<1x32x128xf32>
    %314 = vector.shape_cast %313 : vector<1x32x128xf32> to vector<32x128xf32>
    %cst_135 = arith.constant dense<0.000000e+00> : vector<32x128xf32>
    %315 = tpu.matmul %312, %314, %cst_135 {dimension_numbers = #tpu.dot_dimension_numbers<[1], [0], [0], [1], [0, 0, 1, 1], [], []>} : vector<32x32xf32>, vector<32x128xf32>, vector<32x128xf32> -> vector<32x128xf32>
    %316 = arith.addf %268, %315 : vector<32x128xf32>
    %317 = vector.shape_cast %316 : vector<32x128xf32> to vector<4x8x128xf32>
    %c0_136 = arith.constant 0 : index
    %c0_137 = arith.constant 0 : index
    %c0_138 = arith.constant 0 : index
    %318 = vector.load %arg11[%c0_136, %c0_137, %c0_138] : memref<4x8x128xf32, #tpu.memory_space<vmem>>, vector<4x8x128xf32>
    tpu.vector_store %arg11[%c0_136, %c0_137, %c0_138], %317 {strides = array<i32>} : memref<4x8x128xf32, #tpu.memory_space<vmem>>, vector<4x8x128xf32>,
    return
  }
  func.func @transform_0(%arg0: i32) -> (i32, i32, i32) {
    %c0_i32 = arith.constant 0 : i32
    %c0_i32_0 = arith.constant 0 : i32
    %c0_i32_1 = arith.constant 0 : i32
    return %arg0, %c0_i32, %c0_i32_0 : i32, i32, i32
  }
  func.func @transform_1(%arg0: i32) -> (i32, i32, i32) {
    %c0_i32 = arith.constant 0 : i32
    %c0_i32_0 = arith.constant 0 : i32
    %c0_i32_1 = arith.constant 0 : i32
    return %arg0, %c0_i32, %c0_i32_0 : i32, i32, i32
  }
  func.func @transform_2(%arg0: i32) -> (i32, i32) {
    %c0_i32 = arith.constant 0 : i32
    %c0_i32_0 = arith.constant 0 : i32
    %c0_i32_1 = arith.constant 0 : i32
    return %c0_i32, %c0_i32_0 : i32, i32
  }
  func.func @transform_3(%arg0: i32) -> (i32, i32) {
    %c0_i32 = arith.constant 0 : i32
    %c0_i32_0 = arith.constant 0 : i32
    %c0_i32_1 = arith.constant 0 : i32
    return %c0_i32, %c0_i32_0 : i32, i32
  }
  func.func @transform_4(%arg0: i32) -> (i32, i32) {
    %c0_i32 = arith.constant 0 : i32
    %c0_i32_0 = arith.constant 0 : i32
    %c0_i32_1 = arith.constant 0 : i32
    return %c0_i32, %c0_i32_0 : i32, i32
  }
  func.func @transform_5(%arg0: i32) -> (i32, i32, i32) {
    %c0_i32 = arith.constant 0 : i32
    %c0_i32_0 = arith.constant 0 : i32
    %c0_i32_1 = arith.constant 0 : i32
    %c0_i32_2 = arith.constant 0 : i32
    return %c0_i32, %c0_i32_0, %c0_i32_1 : i32, i32, i32
  }
  func.func @transform_6(%arg0: i32) -> (i32, i32) {
    %c0_i32 = arith.constant 0 : i32
    %c0_i32_0 = arith.constant 0 : i32
    %c0_i32_1 = arith.constant 0 : i32
    return %c0_i32, %c0_i32_0 : i32, i32
  }
  func.func @transform_7(%arg0: i32) -> (i32, i32) {
    %c0_i32 = arith.constant 0 : i32
    %c0_i32_0 = arith.constant 0 : i32
    %c0_i32_1 = arith.constant 0 : i32
    return %c0_i32, %c0_i32_0 : i32, i32
  }
  func.func @transform_8(%arg0: i32) -> (i32, i32) {
    %c0_i32 = arith.constant 0 : i32
    %c0_i32_0 = arith.constant 0 : i32
    %c0_i32_1 = arith.constant 0 : i32
    return %c0_i32, %c0_i32_0 : i32, i32
  }
  func.func @transform_9(%arg0: i32) -> i32 {
    %c0_i32 = arith.constant 0 : i32
    %c0_i32_0 = arith.constant 0 : i32
    return %c0_i32 : i32
  }
  func.func @transform_10(%arg0: i32) -> (i32, i32, i32) {
    %c0_i32 = arith.constant 0 : i32
    %c0_i32_0 = arith.constant 0 : i32
    %c0_i32_1 = arith.constant 0 : i32
    return %arg0, %c0_i32, %c0_i32_0 : i32, i32, i32
  }
}

</mosaic_0001>

<llo_original>
// kernel: tpu_custom_call.1
$region0: #{tpu_custom_call.1}
  #allocation0 [shape = 'u32[]', space=smem, size = 0x4, offset = 0x4, fixed_abs, tag = 'smem constant byte address 0x4 - core index']
  #allocation1 [shape = 'u32[144,128]{1,0:T(1,128)}', space=vmem, size = 0x12000, scoped, tag = 'internal scratch']
  %s0 = inlined_call_operand.hbm [shape: f32[8,8,128], index: 0, kind: input, shape index: {}]
  %s1 = inlined_call_operand.hbm [shape: f32[8,16,64], index: 1, kind: input, shape index: {}]
  %s2 = inlined_call_operand.hbm [shape: f32[128,128], index: 2, kind: input, shape index: {}]
  %s3 = inlined_call_operand.hbm [shape: f32[64,128], index: 3, kind: input, shape index: {}]
  %s4 = inlined_call_operand.hbm [shape: f32[64,128], index: 4, kind: input, shape index: {}]
  %s5 = inlined_call_operand.hbm [shape: f32[4,32,128], index: 5, kind: input, shape index: {}]
  %s6 = inlined_call_operand.vmem [shape: f32[4,32], index: 6, kind: input, shape index: {}]
  %s7 = inlined_call_operand.vmem [shape: f32[4,32], index: 7, kind: input, shape index: {}]
  %s8 = inlined_call_operand.vmem [shape: f32[4,4], index: 8, kind: input, shape index: {}]
  %s9 = inlined_call_operand.vmem [shape: f32[4], index: 9, kind: input, shape index: {}]
  %s10 = inlined_call_operand.hbm [shape: f32[8,8,128], index: 10, kind: output, shape index: {}]
  %s11 = sld [smem:[#allocation0]]
  $region105: #{tpu_custom_call.1} parent=0
    _
  %s13 = ssub.s32 1, %s11
  %s14 = scalar_select 0, %s13, %s11
  $region1: #{tpu_custom_call.1} parent=0
    #allocation2 [shape = 'u8[32768]{0}', space=vmem, size = 0x8000, scoped, tag = 'input window, operand 0']
    #allocation3 [shape = 's32[2]{0}', space=sflag, size = 0x8, scoped, tag = 'scoped memory for tpu_custom_call.1']
    #allocation4 [shape = 's32[2]{0}', space=sflag, size = 0x8, scoped, tag = 'scoped memory for tpu_custom_call.1']
    #allocation5 [shape = 's32[2]{0}', space=sflag, size = 0x8, scoped, tag = 'scoped memory for tpu_custom_call.1']
    #allocation6 [shape = 'u8[65536]{0}', space=vmem, size = 0x10000, scoped, tag = 'input window, operand 1']
    #allocation7 [shape = 's32[2]{0}', space=sflag, size = 0x8, scoped, tag = 'scoped memory for tpu_custom_call.1']
    #allocation8 [shape = 'u8[65536]{0}', space=vmem, size = 0x10000, scoped, tag = 'input window, operand 2, single buffered']
    #allocation9 [shape = 'u8[32768]{0}', space=vmem, size = 0x8000, scoped, tag = 'input window, operand 3, single buffered']
    #allocation10 [shape = 's32[1]{0}', space=sflag, size = 0x4, scoped, tag = 'scoped memory for tpu_custom_call.1']
    #allocation11 [shape = 'u8[32768]{0}', space=vmem, size = 0x8000, scoped, tag = 'input window, operand 4, single buffered']
    #allocation12 [shape = 'u8[65536]{0}', space=vmem, size = 0x10000, scoped, tag = 'input window, operand 5, single buffered']
    #allocation13 [shape = 's32[1]{0}', space=sflag, size = 0x4, scoped, tag = 'scoped memory for tpu_custom_call.1']
    #allocation14 [shape = 'u8[2048]{0}', space=smem, size = 0x800, scoped, tag = 'input window, operand 8, single buffered']
    #allocation15 [shape = 'u8[512]{0}', space=smem, size = 0x200, scoped, tag = 'input window, operand 9, single buffered']
    #allocation16 [shape = 's32[1]{0}', space=sflag, size = 0x4, scoped, tag = 'scoped memory for tpu_custom_call.1']
    #allocation17 [shape = 'u8[32768]{0}', space=vmem, size = 0x8000, scoped, tag = 'output window, operand 0']
    %15 = vsyncpa [#allocation3], 0
    %s16 = scalar_lea.sflag [#allocation3], 1
    %17 = vsyncpa %s16, 0
    %18 = vsyncpa [#allocation7], 0
    %s19 = scalar_lea.sflag [#allocation7], 1
    %20 = vsyncpa %s19, 0
    %21 = vsyncpa [#allocation10], 0
    %22 = vsyncpa [#allocation13], 0
    %23 = vsyncpa [#allocation5], 0
    %24 = vsyncpa [#allocation16], 0
    %25 = vsyncpa [#allocation4], 0
    %s26 = scalar_lea.sflag [#allocation4], 1
    %27 = vsyncpa %s26, 0
    loop: start=0, step=1, limit=4
    $region2: #{tpu_custom_call.1} parent=1 // loop_pre_header
      _
    $region3: #{tpu_custom_call.1} parent=1 // loop_header
      %s29 = sphi 0, %s33
      %p30 = scmp.ge.s32.totalorder %s29, 4
      %s39 = sphi 0, %s41
      %s42 = sphi 0, %s39
      %s43 = sphi 0, %s42
      %s59 = sphi 0, %s43
      %s65 = sphi 0, %s67
      %s68 = sphi 0, %s65
      %s69 = sphi 0, %s68
      %s85 = sphi 0, %s69
      %s89 = sphi 0, %s89
      %s91 = sphi 0, %s89
      %s92 = sphi 0, %s91
      %s106 = sphi 0, %s92
      %s110 = sphi 0, %s110
      %s112 = sphi 0, %s110
      %s113 = sphi 0, %s112
      %s127 = sphi 0, %s113
      %s131 = sphi 0, %s131
      %s133 = sphi 0, %s131
      %s134 = sphi 0, %s133
      %s148 = sphi 0, %s134
      %s152 = sphi 0, %s152
      %s154 = sphi 0, %s152
      %s155 = sphi 0, %s154
      %s169 = sphi 0, %s155
      %s173 = sphi 0, %s173
      %s175 = sphi 0, %s173
      %s176 = sphi 0, %s175
      %s190 = sphi 0, %s176
      %s194 = sphi 0, %s194
      %s196 = sphi 0, %s194
      %s197 = sphi 0, %s196
      %s211 = sphi 0, %s197
      %s215 = sphi 0, %s215
      %s217 = sphi 0, %s215
      %s218 = sphi 0, %s217
      %s232 = sphi 0, %s218
      %s236 = sphi 0, %s236
      %s238 = sphi 0, %s236
      %s239 = sphi 0, %s238
      %s253 = sphi 0, %s239
      %s259 = sphi 0, %s261
      %s262 = sphi 0, %s259
      %s263 = sphi 0, %s262
      %s279 = sphi 0, %s263
    $region4: #{tpu_custom_call.1} parent=1 // loop_header_branch
      %32 = sbr.rel (%p30) target = $region8
    $region5: #{tpu_custom_call.1} parent=1 // loop_body
      %s34 = ssub.s32 %s29, 1
      %s35 = ssub.s32 %s29, 2
      %s36 = sadd.s32 %s29, 1
      %s37 = ssub.s32 %s29, %s36
      %p38 = scmp.eq.s32.totalorder %s37, 0
      %s40 = sadd.s32 %s39, 1
      %s41 = scalar_select %p38, %s39, %s40
      %p44 = pneg %p38
      %p45 = scmp.eq.s32.totalorder %s29, 1
      %p46 = por %p44, %p45
      %p47 = scmp.ne.s32.totalorder %s39, %s42
      %p48 = scmp.eq.s32.totalorder %s29, 0
      %p49 = por %p47, %p48
      %p50 = scmp.ne.s32.totalorder %s39, %s42
      %p51 = scmp.eq.s32.totalorder %s34, 1
      %p52 = por %p50, %p51
      %p53 = scmp.ne.s32.totalorder %s42, %s43
      %p54 = scmp.eq.s32.totalorder %s34, 0
      %p55 = por %p53, %p54
      %p56 = scmp.ne.s32.totalorder %s42, %s43
      %p57 = scmp.eq.s32.totalorder %s35, 1
      %p58 = por %p56, %p57
      %p60 = scmp.ne.s32.totalorder %s43, %s59
      %p61 = scmp.eq.s32.totalorder %s35, 0
      %p62 = por %p60, %p61
      %s63 = ssub.s32 %s29, %s36
      %p64 = scmp.eq.s32.totalorder %s63, 0
      %s66 = sadd.s32 %s65, 1
      %s67 = scalar_select %p64, %s65, %s66
      %p70 = pneg %p64
      %p71 = scmp.eq.s32.totalorder %s29, 1
      %p72 = por %p70, %p71
      %p73 = scmp.ne.s32.totalorder %s65, %s68
      %p74 = scmp.eq.s32.totalorder %s29, 0
      %p75 = por %p73, %p74
      %p76 = scmp.ne.s32.totalorder %s65, %s68
      %p77 = scmp.eq.s32.totalorder %s34, 1
      %p78 = por %p76, %p77
      %p79 = scmp.ne.s32.totalorder %s68, %s69
      %p80 = scmp.eq.s32.totalorder %s34, 0
      %p81 = por %p79, %p80
      %p82 = scmp.ne.s32.totalorder %s68, %s69
      %p83 = scmp.eq.s32.totalorder %s35, 1
      %p84 = por %p82, %p83
      %p86 = scmp.ne.s32.totalorder %s69, %s85
      %p87 = scmp.eq.s32.totalorder %s35, 0
      %p88 = por %p86, %p87
      %s90 = sadd.s32 %s89, 1
      %p93 = scmp.eq.s32.totalorder %s29, 1
      %p94 = scmp.ne.s32.totalorder %s89, %s91
      %p95 = scmp.eq.s32.totalorder %s29, 0
      %p96 = por %p94, %p95
      %p97 = scmp.ne.s32.totalorder %s89, %s91
      %p98 = scmp.eq.s32.totalorder %s34, 1
      %p99 = por %p97, %p98
      %p100 = scmp.ne.s32.totalorder %s91, %s92
      %p101 = scmp.eq.s32.totalorder %s34, 0
      %p102 = por %p100, %p101
      %p103 = scmp.ne.s32.totalorder %s91, %s92
      %p104 = scmp.eq.s32.totalorder %s35, 1
      %p105 = por %p103, %p104
      %p107 = scmp.ne.s32.totalorder %s92, %s106
      %p108 = scmp.eq.s32.totalorder %s35, 0
      %p109 = por %p107, %p108
      %s111 = sadd.s32 %s110, 1
      %p114 = scmp.eq.s32.totalorder %s29, 1
      %p115 = scmp.ne.s32.totalorder %s110, %s112
      %p116 = scmp.eq.s32.totalorder %s29, 0
      %p117 = por %p115, %p116
      %p118 = scmp.ne.s32.totalorder %s110, %s112
      %p119 = scmp.eq.s32.totalorder %s34, 1
      %p120 = por %p118, %p119
      %p121 = scmp.ne.s32.totalorder %s112, %s113
      %p122 = scmp.eq.s32.totalorder %s34, 0
      %p123 = por %p121, %p122
      %p124 = scmp.ne.s32.totalorder %s112, %s113
      %p125 = scmp.eq.s32.totalorder %s35, 1
      %p126 = por %p124, %p125
      %p128 = scmp.ne.s32.totalorder %s113, %s127
      %p129 = scmp.eq.s32.totalorder %s35, 0
      %p130 = por %p128, %p129
      %s132 = sadd.s32 %s131, 1
      %p135 = scmp.eq.s32.totalorder %s29, 1
      %p136 = scmp.ne.s32.totalorder %s131, %s133
      %p137 = scmp.eq.s32.totalorder %s29, 0
      %p138 = por %p136, %p137
      %p139 = scmp.ne.s32.totalorder %s131, %s133
      %p140 = scmp.eq.s32.totalorder %s34, 1
      %p141 = por %p139, %p140
      %p142 = scmp.ne.s32.totalorder %s133, %s134
      %p143 = scmp.eq.s32.totalorder %s34, 0
      %p144 = por %p142, %p143
      %p145 = scmp.ne.s32.totalorder %s133, %s134
      %p146 = scmp.eq.s32.totalorder %s35, 1
      %p147 = por %p145, %p146
      %p149 = scmp.ne.s32.totalorder %s134, %s148
      %p150 = scmp.eq.s32.totalorder %s35, 0
      %p151 = por %p149, %p150
      %s153 = sadd.s32 %s152, 1
      %p156 = scmp.eq.s32.totalorder %s29, 1
      %p157 = scmp.ne.s32.totalorder %s152, %s154
      %p158 = scmp.eq.s32.totalorder %s29, 0
      %p159 = por %p157, %p158
      %p160 = scmp.ne.s32.totalorder %s152, %s154
      %p161 = scmp.eq.s32.totalorder %s34, 1
      %p162 = por %p160, %p161
      %p163 = scmp.ne.s32.totalorder %s154, %s155
      %p164 = scmp.eq.s32.totalorder %s34, 0
      %p165 = por %p163, %p164
      %p166 = scmp.ne.s32.totalorder %s154, %s155
      %p167 = scmp.eq.s32.totalorder %s35, 1
      %p168 = por %p166, %p167
      %p170 = scmp.ne.s32.totalorder %s155, %s169
      %p171 = scmp.eq.s32.totalorder %s35, 0
      %p172 = por %p170, %p171
      %s174 = sadd.s32 %s173, 1
      %p177 = scmp.eq.s32.totalorder %s29, 1
      %p178 = scmp.ne.s32.totalorder %s173, %s175
      %p179 = scmp.eq.s32.totalorder %s29, 0
      %p180 = por %p178, %p179
      %p181 = scmp.ne.s32.totalorder %s173, %s175
      %p182 = scmp.eq.s32.totalorder %s34, 1
      %p183 = por %p181, %p182
      %p184 = scmp.ne.s32.totalorder %s175, %s176
      %p185 = scmp.eq.s32.totalorder %s34, 0
      %p186 = por %p184, %p185
      %p187 = scmp.ne.s32.totalorder %s175, %s176
      %p188 = scmp.eq.s32.totalorder %s35, 1
      %p189 = por %p187, %p188
      %p191 = scmp.ne.s32.totalorder %s176, %s190
      %p192 = scmp.eq.s32.totalorder %s35, 0
      %p193 = por %p191, %p192
      %s195 = sadd.s32 %s194, 1
      %p198 = scmp.eq.s32.totalorder %s29, 1
      %p199 = scmp.ne.s32.totalorder %s194, %s196
      %p200 = scmp.eq.s32.totalorder %s29, 0
      %p201 = por %p199, %p200
      %p202 = scmp.ne.s32.totalorder %s194, %s196
      %p203 = scmp.eq.s32.totalorder %s34, 1
      %p204 = por %p202, %p203
      %p205 = scmp.ne.s32.totalorder %s196, %s197
      %p206 = scmp.eq.s32.totalorder %s34, 0
      %p207 = por %p205, %p206
      %p208 = scmp.ne.s32.totalorder %s196, %s197
      %p209 = scmp.eq.s32.totalorder %s35, 1
      %p210 = por %p208, %p209
      %p212 = scmp.ne.s32.totalorder %s197, %s211
      %p213 = scmp.eq.s32.totalorder %s35, 0
      %p214 = por %p212, %p213
      %s216 = sadd.s32 %s215, 1
      %p219 = scmp.eq.s32.totalorder %s29, 1
      %p220 = scmp.ne.s32.totalorder %s215, %s217
      %p221 = scmp.eq.s32.totalorder %s29, 0
      %p222 = por %p220, %p221
      %p223 = scmp.ne.s32.totalorder %s215, %s217
      %p224 = scmp.eq.s32.totalorder %s34, 1
      %p225 = por %p223, %p224
      %p226 = scmp.ne.s32.totalorder %s217, %s218
      %p227 = scmp.eq.s32.totalorder %s34, 0
      %p228 = por %p226, %p227
      %p229 = scmp.ne.s32.totalorder %s217, %s218
      %p230 = scmp.eq.s32.totalorder %s35, 1
      %p231 = por %p229, %p230
      %p233 = scmp.ne.s32.totalorder %s218, %s232
      %p234 = scmp.eq.s32.totalorder %s35, 0
      %p235 = por %p233, %p234
      %s237 = sadd.s32 %s236, 1
      %p240 = scmp.eq.s32.totalorder %s29, 1
      %p241 = scmp.ne.s32.totalorder %s236, %s238
      %p242 = scmp.eq.s32.totalorder %s29, 0
      %p243 = por %p241, %p242
      %p244 = scmp.ne.s32.totalorder %s236, %s238
      %p245 = scmp.eq.s32.totalorder %s34, 1
      %p246 = por %p244, %p245
      %p247 = scmp.ne.s32.totalorder %s238, %s239
      %p248 = scmp.eq.s32.totalorder %s34, 0
      %p249 = por %p247, %p248
      %p250 = scmp.ne.s32.totalorder %s238, %s239
      %p251 = scmp.eq.s32.totalorder %s35, 1
      %p252 = por %p250, %p251
      %p254 = scmp.ne.s32.totalorder %s239, %s253
      %p255 = scmp.eq.s32.totalorder %s35, 0
      %p256 = por %p254, %p255
      %s257 = ssub.s32 %s29, %s36
      %p258 = scmp.eq.s32.totalorder %s257, 0
      %s260 = sadd.s32 %s259, 1
      %s261 = scalar_select %p258, %s259, %s260
      %p264 = pneg %p258
      %p265 = scmp.eq.s32.totalorder %s29, 1
      %p266 = por %p264, %p265
      %p267 = scmp.ne.s32.totalorder %s259, %s262
      %p268 = scmp.eq.s32.totalorder %s29, 0
      %p269 = por %p267, %p268
      %p270 = scmp.ne.s32.totalorder %s259, %s262
      %p271 = scmp.eq.s32.totalorder %s34, 1
      %p272 = por %p270, %p271
      %p273 = scmp.ne.s32.totalorder %s262, %s263
      %p274 = scmp.eq.s32.totalorder %s34, 0
      %p275 = por %p273, %p274
      %p276 = scmp.ne.s32.totalorder %s262, %s263
      %p277 = scmp.eq.s32.totalorder %s35, 1
      %p278 = por %p276, %p277
      %p280 = scmp.ne.s32.totalorder %s263, %s279
      %p281 = scmp.eq.s32.totalorder %s35, 0
      %p282 = por %p280, %p281
      %p283 = scmp.le.s32.totalorder 1, %s29
      %p284 = scmp.lt.s32.totalorder %s29, 3
      %p285 = pnand %p283, %p284
      %p286 = pneg %p285
      // Predicated region
      $region9: #{tpu_custom_call.1} parent=5 // pred_check
        _
      $region10: #{tpu_custom_call.1} parent=5 // pred_check_branch
        %288 = sbr.rel (%p285) target = $region12
      $region11: #{tpu_custom_call.1} parent=5 // pred_region
        %s289 = ssub.s32 %s29, 1
        // Predicated region
        $region13: #{tpu_custom_call.1} parent=11 // pred_check
          %p290 = pneg %p102
        $region14: #{tpu_custom_call.1} parent=11 // pred_check_branch
          %292 = sbr.rel (%p290) target = $region16
        $region15: #{tpu_custom_call.1} parent=11 // pred_region
          %s294 = ssub.s32 2048, 2048
          %295 = vsyncadd [#allocation7], %s294
          %s296 = sshll.u32 [#allocation8], 4
          %s297 = int_to_ptr.vmem [resolvable:$true] %s296
          %302 = dma.hbm_to_vmem [thread:$0]  %s2, 2048, %s297, [#allocation7], 128, 128, 8
        $region16: #{tpu_custom_call.1} parent=11 // pred_fallthru
          _
        // Predicated region
        $region17: #{tpu_custom_call.1} parent=11 // pred_check
          %p303 = pneg %p123
        $region18: #{tpu_custom_call.1} parent=11 // pred_check_branch
          %305 = sbr.rel (%p303) target = $region20
        $region19: #{tpu_custom_call.1} parent=11 // pred_region
          %s307 = ssub.s32 1024, 1024
          %308 = vsyncadd [#allocation10], %s307
          %s309 = sshll.u32 [#allocation9], 4
          %s310 = int_to_ptr.vmem [resolvable:$true] %s309
          %315 = dma.hbm_to_vmem [thread:$0]  %s3, 1024, %s310, [#allocation10], 128, 128, 8
        $region20: #{tpu_custom_call.1} parent=11 // pred_fallthru
          _
        // Predicated region
        $region21: #{tpu_custom_call.1} parent=11 // pred_check
          %p316 = pneg %p144
        $region22: #{tpu_custom_call.1} parent=11 // pred_check_branch
          %318 = sbr.rel (%p316) target = $region24
        $region23: #{tpu_custom_call.1} parent=11 // pred_region
          %s320 = ssub.s32 1024, 1024
          %321 = vsyncadd [#allocation10], %s320
          %s322 = sshll.u32 [#allocation11], 4
          %s323 = int_to_ptr.vmem [resolvable:$true] %s322
          %328 = dma.hbm_to_vmem [thread:$0]  %s4, 1024, %s323, [#allocation10], 128, 128, 8
        $region24: #{tpu_custom_call.1} parent=11 // pred_fallthru
          _
        // Predicated region
        $region25: #{tpu_custom_call.1} parent=11 // pred_check
          %p329 = pneg %p165
        $region26: #{tpu_custom_call.1} parent=11 // pred_check_branch
          %331 = sbr.rel (%p329) target = $region28
        $region27: #{tpu_custom_call.1} parent=11 // pred_region
          %s333 = ssub.s32 2048, 2048
          %334 = vsyncadd [#allocation13], %s333
          %s335 = sshll.u32 [#allocation12], 4
          %s336 = int_to_ptr.vmem [resolvable:$true] %s335
          %341 = dma.hbm_to_vmem [thread:$0]  %s5, 2048, %s336, [#allocation13], 128, 128, 8
        $region28: #{tpu_custom_call.1} parent=11 // pred_fallthru
          _
        // Predicated region
        $region29: #{tpu_custom_call.1} parent=11 // pred_check
          %p342 = pneg %p186
        $region30: #{tpu_custom_call.1} parent=11 // pred_check_branch
          %344 = sbr.rel (%p342) target = $region32
        $region31: #{tpu_custom_call.1} parent=11 // pred_region
          _
        $region32: #{tpu_custom_call.1} parent=11 // pred_fallthru
          _
        // Predicated region
        $region33: #{tpu_custom_call.1} parent=11 // pred_check
          %p345 = pneg %p207
        $region34: #{tpu_custom_call.1} parent=11 // pred_check_branch
          %347 = sbr.rel (%p345) target = $region36
        $region35: #{tpu_custom_call.1} parent=11 // pred_region
          _
        $region36: #{tpu_custom_call.1} parent=11 // pred_fallthru
          _
        // Predicated region
        $region37: #{tpu_custom_call.1} parent=11 // pred_check
          %p348 = pneg %p228
        $region38: #{tpu_custom_call.1} parent=11 // pred_check_branch
          %350 = sbr.rel (%p348) target = $region40
        $region39: #{tpu_custom_call.1} parent=11 // pred_region
          %s352 = ssub.s32 64, 64
          %353 = vsyncadd [#allocation5], %s352
          %s355 = sshll.u32 %s8, 4
          %s356 = int_to_ptr.vmem [resolvable:$true] %s355
          %358 = dma.vmem_to_smem %s356, 64, [#allocation14], [#allocation5]
        $region40: #{tpu_custom_call.1} parent=11 // pred_fallthru
          _
        // Predicated region
        $region41: #{tpu_custom_call.1} parent=11 // pred_check
          %p359 = pneg %p249
        $region42: #{tpu_custom_call.1} parent=11 // pred_check_branch
          %361 = sbr.rel (%p359) target = $region44
        $region43: #{tpu_custom_call.1} parent=11 // pred_region
          %s363 = ssub.s32 16, 16
          %364 = vsyncadd [#allocation16], %s363
          %s366 = sshll.u32 %s9, 4
          %s367 = int_to_ptr.vmem [resolvable:$true] %s366
          %369 = dma.vmem_to_smem %s367, 16, [#allocation15], [#allocation16]
        $region44: #{tpu_custom_call.1} parent=11 // pred_fallthru
          _
      $region12: #{tpu_custom_call.1} parent=5 // pred_fallthru
        _
      %p370 = scmp.lt.s32.totalorder %s29, 2
      // Predicated region
      $region45: #{tpu_custom_call.1} parent=5 // pred_check
        %p371 = pneg %p370
      $region46: #{tpu_custom_call.1} parent=5 // pred_check_branch
        %373 = sbr.rel (%p371) target = $region48
      $region47: #{tpu_custom_call.1} parent=5 // pred_region
        // Predicated region
        $region49: #{tpu_custom_call.1} parent=47 // pred_check
          %p374 = pneg %p49
        $region50: #{tpu_custom_call.1} parent=47 // pred_check_branch
          %376 = sbr.rel (%p374) target = $region52
        $region51: #{tpu_custom_call.1} parent=47 // pred_region
          %s377 = sand.u32 %s39, 1
          %s378 = scalar_lea.sflag [#allocation3], %s377
          %s379 = sand.u32 %s39, 1
          %s380 = smul.addr %s379, 32
          %s381 = scalar_lea.vmem [#allocation2], %s380
          %s382 = smul.u32 4, %s29
          %s384 = ssub.s32 512, 512
          %385 = vsyncadd %s378, %s384
          %s386 = smul.addr %s382, 128
          %s387 = scalar_lea.hbm %s0, %s386
          %s388 = sshll.u32 %s381, 4
          %s389 = int_to_ptr.vmem [resolvable:$true] %s388
          %394 = dma.hbm_to_vmem [thread:$0]  %s387, 512, %s389, %s378, 128, 128, 8
        $region52: #{tpu_custom_call.1} parent=47 // pred_fallthru
          _
        // Predicated region
        $region53: #{tpu_custom_call.1} parent=47 // pred_check
          %p395 = pneg %p75
        $region54: #{tpu_custom_call.1} parent=47 // pred_check_branch
          %397 = sbr.rel (%p395) target = $region56
        $region55: #{tpu_custom_call.1} parent=47 // pred_region
          %s398 = sand.u32 %s29, 1
          %s399 = scalar_lea.sflag [#allocation7], %s398
          %s400 = sand.u32 %s65, 1
          %s401 = smul.addr %s400, 64
          %s402 = scalar_lea.vmem [#allocation6], %s401
          %s403 = smul.u32 4, %s29
          %s405 = ssub.s32 1024, 1024
          %406 = vsyncadd %s399, %s405
          %s407 = smul.addr %s403, 2
          %s408 = smul.addr %s407, 128
          %s409 = scalar_lea.hbm %s1, %s408
          %s410 = sshll.u32 %s402, 4
          %s411 = int_to_ptr.vmem [resolvable:$true] %s410
          %416 = dma.hbm_to_vmem [thread:$0]  %s409, 1024, %s411, %s399, 128, 128, 8
        $region56: #{tpu_custom_call.1} parent=47 // pred_fallthru
          _
      $region48: #{tpu_custom_call.1} parent=5 // pred_fallthru
        _
      %p417 = scmp.le.s32.totalorder 1, %s29
      %p418 = scmp.lt.s32.totalorder %s29, 3
      %p419 = pnand %p417, %p418
      %p420 = pneg %p419
      // Predicated region
      $region57: #{tpu_custom_call.1} parent=5 // pred_check
        _
      $region58: #{tpu_custom_call.1} parent=5 // pred_check_branch
        %422 = sbr.rel (%p419) target = $region60
      $region59: #{tpu_custom_call.1} parent=5 // pred_region
        %s423 = ssub.s32 %s29, 1
        %s424 = sand.u32 %s42, 1
        %s425 = scalar_lea.sflag [#allocation3], %s424
        %s426 = sand.u32 %s42, 1
        %s427 = smul.addr %s426, 32
        %s428 = scalar_lea.vmem [#allocation2], %s427
        // Predicated region
        $region61: #{tpu_custom_call.1} parent=59 // pred_check
          %p429 = pneg %p55
        $region62: #{tpu_custom_call.1} parent=59 // pred_check_branch
          %431 = sbr.rel (%p429) target = $region64
        $region63: #{tpu_custom_call.1} parent=59 // pred_region
          %432 = dma.done %s425, 512
        $region64: #{tpu_custom_call.1} parent=59 // pred_fallthru
          _
        %s433 = sand.u32 %s34, 1
        %s434 = scalar_lea.sflag [#allocation7], %s433
        %s435 = sand.u32 %s68, 1
        %s436 = smul.addr %s435, 64
        %s437 = scalar_lea.vmem [#allocation6], %s436
        // Predicated region
        $region65: #{tpu_custom_call.1} parent=59 // pred_check
          %p438 = pneg %p81
        $region66: #{tpu_custom_call.1} parent=59 // pred_check_branch
          %440 = sbr.rel (%p438) target = $region68
        $region67: #{tpu_custom_call.1} parent=59 // pred_region
          %441 = dma.done %s434, 1024
        $region68: #{tpu_custom_call.1} parent=59 // pred_fallthru
          _
        // Predicated region
        $region69: #{tpu_custom_call.1} parent=59 // pred_check
          %p442 = pneg %p102
        $region70: #{tpu_custom_call.1} parent=59 // pred_check_branch
          %444 = sbr.rel (%p442) target = $region72
        $region71: #{tpu_custom_call.1} parent=59 // pred_region
          %445 = dma.done [#allocation7], 2048
        $region72: #{tpu_custom_call.1} parent=59 // pred_fallthru
          _
        // Predicated region
        $region73: #{tpu_custom_call.1} parent=59 // pred_check
          %p446 = pneg %p123
        $region74: #{tpu_custom_call.1} parent=59 // pred_check_branch
          %448 = sbr.rel (%p446) target = $region76
        $region75: #{tpu_custom_call.1} parent=59 // pred_region
          %449 = dma.done [#allocation10], 1024
        $region76: #{tpu_custom_call.1} parent=59 // pred_fallthru
          _
        // Predicated region
        $region77: #{tpu_custom_call.1} parent=59 // pred_check
          %p450 = pneg %p144
        $region78: #{tpu_custom_call.1} parent=59 // pred_check_branch
          %452 = sbr.rel (%p450) target = $region80
        $region79: #{tpu_custom_call.1} parent=59 // pred_region
          %453 = dma.done [#allocation10], 1024
        $region80: #{tpu_custom_call.1} parent=59 // pred_fallthru
          _
        // Predicated region
        $region81: #{tpu_custom_call.1} parent=59 // pred_check
          %p454 = pneg %p165
        $region82: #{tpu_custom_call.1} parent=59 // pred_check_branch
          %456 = sbr.rel (%p454) target = $region84
        $region83: #{tpu_custom_call.1} parent=59 // pred_region
          %457 = dma.done [#allocation13], 2048
        $region84: #{tpu_custom_call.1} parent=59 // pred_fallthru
          _
        // Predicated region
        $region85: #{tpu_custom_call.1} parent=59 // pred_check
          %p458 = pneg %p228
        $region86: #{tpu_custom_call.1} parent=59 // pred_check_branch
          %460 = sbr.rel (%p458) target = $region88
        $region87: #{tpu_custom_call.1} parent=59 // pred_region
          %461 = dma.done [#allocation5], 64
        $region88: #{tpu_custom_call.1} parent=59 // pred_fallthru
          _
        // Predicated region
        $region89: #{tpu_custom_call.1} parent=59 // pred_check
          %p462 = pneg %p249
        $region90: #{tpu_custom_call.1} parent=59 // pred_check_branch
          %464 = sbr.rel (%p462) target = $region92
        $region91: #{tpu_custom_call.1} parent=59 // pred_region
          %465 = dma.done [#allocation16], 16
        $region92: #{tpu_custom_call.1} parent=59 // pred_fallthru
          _
        %466 = sfence
        %s467 = sand.u32 %s42, 1
        %s468 = scalar_lea.sflag [#allocation3], %s467
        %s469 = sand.u32 %s42, 1
        %s470 = smul.addr %s469, 32
        %s471 = scalar_lea.vmem [#allocation2], %s470
        %p472 = pneg %p55
        %p473 = pneg %p52
        %s474 = sand.u32 %s34, 1
        %s475 = scalar_lea.sflag [#allocation7], %s474
        %s476 = sand.u32 %s68, 1
        %s477 = smul.addr %s476, 64
        %s478 = scalar_lea.vmem [#allocation6], %s477
        %p479 = pneg %p81
        %p480 = pneg %p78
        %p481 = pneg %p102
        %p482 = pneg %p99
        %p483 = pneg %p123
        %p484 = pneg %p120
        %p485 = pneg %p144
        %p486 = pneg %p141
        %p487 = pneg %p165
        %p488 = pneg %p162
        %p489 = pneg %p186
        %p490 = pneg %p183
        %p491 = pneg %p207
        %p492 = pneg %p204
        %p493 = pneg %p228
        %p494 = pneg %p225
        %p495 = pneg %p249
        %p496 = pneg %p246
        %p497 = pneg %p275
        %p498 = pneg %p272
        %s499 = sand.u32 %s262, 1
        %s500 = scalar_lea.sflag [#allocation4], %s499
        %s501 = sand.u32 %s262, 1
        %s502 = smul.addr %s501, 32
        %s503 = scalar_lea.vmem [#allocation17], %s502
        %s504 = smul.u32 4, %s34
        %s505 = smul.u32 4, %s34
        %s506 = smul.u32 4, %s34
        %v507 = vld [vmem:[%s428] sm:$0xff]
        %v508 = vld [vmem:[%s428 + $0x8] sm:$0xff]
        %v509 = vld [vmem:[%s428 + $0x10] sm:$0xff]
        %v510 = vld [vmem:[%s428 + $0x18] sm:$0xff]
        %v511 = vld [vmem:[%s437] sm:$0xff]
        %v512 = vld [vmem:[%s437 + $0x8] sm:$0xff]
        %v513 = vld [vmem:[%s437 + $0x10] sm:$0xff]
        %v514 = vld [vmem:[%s437 + $0x18] sm:$0xff]
        %v515 = vld [vmem:[%s437 + $0x20] sm:$0xff]
        %v516 = vld [vmem:[%s437 + $0x28] sm:$0xff]
        %v517 = vld [vmem:[%s437 + $0x30] sm:$0xff]
        %v518 = vld [vmem:[%s437 + $0x38] sm:$0xff]
        %v519 = vld [vmem:[#allocation8] sm:$0xff]
        %v520 = vld [vmem:[#allocation8 + $0x8] sm:$0xff]
        %v521 = vld [vmem:[#allocation8 + $0x10] sm:$0xff]
        %v522 = vld [vmem:[#allocation8 + $0x18] sm:$0xff]
        %v523 = vld [vmem:[#allocation8 + $0x20] sm:$0xff]
        %v524 = vld [vmem:[#allocation8 + $0x28] sm:$0xff]
        %v525 = vld [vmem:[#allocation8 + $0x30] sm:$0xff]
        %v526 = vld [vmem:[#allocation8 + $0x38] sm:$0xff]
        %v527 = vld [vmem:[#allocation8 + $0x40] sm:$0xff]
        %v528 = vld [vmem:[#allocation8 + $0x48] sm:$0xff]
        %v529 = vld [vmem:[#allocation8 + $0x50] sm:$0xff]
        %v530 = vld [vmem:[#allocation8 + $0x58] sm:$0xff]
        %v531 = vld [vmem:[#allocation8 + $0x60] sm:$0xff]
        %v532 = vld [vmem:[#allocation8 + $0x68] sm:$0xff]
        %v533 = vld [vmem:[#allocation8 + $0x70] sm:$0xff]
        %v534 = vld [vmem:[#allocation8 + $0x78] sm:$0xff]
        %535 = vmatprep.subr.mxu0 0.0
        %536 = vmatpush1.msra.mxu0 %v519
        %537 = vmatprep.subr.mxu0 0.0
        %538 = vmatpush1.msra.mxu0 %v520
        %539 = vmatprep.subr.mxu0 0.0
        %540 = vmatpush1.msra.mxu0 %v521
        %541 = vmatprep.subr.mxu0 0.0
        %542 = vmatpush1.msra.mxu0 %v522
        %543 = vmatprep.subr.mxu0 0.0
        %544 = vmatpush1.msra.mxu0 %v523
        %545 = vmatprep.subr.mxu0 0.0
        %546 = vmatpush1.msra.mxu0 %v524
        %547 = vmatprep.subr.mxu0 0.0
        %548 = vmatpush1.msra.mxu0 %v525
        %549 = vmatprep.subr.mxu0 0.0
        %550 = vmatpush1.msra.mxu0 %v526
        %551 = vmatprep.subr.mxu0 0.0
        %552 = vmatpush1.msra.mxu0 %v527
        %553 = vmatprep.subr.mxu0 0.0
        %554 = vmatpush1.msra.mxu0 %v528
        %555 = vmatprep.subr.mxu0 0.0
        %556 = vmatpush1.msra.mxu0 %v529
        %557 = vmatprep.subr.mxu0 0.0
        %558 = vmatpush1.msra.mxu0 %v530
        %559 = vmatprep.subr.mxu0 0.0
        %560 = vmatpush1.msra.mxu0 %v531
        %561 = vmatprep.subr.mxu0 0.0
        %562 = vmatpush1.msra.mxu0 %v532
        %563 = vmatprep.subr.mxu0 0.0
        %564 = vmatpush1.msra.mxu0 %v533
        %565 = vmatprep.subr.mxu0 0.0
        %566 = vmatpush1.msra.mxu0 %v534
        %567 = vmatprep.subr.mxu0 0.0
        %568 = vmatpush1.msra.mxu0 0.0
        %569 = vmatprep.subr.mxu0 0.0
        %570 = vmatpush1.msra.mxu0 0.0
        %571 = vmatprep.subr.mxu0 0.0
        %572 = vmatpush1.msra.mxu0 0.0
        %573 = vmatprep.subr.mxu0 0.0
        %574 = vmatpush1.msra.mxu0 0.0
        %575 = vmatprep.subr.mxu0 0.0
        %576 = vmatpush1.msra.mxu0 0.0
        %577 = vmatprep.subr.mxu0 0.0
        %578 = vmatpush1.msra.mxu0 0.0
        %579 = vmatprep.subr.mxu0 0.0
        %580 = vmatpush1.msra.mxu0 0.0
        %581 = vmatprep.subr.mxu0 0.0
        %582 = vmatpush1.msra.mxu0 0.0
        %583 = vmatprep.subr.mxu0 0.0
        %584 = vmatpush1.msra.mxu0 0.0
        %585 = vmatprep.subr.mxu0 0.0
        %586 = vmatpush1.msra.mxu0 0.0
        %587 = vmatprep.subr.mxu0 0.0
        %588 = vmatpush1.msra.mxu0 0.0
        %589 = vmatprep.subr.mxu0 0.0
        %590 = vmatpush1.msra.mxu0 0.0
        %591 = vmatprep.subr.mxu0 0.0
        %592 = vmatpush1.msra.mxu0 0.0
        %593 = vmatprep.subr.mxu0 0.0
        %594 = vmatpush1.msra.mxu0 0.0
        %595 = vmatprep.subr.mxu0 0.0
        %596 = vmatpush1.msra.mxu0 0.0
        %597 = vmatprep.subr.mxu0 0.0
        %598 = vmatpush1.msra.mxu0 0.0
        %599 = vmatprep.mubr.f32.mxu0 0.0
        %600 = vmatmul.mubr.f32.gmra.mrb[0].mxu0 %v507
        %v601 = vpop.f32.mrb[0].mxu0
        %v602 = vadd.f32 0.0, %v601
        %v603 = vpop.f32.mrb[0].mxu0
        %604 = vmatprep.mubr.f32.mxu0 0.0
        %605 = vmatmul.mubr.f32.gmra.mrb[0].mxu0 %v508
        %v606 = vpop.f32.mrb[0].mxu0
        %v607 = vadd.f32 0.0, %v606
        %v608 = vpop.f32.mrb[0].mxu0
        %609 = vmatprep.mubr.f32.mxu0 0.0
        %610 = vmatmul.mubr.f32.gmra.mrb[0].mxu0 %v509
        %v611 = vpop.f32.mrb[0].mxu0
        %v612 = vadd.f32 0.0, %v611
        %v613 = vpop.f32.mrb[0].mxu0
        %614 = vmatprep.mubr.f32.mxu0 0.0
        %615 = vmatmul.mubr.f32.gmra.mrb[0].mxu0 %v510
        %v616 = vpop.f32.mrb[0].mxu0
        %v617 = vadd.f32 0.0, %v616
        %v618 = vpop.f32.mrb[0].mxu0
        %619 = vdwg.mxu0
        %v620 = vmul.f32 %v602, 0.17677669
        %v621 = vmul.f32 %v607, 0.17677669
        %v622 = vmul.f32 %v612, 0.17677669
        %v623 = vmul.f32 %v617, 0.17677669
        %v624 = vld [vmem:[#allocation9] sm:$0xff]
        %v625 = vld [vmem:[#allocation9 + $0x8] sm:$0xff]
        %v626 = vld [vmem:[#allocation9 + $0x10] sm:$0xff]
        %v627 = vld [vmem:[#allocation9 + $0x18] sm:$0xff]
        %v628 = vld [vmem:[#allocation9 + $0x20] sm:$0xff]
        %v629 = vld [vmem:[#allocation9 + $0x28] sm:$0xff]
        %v630 = vld [vmem:[#allocation9 + $0x30] sm:$0xff]
        %v631 = vld [vmem:[#allocation9 + $0x38] sm:$0xff]
        %vm632 = vcmask 523264
        %v634 = vsel %vm632, %v511, 0
        %v637 = vsel %vm632, %v512, 0
        %v640 = vsel %vm632, %v513, 0
        %v643 = vsel %vm632, %v514, 0
        %v646 = vsel %vm632, %v515, 0
        %v649 = vsel %vm632, %v516, 0
        %v652 = vsel %vm632, %v517, 0
        %v655 = vsel %vm632, %v518, 0
        %657 = vmatprep.subr.mxu0 0.0
        %658 = vmatpush1.msra.mxu0 %v624
        %659 = vmatprep.subr.mxu0 0.0
        %660 = vmatpush1.msra.mxu0 %v625
        %661 = vmatprep.subr.mxu0 0.0
        %662 = vmatpush1.msra.mxu0 %v626
        %663 = vmatprep.subr.mxu0 0.0
        %664 = vmatpush1.msra.mxu0 %v627
        %665 = vmatprep.subr.mxu0 0.0
        %666 = vmatpush1.msra.mxu0 %v628
        %667 = vmatprep.subr.mxu0 0.0
        %668 = vmatpush1.msra.mxu0 %v629
        %669 = vmatprep.subr.mxu0 0.0
        %670 = vmatpush1.msra.mxu0 %v630
        %671 = vmatprep.subr.mxu0 0.0
        %672 = vmatpush1.msra.mxu0 %v631
        %673 = vmatprep.subr.mxu0 0.0
        %674 = vmatpush1.msra.mxu0 0.0
        %675 = vmatprep.subr.mxu0 0.0
        %676 = vmatpush1.msra.mxu0 0.0
        %677 = vmatprep.subr.mxu0 0.0
        %678 = vmatpush1.msra.mxu0 0.0
        %679 = vmatprep.subr.mxu0 0.0
        %680 = vmatpush1.msra.mxu0 0.0
        %681 = vmatprep.subr.mxu0 0.0
        %682 = vmatpush1.msra.mxu0 0.0
        %683 = vmatprep.subr.mxu0 0.0
        %684 = vmatpush1.msra.mxu0 0.0
        %685 = vmatprep.subr.mxu0 0.0
        %686 = vmatpush1.msra.mxu0 0.0
        %687 = vmatprep.subr.mxu0 0.0
        %688 = vmatpush1.msra.mxu0 0.0
        %689 = vmatprep.subr.mxu0 0.0
        %690 = vmatpush1.msra.mxu0 0.0
        %691 = vmatprep.subr.mxu0 0.0
        %692 = vmatpush1.msra.mxu0 0.0
        %693 = vmatprep.subr.mxu0 0.0
        %694 = vmatpush1.msra.mxu0 0.0
        %695 = vmatprep.subr.mxu0 0.0
        %696 = vmatpush1.msra.mxu0 0.0
        %697 = vmatprep.subr.mxu0 0.0
        %698 = vmatpush1.msra.mxu0 0.0
        %699 = vmatprep.subr.mxu0 0.0
        %700 = vmatpush1.msra.mxu0 0.0
        %701 = vmatprep.subr.mxu0 0.0
        %702 = vmatpush1.msra.mxu0 0.0
        %703 = vmatprep.subr.mxu0 0.0
        %704 = vmatpush1.msra.mxu0 0.0
        %705 = vmatprep.subr.mxu0 0.0
        %706 = vmatpush1.msra.mxu0 0.0
        %707 = vmatprep.subr.mxu0 0.0
        %708 = vmatpush1.msra.mxu0 0.0
        %709 = vmatprep.subr.mxu0 0.0
        %710 = vmatpush1.msra.mxu0 0.0
        %711 = vmatprep.subr.mxu0 0.0
        %712 = vmatpush1.msra.mxu0 0.0
        %713 = vmatprep.subr.mxu0 0.0
        %714 = vmatpush1.msra.mxu0 0.0
        %715 = vmatprep.subr.mxu0 0.0
        %716 = vmatpush1.msra.mxu0 0.0
        %717 = vmatprep.subr.mxu0 0.0
        %718 = vmatpush1.msra.mxu0 0.0
        %719 = vmatprep.subr.mxu0 0.0
        %720 = vmatpush1.msra.mxu0 0.0
        %721 = vmatprep.mubr.f32.mxu0 0.0
        %722 = vmatmul.mubr.f32.gmra.mrb[0].mxu0 %v634
        %v723 = vpop.f32.mrb[0].mxu0
        %v724 = vadd.f32 0.0, %v723
        %v725 = vpop.f32.mrb[0].mxu0
        %726 = vmatprep.mubr.f32.mxu0 0.0
        %727 = vmatmul.mubr.f32.gmra.mrb[0].mxu0 %v637
        %v728 = vpop.f32.mrb[0].mxu0
        %v729 = vadd.f32 0.0, %v728
        %v730 = vpop.f32.mrb[0].mxu0
        %731 = vmatprep.mubr.f32.mxu0 0.0
        %732 = vmatmul.mubr.f32.gmra.mrb[0].mxu0 %v640
        %v733 = vpop.f32.mrb[0].mxu0
        %v734 = vadd.f32 0.0, %v733
        %v735 = vpop.f32.mrb[0].mxu0
        %736 = vmatprep.mubr.f32.mxu0 0.0
        %737 = vmatmul.mubr.f32.gmra.mrb[0].mxu0 %v643
        %v738 = vpop.f32.mrb[0].mxu0
        %v739 = vadd.f32 0.0, %v738
        %v740 = vpop.f32.mrb[0].mxu0
        %741 = vmatprep.mubr.f32.mxu0 0.0
        %742 = vmatmul.mubr.f32.gmra.mrb[0].mxu0 %v646
        %v743 = vpop.f32.mrb[0].mxu0
        %v744 = vadd.f32 0.0, %v743
        %v745 = vpop.f32.mrb[0].mxu0
        %746 = vmatprep.mubr.f32.mxu0 0.0
        %747 = vmatmul.mubr.f32.gmra.mrb[0].mxu0 %v649
        %v748 = vpop.f32.mrb[0].mxu0
        %v749 = vadd.f32 0.0, %v748
        %v750 = vpop.f32.mrb[0].mxu0
        %751 = vmatprep.mubr.f32.mxu0 0.0
        %752 = vmatmul.mubr.f32.gmra.mrb[0].mxu0 %v652
        %v753 = vpop.f32.mrb[0].mxu0
        %v754 = vadd.f32 0.0, %v753
        %v755 = vpop.f32.mrb[0].mxu0
        %756 = vmatprep.mubr.f32.mxu0 0.0
        %757 = vmatmul.mubr.f32.gmra.mrb[0].mxu0 %v655
        %v758 = vpop.f32.mrb[0].mxu0
        %v759 = vadd.f32 0.0, %v758
        %v760 = vpop.f32.mrb[0].mxu0
        %761 = vdwg.mxu0
        %v762 = vld [vmem:[#allocation11] sm:$0xff]
        %v763 = vld [vmem:[#allocation11 + $0x8] sm:$0xff]
        %v764 = vld [vmem:[#allocation11 + $0x10] sm:$0xff]
        %v765 = vld [vmem:[#allocation11 + $0x18] sm:$0xff]
        %v766 = vld [vmem:[#allocation11 + $0x20] sm:$0xff]
        %v767 = vld [vmem:[#allocation11 + $0x28] sm:$0xff]
        %v768 = vld [vmem:[#allocation11 + $0x30] sm:$0xff]
        %v769 = vld [vmem:[#allocation11 + $0x38] sm:$0xff]
        %770 = vmatprep.subr.mxu0 0.0
        %771 = vmatpush1.msra.mxu0 %v762
        %772 = vmatprep.subr.mxu0 0.0
        %773 = vmatpush1.msra.mxu0 %v763
        %774 = vmatprep.subr.mxu0 0.0
        %775 = vmatpush1.msra.mxu0 %v764
        %776 = vmatprep.subr.mxu0 0.0
        %777 = vmatpush1.msra.mxu0 %v765
        %778 = vmatprep.subr.mxu0 0.0
        %779 = vmatpush1.msra.mxu0 %v766
        %780 = vmatprep.subr.mxu0 0.0
        %781 = vmatpush1.msra.mxu0 %v767
        %782 = vmatprep.subr.mxu0 0.0
        %783 = vmatpush1.msra.mxu0 %v768
        %784 = vmatprep.subr.mxu0 0.0
        %785 = vmatpush1.msra.mxu0 %v769
        %786 = vmatprep.subr.mxu0 0.0
        %787 = vmatpush1.msra.mxu0 0.0
        %788 = vmatprep.subr.mxu0 0.0
        %789 = vmatpush1.msra.mxu0 0.0
        %790 = vmatprep.subr.mxu0 0.0
        %791 = vmatpush1.msra.mxu0 0.0
        %792 = vmatprep.subr.mxu0 0.0
        %793 = vmatpush1.msra.mxu0 0.0
        %794 = vmatprep.subr.mxu0 0.0
        %795 = vmatpush1.msra.mxu0 0.0
        %796 = vmatprep.subr.mxu0 0.0
        %797 = vmatpush1.msra.mxu0 0.0
        %798 = vmatprep.subr.mxu0 0.0
        %799 = vmatpush1.msra.mxu0 0.0
        %800 = vmatprep.subr.mxu0 0.0
        %801 = vmatpush1.msra.mxu0 0.0
        %802 = vmatprep.subr.mxu0 0.0
        %803 = vmatpush1.msra.mxu0 0.0
        %804 = vmatprep.subr.mxu0 0.0
        %805 = vmatpush1.msra.mxu0 0.0
        %806 = vmatprep.subr.mxu0 0.0
        %807 = vmatpush1.msra.mxu0 0.0
        %808 = vmatprep.subr.mxu0 0.0
        %809 = vmatpush1.msra.mxu0 0.0
        %810 = vmatprep.subr.mxu0 0.0
        %811 = vmatpush1.msra.mxu0 0.0
        %812 = vmatprep.subr.mxu0 0.0
        %813 = vmatpush1.msra.mxu0 0.0
        %814 = vmatprep.subr.mxu0 0.0
        %815 = vmatpush1.msra.mxu0 0.0
        %816 = vmatprep.subr.mxu0 0.0
        %817 = vmatpush1.msra.mxu0 0.0
        %818 = vmatprep.subr.mxu0 0.0
        %819 = vmatpush1.msra.mxu0 0.0
        %820 = vmatprep.subr.mxu0 0.0
        %821 = vmatpush1.msra.mxu0 0.0
        %822 = vmatprep.subr.mxu0 0.0
        %823 = vmatpush1.msra.mxu0 0.0
        %824 = vmatprep.subr.mxu0 0.0
        %825 = vmatpush1.msra.mxu0 0.0
        %826 = vmatprep.subr.mxu0 0.0
        %827 = vmatpush1.msra.mxu0 0.0
        %828 = vmatprep.subr.mxu0 0.0
        %829 = vmatpush1.msra.mxu0 0.0
        %830 = vmatprep.subr.mxu0 0.0
        %831 = vmatpush1.msra.mxu0 0.0
        %832 = vmatprep.subr.mxu0 0.0
        %833 = vmatpush1.msra.mxu0 0.0
        %834 = vmatprep.mubr.f32.mxu0 0.0
        %835 = vmatmul.mubr.f32.gmra.mrb[0].mxu0 %v634
        %v836 = vpop.f32.mrb[0].mxu0
        %v837 = vadd.f32 0.0, %v836
        %v838 = vpop.f32.mrb[0].mxu0
        %839 = vmatprep.mubr.f32.mxu0 0.0
        %840 = vmatmul.mubr.f32.gmra.mrb[0].mxu0 %v637
        %v841 = vpop.f32.mrb[0].mxu0
        %v842 = vadd.f32 0.0, %v841
        %v843 = vpop.f32.mrb[0].mxu0
        %844 = vmatprep.mubr.f32.mxu0 0.0
        %845 = vmatmul.mubr.f32.gmra.mrb[0].mxu0 %v640
        %v846 = vpop.f32.mrb[0].mxu0
        %v847 = vadd.f32 0.0, %v846
        %v848 = vpop.f32.mrb[0].mxu0
        %849 = vmatprep.mubr.f32.mxu0 0.0
        %850 = vmatmul.mubr.f32.gmra.mrb[0].mxu0 %v643
        %v851 = vpop.f32.mrb[0].mxu0
        %v852 = vadd.f32 0.0, %v851
        %v853 = vpop.f32.mrb[0].mxu0
        %854 = vmatprep.mubr.f32.mxu0 0.0
        %855 = vmatmul.mubr.f32.gmra.mrb[0].mxu0 %v646
        %v856 = vpop.f32.mrb[0].mxu0
        %v857 = vadd.f32 0.0, %v856
        %v858 = vpop.f32.mrb[0].mxu0
        %859 = vmatprep.mubr.f32.mxu0 0.0
        %860 = vmatmul.mubr.f32.gmra.mrb[0].mxu0 %v649
        %v861 = vpop.f32.mrb[0].mxu0
        %v862 = vadd.f32 0.0, %v861
        %v863 = vpop.f32.mrb[0].mxu0
        %864 = vmatprep.mubr.f32.mxu0 0.0
        %865 = vmatmul.mubr.f32.gmra.mrb[0].mxu0 %v652
        %v866 = vpop.f32.mrb[0].mxu0
        %v867 = vadd.f32 0.0, %v866
        %v868 = vpop.f32.mrb[0].mxu0
        %869 = vmatprep.mubr.f32.mxu0 0.0
        %870 = vmatmul.mubr.f32.gmra.mrb[0].mxu0 %v655
        %v871 = vpop.f32.mrb[0].mxu0
        %v872 = vadd.f32 0.0, %v871
        %v873 = vpop.f32.mrb[0].mxu0
        %874 = vdwg.mxu0
        %v875 = vld [vmem:[%s6] sm:$0x1]
        %vm876 = vcmask 261120
        %v878 = vsel %vm876, %v620, 0
        %v881 = vsel %vm876, %v724, 0
        %v884 = vsel %vm876, %v729, 0
        %886 = vmatprep.subr.mxu0 0.0
        %887 = vmatpush1.xpose.msra.mxu0 %v881
        %888 = vmatprep.subr.mxu0 0.0
        %889 = vmatpush1.xpose.msra.mxu0 %v884
        %890 = vmatprep.subr.mxu0 0.0
        %891 = vmatpush1.xpose.msra.mxu0 0.0
        %892 = vmatprep.subr.mxu0 0.0
        %893 = vmatpush1.xpose.msra.mxu0 0.0
        %894 = vmatprep.subr.mxu0 0.0
        %895 = vmatpush1.xpose.msra.mxu0 0.0
        %896 = vmatprep.subr.mxu0 0.0
        %897 = vmatpush1.xpose.msra.mxu0 0.0
        %898 = vmatprep.subr.mxu0 0.0
        %899 = vmatpush1.xpose.msra.mxu0 0.0
        %900 = vmatprep.subr.mxu0 0.0
        %901 = vmatpush1.xpose.msra.mxu0 0.0
        %902 = vmatprep.subr.mxu0 0.0
        %903 = vmatpush1.xpose.msra.mxu0 0.0
        %904 = vmatprep.subr.mxu0 0.0
        %905 = vmatpush1.xpose.msra.mxu0 0.0
        %906 = vmatprep.subr.mxu0 0.0
        %907 = vmatpush1.xpose.msra.mxu0 0.0
        %908 = vmatprep.subr.mxu0 0.0
        %909 = vmatpush1.xpose.msra.mxu0 0.0
        %910 = vmatprep.subr.mxu0 0.0
        %911 = vmatpush1.xpose.msra.mxu0 0.0
        %912 = vmatprep.subr.mxu0 0.0
        %913 = vmatpush1.xpose.msra.mxu0 0.0
        %914 = vmatprep.subr.mxu0 0.0
        %915 = vmatpush1.xpose.msra.mxu0 0.0
        %916 = vmatprep.subr.mxu0 0.0
        %917 = vmatpush1.xpose.msra.mxu0 0.0
        %918 = vmatprep.subr.mxu0 0.0
        %919 = vmatpush1.xpose.msra.mxu0 0.0
        %920 = vmatprep.subr.mxu0 0.0
        %921 = vmatpush1.xpose.msra.mxu0 0.0
        %922 = vmatprep.subr.mxu0 0.0
        %923 = vmatpush1.xpose.msra.mxu0 0.0
        %924 = vmatprep.subr.mxu0 0.0
        %925 = vmatpush1.xpose.msra.mxu0 0.0
        %926 = vmatprep.subr.mxu0 0.0
        %927 = vmatpush1.xpose.msra.mxu0 0.0
        %928 = vmatprep.subr.mxu0 0.0
        %929 = vmatpush1.xpose.msra.mxu0 0.0
        %930 = vmatprep.subr.mxu0 0.0
        %931 = vmatpush1.xpose.msra.mxu0 0.0
        %932 = vmatprep.subr.mxu0 0.0
        %933 = vmatpush1.xpose.msra.mxu0 0.0
        %934 = vmatprep.subr.mxu0 0.0
        %935 = vmatpush1.xpose.msra.mxu0 0.0
        %936 = vmatprep.subr.mxu0 0.0
        %937 = vmatpush1.xpose.msra.mxu0 0.0
        %938 = vmatprep.subr.mxu0 0.0
        %939 = vmatpush1.xpose.msra.mxu0 0.0
        %940 = vmatprep.subr.mxu0 0.0
        %941 = vmatpush1.xpose.msra.mxu0 0.0
        %942 = vmatprep.subr.mxu0 0.0
        %943 = vmatpush1.xpose.msra.mxu0 0.0
        %944 = vmatprep.subr.mxu0 0.0
        %945 = vmatpush1.xpose.msra.mxu0 0.0
        %946 = vmatprep.subr.mxu0 0.0
        %947 = vmatpush1.xpose.msra.mxu0 0.0
        %948 = vmatprep.subr.mxu0 0.0
        %949 = vmatpush1.xpose.msra.mxu0 0.0
        %950 = vmatprep.mubr.f32.mxu0 0.0
        %951 = vmatmul.mubr.f32.gmra.mrb[0].mxu0 %v878
        %v952 = vpop.f32.mrb[0].mxu0
        %v953 = vadd.f32 0.0, %v952
        %v954 = vpop.f32.mrb[0].mxu0
        %955 = vdwg.mxu0
        %v957 = vsel %vm876, %v621, 0
        %v960 = vsel %vm876, %v734, 0
        %v963 = vsel %vm876, %v739, 0
        %965 = vmatprep.subr.mxu0 0.0
        %966 = vmatpush1.xpose.msra.mxu0 %v960
        %967 = vmatprep.subr.mxu0 0.0
        %968 = vmatpush1.xpose.msra.mxu0 %v963
        %969 = vmatprep.subr.mxu0 0.0
        %970 = vmatpush1.xpose.msra.mxu0 0.0
        %971 = vmatprep.subr.mxu0 0.0
        %972 = vmatpush1.xpose.msra.mxu0 0.0
        %973 = vmatprep.subr.mxu0 0.0
        %974 = vmatpush1.xpose.msra.mxu0 0.0
        %975 = vmatprep.subr.mxu0 0.0
        %976 = vmatpush1.xpose.msra.mxu0 0.0
        %977 = vmatprep.subr.mxu0 0.0
        %978 = vmatpush1.xpose.msra.mxu0 0.0
        %979 = vmatprep.subr.mxu0 0.0
        %980 = vmatpush1.xpose.msra.mxu0 0.0
        %981 = vmatprep.subr.mxu0 0.0
        %982 = vmatpush1.xpose.msra.mxu0 0.0
        %983 = vmatprep.subr.mxu0 0.0
        %984 = vmatpush1.xpose.msra.mxu0 0.0
        %985 = vmatprep.subr.mxu0 0.0
        %986 = vmatpush1.xpose.msra.mxu0 0.0
        %987 = vmatprep.subr.mxu0 0.0
        %988 = vmatpush1.xpose.msra.mxu0 0.0
        %989 = vmatprep.subr.mxu0 0.0
        %990 = vmatpush1.xpose.msra.mxu0 0.0
        %991 = vmatprep.subr.mxu0 0.0
        %992 = vmatpush1.xpose.msra.mxu0 0.0
        %993 = vmatprep.subr.mxu0 0.0
        %994 = vmatpush1.xpose.msra.mxu0 0.0
        %995 = vmatprep.subr.mxu0 0.0
        %996 = vmatpush1.xpose.msra.mxu0 0.0
        %997 = vmatprep.subr.mxu0 0.0
        %998 = vmatpush1.xpose.msra.mxu0 0.0
        %999 = vmatprep.subr.mxu0 0.0
        %1000 = vmatpush1.xpose.msra.mxu0 0.0
        %1001 = vmatprep.subr.mxu0 0.0
        %1002 = vmatpush1.xpose.msra.mxu0 0.0
        %1003 = vmatprep.subr.mxu0 0.0
        %1004 = vmatpush1.xpose.msra.mxu0 0.0
        %1005 = vmatprep.subr.mxu0 0.0
        %1006 = vmatpush1.xpose.msra.mxu0 0.0
        %1007 = vmatprep.subr.mxu0 0.0
        %1008 = vmatpush1.xpose.msra.mxu0 0.0
        %1009 = vmatprep.subr.mxu0 0.0
        %1010 = vmatpush1.xpose.msra.mxu0 0.0
        %1011 = vmatprep.subr.mxu0 0.0
        %1012 = vmatpush1.xpose.msra.mxu0 0.0
        %1013 = vmatprep.subr.mxu0 0.0
        %1014 = vmatpush1.xpose.msra.mxu0 0.0
        %1015 = vmatprep.subr.mxu0 0.0
        %1016 = vmatpush1.xpose.msra.mxu0 0.0
        %1017 = vmatprep.subr.mxu0 0.0
        %1018 = vmatpush1.xpose.msra.mxu0 0.0
        %1019 = vmatprep.subr.mxu0 0.0
        %1020 = vmatpush1.xpose.msra.mxu0 0.0
        %1021 = vmatprep.subr.mxu0 0.0
        %1022 = vmatpush1.xpose.msra.mxu0 0.0
        %1023 = vmatprep.subr.mxu0 0.0
        %1024 = vmatpush1.xpose.msra.mxu0 0.0
        %1025 = vmatprep.subr.mxu0 0.0
        %1026 = vmatpush1.xpose.msra.mxu0 0.0
        %1027 = vmatprep.subr.mxu0 0.0
        %1028 = vmatpush1.xpose.msra.mxu0 0.0
        %1029 = vmatprep.mubr.f32.mxu0 0.0
        %1030 = vmatmul.mubr.f32.gmra.mrb[0].mxu0 %v957
        %v1031 = vpop.f32.mrb[0].mxu0
        %v1032 = vadd.f32 0.0, %v1031
        %v1033 = vpop.f32.mrb[0].mxu0
        %1034 = vdwg.mxu0
        %v1036 = vsel %vm876, %v622, 0
        %v1039 = vsel %vm876, %v744, 0
        %v1042 = vsel %vm876, %v749, 0
        %1044 = vmatprep.subr.mxu0 0.0
        %1045 = vmatpush1.xpose.msra.mxu0 %v1039
        %1046 = vmatprep.subr.mxu0 0.0
        %1047 = vmatpush1.xpose.msra.mxu0 %v1042
        %1048 = vmatprep.subr.mxu0 0.0
        %1049 = vmatpush1.xpose.msra.mxu0 0.0
        %1050 = vmatprep.subr.mxu0 0.0
        %1051 = vmatpush1.xpose.msra.mxu0 0.0
        %1052 = vmatprep.subr.mxu0 0.0
        %1053 = vmatpush1.xpose.msra.mxu0 0.0
        %1054 = vmatprep.subr.mxu0 0.0
        %1055 = vmatpush1.xpose.msra.mxu0 0.0
        %1056 = vmatprep.subr.mxu0 0.0
        %1057 = vmatpush1.xpose.msra.mxu0 0.0
        %1058 = vmatprep.subr.mxu0 0.0
        %1059 = vmatpush1.xpose.msra.mxu0 0.0
        %1060 = vmatprep.subr.mxu0 0.0
        %1061 = vmatpush1.xpose.msra.mxu0 0.0
        %1062 = vmatprep.subr.mxu0 0.0
        %1063 = vmatpush1.xpose.msra.mxu0 0.0
        %1064 = vmatprep.subr.mxu0 0.0
        %1065 = vmatpush1.xpose.msra.mxu0 0.0
        %1066 = vmatprep.subr.mxu0 0.0
        %1067 = vmatpush1.xpose.msra.mxu0 0.0
        %1068 = vmatprep.subr.mxu0 0.0
        %1069 = vmatpush1.xpose.msra.mxu0 0.0
        %1070 = vmatprep.subr.mxu0 0.0
        %1071 = vmatpush1.xpose.msra.mxu0 0.0
        %1072 = vmatprep.subr.mxu0 0.0
        %1073 = vmatpush1.xpose.msra.mxu0 0.0
        %1074 = vmatprep.subr.mxu0 0.0
        %1075 = vmatpush1.xpose.msra.mxu0 0.0
        %1076 = vmatprep.subr.mxu0 0.0
        %1077 = vmatpush1.xpose.msra.mxu0 0.0
        %1078 = vmatprep.subr.mxu0 0.0
        %1079 = vmatpush1.xpose.msra.mxu0 0.0
        %1080 = vmatprep.subr.mxu0 0.0
        %1081 = vmatpush1.xpose.msra.mxu0 0.0
        %1082 = vmatprep.subr.mxu0 0.0
        %1083 = vmatpush1.xpose.msra.mxu0 0.0
        %1084 = vmatprep.subr.mxu0 0.0
        %1085 = vmatpush1.xpose.msra.mxu0 0.0
        %1086 = vmatprep.subr.mxu0 0.0
        %1087 = vmatpush1.xpose.msra.mxu0 0.0
        %1088 = vmatprep.subr.mxu0 0.0
        %1089 = vmatpush1.xpose.msra.mxu0 0.0
        %1090 = vmatprep.subr.mxu0 0.0
        %1091 = vmatpush1.xpose.msra.mxu0 0.0
        %1092 = vmatprep.subr.mxu0 0.0
        %1093 = vmatpush1.xpose.msra.mxu0 0.0
        %1094 = vmatprep.subr.mxu0 0.0
        %1095 = vmatpush1.xpose.msra.mxu0 0.0
        %1096 = vmatprep.subr.mxu0 0.0
        %1097 = vmatpush1.xpose.msra.mxu0 0.0
        %1098 = vmatprep.subr.mxu0 0.0
        %1099 = vmatpush1.xpose.msra.mxu0 0.0
        %1100 = vmatprep.subr.mxu0 0.0
        %1101 = vmatpush1.xpose.msra.mxu0 0.0
        %1102 = vmatprep.subr.mxu0 0.0
        %1103 = vmatpush1.xpose.msra.mxu0 0.0
        %1104 = vmatprep.subr.mxu0 0.0
        %1105 = vmatpush1.xpose.msra.mxu0 0.0
        %1106 = vmatprep.subr.mxu0 0.0
        %1107 = vmatpush1.xpose.msra.mxu0 0.0
        %1108 = vmatprep.mubr.f32.mxu0 0.0
        %1109 = vmatmul.mubr.f32.gmra.mrb[0].mxu0 %v1036
        %v1110 = vpop.f32.mrb[0].mxu0
        %v1111 = vadd.f32 0.0, %v1110
        %v1112 = vpop.f32.mrb[0].mxu0
        %1113 = vdwg.mxu0
        %v1115 = vsel %vm876, %v623, 0
        %v1118 = vsel %vm876, %v754, 0
        %v1121 = vsel %vm876, %v759, 0
        %1123 = vmatprep.subr.mxu0 0.0
        %1124 = vmatpush1.xpose.msra.mxu0 %v1118
        %1125 = vmatprep.subr.mxu0 0.0
        %1126 = vmatpush1.xpose.msra.mxu0 %v1121
        %1127 = vmatprep.subr.mxu0 0.0
        %1128 = vmatpush1.xpose.msra.mxu0 0.0
        %1129 = vmatprep.subr.mxu0 0.0
        %1130 = vmatpush1.xpose.msra.mxu0 0.0
        %1131 = vmatprep.subr.mxu0 0.0
        %1132 = vmatpush1.xpose.msra.mxu0 0.0
        %1133 = vmatprep.subr.mxu0 0.0
        %1134 = vmatpush1.xpose.msra.mxu0 0.0
        %1135 = vmatprep.subr.mxu0 0.0
        %1136 = vmatpush1.xpose.msra.mxu0 0.0
        %1137 = vmatprep.subr.mxu0 0.0
        %1138 = vmatpush1.xpose.msra.mxu0 0.0
        %1139 = vmatprep.subr.mxu0 0.0
        %1140 = vmatpush1.xpose.msra.mxu0 0.0
        %1141 = vmatprep.subr.mxu0 0.0
        %1142 = vmatpush1.xpose.msra.mxu0 0.0
        %1143 = vmatprep.subr.mxu0 0.0
        %1144 = vmatpush1.xpose.msra.mxu0 0.0
        %1145 = vmatprep.subr.mxu0 0.0
        %1146 = vmatpush1.xpose.msra.mxu0 0.0
        %1147 = vmatprep.subr.mxu0 0.0
        %1148 = vmatpush1.xpose.msra.mxu0 0.0
        %1149 = vmatprep.subr.mxu0 0.0
        %1150 = vmatpush1.xpose.msra.mxu0 0.0
        %1151 = vmatprep.subr.mxu0 0.0
        %1152 = vmatpush1.xpose.msra.mxu0 0.0
        %1153 = vmatprep.subr.mxu0 0.0
        %1154 = vmatpush1.xpose.msra.mxu0 0.0
        %1155 = vmatprep.subr.mxu0 0.0
        %1156 = vmatpush1.xpose.msra.mxu0 0.0
        %1157 = vmatprep.subr.mxu0 0.0
        %1158 = vmatpush1.xpose.msra.mxu0 0.0
        %1159 = vmatprep.subr.mxu0 0.0
        %1160 = vmatpush1.xpose.msra.mxu0 0.0
        %1161 = vmatprep.subr.mxu0 0.0
        %1162 = vmatpush1.xpose.msra.mxu0 0.0
        %1163 = vmatprep.subr.mxu0 0.0
        %1164 = vmatpush1.xpose.msra.mxu0 0.0
        %1165 = vmatprep.subr.mxu0 0.0
        %1166 = vmatpush1.xpose.msra.mxu0 0.0
        %1167 = vmatprep.subr.mxu0 0.0
        %1168 = vmatpush1.xpose.msra.mxu0 0.0
        %1169 = vmatprep.subr.mxu0 0.0
        %1170 = vmatpush1.xpose.msra.mxu0 0.0
        %1171 = vmatprep.subr.mxu0 0.0
        %1172 = vmatpush1.xpose.msra.mxu0 0.0
        %1173 = vmatprep.subr.mxu0 0.0
        %1174 = vmatpush1.xpose.msra.mxu0 0.0
        %1175 = vmatprep.subr.mxu0 0.0
        %1176 = vmatpush1.xpose.msra.mxu0 0.0
        %1177 = vmatprep.subr.mxu0 0.0
        %1178 = vmatpush1.xpose.msra.mxu0 0.0
        %1179 = vmatprep.subr.mxu0 0.0
        %1180 = vmatpush1.xpose.msra.mxu0 0.0
        %1181 = vmatprep.subr.mxu0 0.0
        %1182 = vmatpush1.xpose.msra.mxu0 0.0
        %1183 = vmatprep.subr.mxu0 0.0
        %1184 = vmatpush1.xpose.msra.mxu0 0.0
        %1185 = vmatprep.subr.mxu0 0.0
        %1186 = vmatpush1.xpose.msra.mxu0 0.0
        %1187 = vmatprep.mubr.f32.mxu0 0.0
        %1188 = vmatmul.mubr.f32.gmra.mrb[0].mxu0 %v1115
        %v1189 = vpop.f32.mrb[0].mxu0
        %v1190 = vadd.f32 0.0, %v1189
        %v1191 = vpop.f32.mrb[0].mxu0
        %1192 = vdwg.mxu0
        %v1193 = vlaneseq
        %v1194 = vshrl.u32 %v1193, 7
        %v1195 = vsub.s32 0, %v1194
        %v1196 = vrot.slane %v875, %v1195
        %v1197 = vmul.f32 %v620, %v1196
        %v1198 = vmul.f32 %v621, %v1196
        %v1199 = vmul.f32 %v622, %v1196
        %v1200 = vmul.f32 %v623, %v1196
        %v1201 = vsel %vm876, %v1197, 0.0
        %1202 = vadd.xlane.f32.xlu0 %v1201
        %v1203 = vpop.xlane.xlu0 %1202
        %v1204 = vsel %vm876, %v1198, 0.0
        %1205 = vadd.xlane.f32.xlu0 %v1204
        %v1206 = vpop.xlane.xlu0 %1205
        %v1207 = vsel %vm876, %v1199, 0.0
        %1208 = vadd.xlane.f32.xlu0 %v1207
        %v1209 = vpop.xlane.xlu0 %1208
        %v1210 = vsel %vm876, %v1200, 0.0
        %1211 = vadd.xlane.f32.xlu0 %v1210
        %v1212 = vpop.xlane.xlu0 %1211
        %vm1213 = vcmask 130048
        %v1214 = vsel %vm1213, %v953, -inf
        %1215 = vmax.xlane.f32.xlu0 %v1214
        %v1216 = vpop.xlane.xlu0 %1215
        %v1217 = vsel %vm1213, %v1032, -inf
        %1218 = vmax.xlane.f32.xlu0 %v1217
        %v1219 = vpop.xlane.xlu0 %1218
        %v1220 = vsel %vm1213, %v1111, -inf
        %1221 = vmax.xlane.f32.xlu0 %v1220
        %v1222 = vpop.xlane.xlu0 %1221
        %v1223 = vsel %vm1213, %v1190, -inf
        %1224 = vmax.xlane.f32.xlu0 %v1223
        %v1225 = vpop.xlane.xlu0 %1224
        %v1226 = vmax.f32 %v1216, %v1203
        %v1227 = vmax.f32 %v1219, %v1206
        %v1228 = vmax.f32 %v1222, %v1209
        %v1229 = vmax.f32 %v1225, %v1212
        %v1230 = vsub.f32 %v953, %v1226
        %v1231 = vsub.f32 %v1032, %v1227
        %v1232 = vsub.f32 %v1111, %v1228
        %v1233 = vsub.f32 %v1190, %v1229
        %v1234 = vmul.f32 %v1230, 1.442695
        %v1235 = vpow.pop %v1234
        %v1236 = vmul.f32 %v1231, 1.442695
        %v1237 = vpow.pop %v1236
        %v1238 = vmul.f32 %v1232, 1.442695
        %v1239 = vpow.pop %v1238
        %v1240 = vmul.f32 %v1233, 1.442695
        %v1241 = vpow.pop %v1240
        %v1242 = vsub.f32 %v1203, %v1226
        %v1243 = vsub.f32 %v1206, %v1227
        %v1244 = vsub.f32 %v1209, %v1228
        %v1245 = vsub.f32 %v1212, %v1229
        %v1246 = vmul.f32 %v1242, 1.442695
        %v1247 = vpow.pop %v1246
        %v1248 = vmul.f32 %v1243, 1.442695
        %v1249 = vpow.pop %v1248
        %v1250 = vmul.f32 %v1244, 1.442695
        %v1251 = vpow.pop %v1250
        %v1252 = vmul.f32 %v1245, 1.442695
        %v1253 = vpow.pop %v1252
        %v1254 = vsel %vm1213, %v1235, 0.0
        %1255 = vadd.xlane.f32.xlu0 %v1254
        %v1256 = vpop.xlane.xlu0 %1255
        %v1257 = vsel %vm1213, %v1237, 0.0
        %1258 = vadd.xlane.f32.xlu0 %v1257
        %v1259 = vpop.xlane.xlu0 %1258
        %v1260 = vsel %vm1213, %v1239, 0.0
        %1261 = vadd.xlane.f32.xlu0 %v1260
        %v1262 = vpop.xlane.xlu0 %1261
        %v1263 = vsel %vm1213, %v1241, 0.0
        %1264 = vadd.xlane.f32.xlu0 %v1263
        %v1265 = vpop.xlane.xlu0 %1264
        %v1266 = vadd.f32 %v1256, %v1247
        %v1267 = vadd.f32 %v1259, %v1249
        %v1268 = vadd.f32 %v1262, %v1251
        %v1269 = vadd.f32 %v1265, %v1253
        %v1270 = vrcp.pop %v1266
        %v1271 = vmul.f32 1.0, %v1270
        %v1272 = vrcp.pop %v1267
        %v1273 = vmul.f32 1.0, %v1272
        %v1274 = vrcp.pop %v1268
        %v1275 = vmul.f32 1.0, %v1274
        %v1276 = vrcp.pop %v1269
        %v1277 = vmul.f32 1.0, %v1276
        %v1278 = vmul.f32 %v1235, %v1271
        %v1279 = vmul.f32 %v1237, %v1273
        %v1280 = vmul.f32 %v1239, %v1275
        %v1281 = vmul.f32 %v1241, %v1277
        %v1282 = vmul.f32 %v1247, %v1271
        %v1283 = vmul.f32 %v1249, %v1273
        %v1284 = vmul.f32 %v1251, %v1275
        %v1285 = vmul.f32 %v1253, %v1277
        %v1286 = vld [vmem:[%s6 + $0x1] sm:$0x1]
        %1287 = vrot.lane.b32.xlu0 %v620, 96
        %v1288 = vpop.permute.xlu0 %1287
        %1289 = vrot.lane.b32.xlu0 %v724, 96
        %v1290 = vpop.permute.xlu0 %1289
        %1291 = vrot.lane.b32.xlu0 %v729, 96
        %v1292 = vpop.permute.xlu0 %1291
        %v1293 = vsel %vm876, %v1288, 0
        %v1295 = vsel %vm876, %v1290, 0
        %v1297 = vsel %vm876, %v1292, 0
        %1299 = vmatprep.subr.mxu0 0.0
        %1300 = vmatpush1.xpose.msra.mxu0 %v1295
        %1301 = vmatprep.subr.mxu0 0.0
        %1302 = vmatpush1.xpose.msra.mxu0 %v1297
        %1303 = vmatprep.subr.mxu0 0.0
        %1304 = vmatpush1.xpose.msra.mxu0 0.0
        %1305 = vmatprep.subr.mxu0 0.0
        %1306 = vmatpush1.xpose.msra.mxu0 0.0
        %1307 = vmatprep.subr.mxu0 0.0
        %1308 = vmatpush1.xpose.msra.mxu0 0.0
        %1309 = vmatprep.subr.mxu0 0.0
        %1310 = vmatpush1.xpose.msra.mxu0 0.0
        %1311 = vmatprep.subr.mxu0 0.0
        %1312 = vmatpush1.xpose.msra.mxu0 0.0
        %1313 = vmatprep.subr.mxu0 0.0
        %1314 = vmatpush1.xpose.msra.mxu0 0.0
        %1315 = vmatprep.subr.mxu0 0.0
        %1316 = vmatpush1.xpose.msra.mxu0 0.0
        %1317 = vmatprep.subr.mxu0 0.0
        %1318 = vmatpush1.xpose.msra.mxu0 0.0
        %1319 = vmatprep.subr.mxu0 0.0
        %1320 = vmatpush1.xpose.msra.mxu0 0.0
        %1321 = vmatprep.subr.mxu0 0.0
        %1322 = vmatpush1.xpose.msra.mxu0 0.0
        %1323 = vmatprep.subr.mxu0 0.0
        %1324 = vmatpush1.xpose.msra.mxu0 0.0
        %1325 = vmatprep.subr.mxu0 0.0
        %1326 = vmatpush1.xpose.msra.mxu0 0.0
        %1327 = vmatprep.subr.mxu0 0.0
        %1328 = vmatpush1.xpose.msra.mxu0 0.0
        %1329 = vmatprep.subr.mxu0 0.0
        %1330 = vmatpush1.xpose.msra.mxu0 0.0
        %1331 = vmatprep.subr.mxu0 0.0
        %1332 = vmatpush1.xpose.msra.mxu0 0.0
        %1333 = vmatprep.subr.mxu0 0.0
        %1334 = vmatpush1.xpose.msra.mxu0 0.0
        %1335 = vmatprep.subr.mxu0 0.0
        %1336 = vmatpush1.xpose.msra.mxu0 0.0
        %1337 = vmatprep.subr.mxu0 0.0
        %1338 = vmatpush1.xpose.msra.mxu0 0.0
        %1339 = vmatprep.subr.mxu0 0.0
        %1340 = vmatpush1.xpose.msra.mxu0 0.0
        %1341 = vmatprep.subr.mxu0 0.0
        %1342 = vmatpush1.xpose.msra.mxu0 0.0
        %1343 = vmatprep.subr.mxu0 0.0
        %1344 = vmatpush1.xpose.msra.mxu0 0.0
        %1345 = vmatprep.subr.mxu0 0.0
        %1346 = vmatpush1.xpose.msra.mxu0 0.0
        %1347 = vmatprep.subr.mxu0 0.0
        %1348 = vmatpush1.xpose.msra.mxu0 0.0
        %1349 = vmatprep.subr.mxu0 0.0
        %1350 = vmatpush1.xpose.msra.mxu0 0.0
        %1351 = vmatprep.subr.mxu0 0.0
        %1352 = vmatpush1.xpose.msra.mxu0 0.0
        %1353 = vmatprep.subr.mxu0 0.0
        %1354 = vmatpush1.xpose.msra.mxu0 0.0
        %1355 = vmatprep.subr.mxu0 0.0
        %1356 = vmatpush1.xpose.msra.mxu0 0.0
        %1357 = vmatprep.subr.mxu0 0.0
        %1358 = vmatpush1.xpose.msra.mxu0 0.0
        %1359 = vmatprep.subr.mxu0 0.0
        %1360 = vmatpush1.xpose.msra.mxu0 0.0
        %1361 = vmatprep.subr.mxu0 0.0
        %1362 = vmatpush1.xpose.msra.mxu0 0.0
        %1363 = vmatprep.mubr.f32.mxu0 0.0
        %1364 = vmatmul.mubr.f32.gmra.mrb[0].mxu0 %v1293
        %v1365 = vpop.f32.mrb[0].mxu0
        %v1366 = vadd.f32 0.0, %v1365
        %v1367 = vpop.f32.mrb[0].mxu0
        %1368 = vdwg.mxu0
        %1369 = vrot.lane.b32.xlu0 %v621, 96
        %v1370 = vpop.permute.xlu0 %1369
        %1371 = vrot.lane.b32.xlu0 %v734, 96
        %v1372 = vpop.permute.xlu0 %1371
        %1373 = vrot.lane.b32.xlu0 %v739, 96
        %v1374 = vpop.permute.xlu0 %1373
        %v1375 = vsel %vm876, %v1370, 0
        %v1377 = vsel %vm876, %v1372, 0
        %v1379 = vsel %vm876, %v1374, 0
        %1381 = vmatprep.subr.mxu0 0.0
        %1382 = vmatpush1.xpose.msra.mxu0 %v1377
        %1383 = vmatprep.subr.mxu0 0.0
        %1384 = vmatpush1.xpose.msra.mxu0 %v1379
        %1385 = vmatprep.subr.mxu0 0.0
        %1386 = vmatpush1.xpose.msra.mxu0 0.0
        %1387 = vmatprep.subr.mxu0 0.0
        %1388 = vmatpush1.xpose.msra.mxu0 0.0
        %1389 = vmatprep.subr.mxu0 0.0
        %1390 = vmatpush1.xpose.msra.mxu0 0.0
        %1391 = vmatprep.subr.mxu0 0.0
        %1392 = vmatpush1.xpose.msra.mxu0 0.0
        %1393 = vmatprep.subr.mxu0 0.0
        %1394 = vmatpush1.xpose.msra.mxu0 0.0
        %1395 = vmatprep.subr.mxu0 0.0
        %1396 = vmatpush1.xpose.msra.mxu0 0.0
        %1397 = vmatprep.subr.mxu0 0.0
        %1398 = vmatpush1.xpose.msra.mxu0 0.0
        %1399 = vmatprep.subr.mxu0 0.0
        %1400 = vmatpush1.xpose.msra.mxu0 0.0
        %1401 = vmatprep.subr.mxu0 0.0
        %1402 = vmatpush1.xpose.msra.mxu0 0.0
        %1403 = vmatprep.subr.mxu0 0.0
        %1404 = vmatpush1.xpose.msra.mxu0 0.0
        %1405 = vmatprep.subr.mxu0 0.0
        %1406 = vmatpush1.xpose.msra.mxu0 0.0
        %1407 = vmatprep.subr.mxu0 0.0
        %1408 = vmatpush1.xpose.msra.mxu0 0.0
        %1409 = vmatprep.subr.mxu0 0.0
        %1410 = vmatpush1.xpose.msra.mxu0 0.0
        %1411 = vmatprep.subr.mxu0 0.0
        %1412 = vmatpush1.xpose.msra.mxu0 0.0
        %1413 = vmatprep.subr.mxu0 0.0
        %1414 = vmatpush1.xpose.msra.mxu0 0.0
        %1415 = vmatprep.subr.mxu0 0.0
        %1416 = vmatpush1.xpose.msra.mxu0 0.0
        %1417 = vmatprep.subr.mxu0 0.0
        %1418 = vmatpush1.xpose.msra.mxu0 0.0
        %1419 = vmatprep.subr.mxu0 0.0
        %1420 = vmatpush1.xpose.msra.mxu0 0.0
        %1421 = vmatprep.subr.mxu0 0.0
        %1422 = vmatpush1.xpose.msra.mxu0 0.0
        %1423 = vmatprep.subr.mxu0 0.0
        %1424 = vmatpush1.xpose.msra.mxu0 0.0
        %1425 = vmatprep.subr.mxu0 0.0
        %1426 = vmatpush1.xpose.msra.mxu0 0.0
        %1427 = vmatprep.subr.mxu0 0.0
        %1428 = vmatpush1.xpose.msra.mxu0 0.0
        %1429 = vmatprep.subr.mxu0 0.0
        %1430 = vmatpush1.xpose.msra.mxu0 0.0
        %1431 = vmatprep.subr.mxu0 0.0
        %1432 = vmatpush1.xpose.msra.mxu0 0.0
        %1433 = vmatprep.subr.mxu0 0.0
        %1434 = vmatpush1.xpose.msra.mxu0 0.0
        %1435 = vmatprep.subr.mxu0 0.0
        %1436 = vmatpush1.xpose.msra.mxu0 0.0
        %1437 = vmatprep.subr.mxu0 0.0
        %1438 = vmatpush1.xpose.msra.mxu0 0.0
        %1439 = vmatprep.subr.mxu0 0.0
        %1440 = vmatpush1.xpose.msra.mxu0 0.0
        %1441 = vmatprep.subr.mxu0 0.0
        %1442 = vmatpush1.xpose.msra.mxu0 0.0
        %1443 = vmatprep.subr.mxu0 0.0
        %1444 = vmatpush1.xpose.msra.mxu0 0.0
        %1445 = vmatprep.mubr.f32.mxu0 0.0
        %1446 = vmatmul.mubr.f32.gmra.mrb[0].mxu0 %v1375
        %v1447 = vpop.f32.mrb[0].mxu0
        %v1448 = vadd.f32 0.0, %v1447
        %v1449 = vpop.f32.mrb[0].mxu0
        %1450 = vdwg.mxu0
        %1451 = vrot.lane.b32.xlu0 %v622, 96
        %v1452 = vpop.permute.xlu0 %1451
        %1453 = vrot.lane.b32.xlu0 %v744, 96
        %v1454 = vpop.permute.xlu0 %1453
        %1455 = vrot.lane.b32.xlu0 %v749, 96
        %v1456 = vpop.permute.xlu0 %1455
        %v1457 = vsel %vm876, %v1452, 0
        %v1459 = vsel %vm876, %v1454, 0
        %v1461 = vsel %vm876, %v1456, 0
        %1463 = vmatprep.subr.mxu0 0.0
        %1464 = vmatpush1.xpose.msra.mxu0 %v1459
        %1465 = vmatprep.subr.mxu0 0.0
        %1466 = vmatpush1.xpose.msra.mxu0 %v1461
        %1467 = vmatprep.subr.mxu0 0.0
        %1468 = vmatpush1.xpose.msra.mxu0 0.0
        %1469 = vmatprep.subr.mxu0 0.0
        %1470 = vmatpush1.xpose.msra.mxu0 0.0
        %1471 = vmatprep.subr.mxu0 0.0
        %1472 = vmatpush1.xpose.msra.mxu0 0.0
        %1473 = vmatprep.subr.mxu0 0.0
        %1474 = vmatpush1.xpose.msra.mxu0 0.0
        %1475 = vmatprep.subr.mxu0 0.0
        %1476 = vmatpush1.xpose.msra.mxu0 0.0
        %1477 = vmatprep.subr.mxu0 0.0
        %1478 = vmatpush1.xpose.msra.mxu0 0.0
        %1479 = vmatprep.subr.mxu0 0.0
        %1480 = vmatpush1.xpose.msra.mxu0 0.0
        %1481 = vmatprep.subr.mxu0 0.0
        %1482 = vmatpush1.xpose.msra.mxu0 0.0
        %1483 = vmatprep.subr.mxu0 0.0
        %1484 = vmatpush1.xpose.msra.mxu0 0.0
        %1485 = vmatprep.subr.mxu0 0.0
        %1486 = vmatpush1.xpose.msra.mxu0 0.0
        %1487 = vmatprep.subr.mxu0 0.0
        %1488 = vmatpush1.xpose.msra.mxu0 0.0
        %1489 = vmatprep.subr.mxu0 0.0
        %1490 = vmatpush1.xpose.msra.mxu0 0.0
        %1491 = vmatprep.subr.mxu0 0.0
        %1492 = vmatpush1.xpose.msra.mxu0 0.0
        %1493 = vmatprep.subr.mxu0 0.0
        %1494 = vmatpush1.xpose.msra.mxu0 0.0
        %1495 = vmatprep.subr.mxu0 0.0
        %1496 = vmatpush1.xpose.msra.mxu0 0.0
        %1497 = vmatprep.subr.mxu0 0.0
        %1498 = vmatpush1.xpose.msra.mxu0 0.0
        %1499 = vmatprep.subr.mxu0 0.0
        %1500 = vmatpush1.xpose.msra.mxu0 0.0
        %1501 = vmatprep.subr.mxu0 0.0
        %1502 = vmatpush1.xpose.msra.mxu0 0.0
        %1503 = vmatprep.subr.mxu0 0.0
        %1504 = vmatpush1.xpose.msra.mxu0 0.0
        %1505 = vmatprep.subr.mxu0 0.0
        %1506 = vmatpush1.xpose.msra.mxu0 0.0
        %1507 = vmatprep.subr.mxu0 0.0
        %1508 = vmatpush1.xpose.msra.mxu0 0.0
        %1509 = vmatprep.subr.mxu0 0.0
        %1510 = vmatpush1.xpose.msra.mxu0 0.0
        %1511 = vmatprep.subr.mxu0 0.0
        %1512 = vmatpush1.xpose.msra.mxu0 0.0
        %1513 = vmatprep.subr.mxu0 0.0
        %1514 = vmatpush1.xpose.msra.mxu0 0.0
        %1515 = vmatprep.subr.mxu0 0.0
        %1516 = vmatpush1.xpose.msra.mxu0 0.0
        %1517 = vmatprep.subr.mxu0 0.0
        %1518 = vmatpush1.xpose.msra.mxu0 0.0
        %1519 = vmatprep.subr.mxu0 0.0
        %1520 = vmatpush1.xpose.msra.mxu0 0.0
        %1521 = vmatprep.subr.mxu0 0.0
        %1522 = vmatpush1.xpose.msra.mxu0 0.0
        %1523 = vmatprep.subr.mxu0 0.0
        %1524 = vmatpush1.xpose.msra.mxu0 0.0
        %1525 = vmatprep.subr.mxu0 0.0
        %1526 = vmatpush1.xpose.msra.mxu0 0.0
        %1527 = vmatprep.mubr.f32.mxu0 0.0
        %1528 = vmatmul.mubr.f32.gmra.mrb[0].mxu0 %v1457
        %v1529 = vpop.f32.mrb[0].mxu0
        %v1530 = vadd.f32 0.0, %v1529
        %v1531 = vpop.f32.mrb[0].mxu0
        %1532 = vdwg.mxu0
        %1533 = vrot.lane.b32.xlu0 %v623, 96
        %v1534 = vpop.permute.xlu0 %1533
        %1535 = vrot.lane.b32.xlu0 %v754, 96
        %v1536 = vpop.permute.xlu0 %1535
        %1537 = vrot.lane.b32.xlu0 %v759, 96
        %v1538 = vpop.permute.xlu0 %1537
        %v1539 = vsel %vm876, %v1534, 0
        %v1541 = vsel %vm876, %v1536, 0
        %v1543 = vsel %vm876, %v1538, 0
        %1545 = vmatprep.subr.mxu0 0.0
        %1546 = vmatpush1.xpose.msra.mxu0 %v1541
        %1547 = vmatprep.subr.mxu0 0.0
        %1548 = vmatpush1.xpose.msra.mxu0 %v1543
        %1549 = vmatprep.subr.mxu0 0.0
        %1550 = vmatpush1.xpose.msra.mxu0 0.0
        %1551 = vmatprep.subr.mxu0 0.0
        %1552 = vmatpush1.xpose.msra.mxu0 0.0
        %1553 = vmatprep.subr.mxu0 0.0
        %1554 = vmatpush1.xpose.msra.mxu0 0.0
        %1555 = vmatprep.subr.mxu0 0.0
        %1556 = vmatpush1.xpose.msra.mxu0 0.0
        %1557 = vmatprep.subr.mxu0 0.0
        %1558 = vmatpush1.xpose.msra.mxu0 0.0
        %1559 = vmatprep.subr.mxu0 0.0
        %1560 = vmatpush1.xpose.msra.mxu0 0.0
        %1561 = vmatprep.subr.mxu0 0.0
        %1562 = vmatpush1.xpose.msra.mxu0 0.0
        %1563 = vmatprep.subr.mxu0 0.0
        %1564 = vmatpush1.xpose.msra.mxu0 0.0
        %1565 = vmatprep.subr.mxu0 0.0
        %1566 = vmatpush1.xpose.msra.mxu0 0.0
        %1567 = vmatprep.subr.mxu0 0.0
        %1568 = vmatpush1.xpose.msra.mxu0 0.0
        %1569 = vmatprep.subr.mxu0 0.0
        %1570 = vmatpush1.xpose.msra.mxu0 0.0
        %1571 = vmatprep.subr.mxu0 0.0
        %1572 = vmatpush1.xpose.msra.mxu0 0.0
        %1573 = vmatprep.subr.mxu0 0.0
        %1574 = vmatpush1.xpose.msra.mxu0 0.0
        %1575 = vmatprep.subr.mxu0 0.0
        %1576 = vmatpush1.xpose.msra.mxu0 0.0
        %1577 = vmatprep.subr.mxu0 0.0
        %1578 = vmatpush1.xpose.msra.mxu0 0.0
        %1579 = vmatprep.subr.mxu0 0.0
        %1580 = vmatpush1.xpose.msra.mxu0 0.0
        %1581 = vmatprep.subr.mxu0 0.0
        %1582 = vmatpush1.xpose.msra.mxu0 0.0
        %1583 = vmatprep.subr.mxu0 0.0
        %1584 = vmatpush1.xpose.msra.mxu0 0.0
        %1585 = vmatprep.subr.mxu0 0.0
        %1586 = vmatpush1.xpose.msra.mxu0 0.0
        %1587 = vmatprep.subr.mxu0 0.0
        %1588 = vmatpush1.xpose.msra.mxu0 0.0
        %1589 = vmatprep.subr.mxu0 0.0
        %1590 = vmatpush1.xpose.msra.mxu0 0.0
        %1591 = vmatprep.subr.mxu0 0.0
        %1592 = vmatpush1.xpose.msra.mxu0 0.0
        %1593 = vmatprep.subr.mxu0 0.0
        %1594 = vmatpush1.xpose.msra.mxu0 0.0
        %1595 = vmatprep.subr.mxu0 0.0
        %1596 = vmatpush1.xpose.msra.mxu0 0.0
        %1597 = vmatprep.subr.mxu0 0.0
        %1598 = vmatpush1.xpose.msra.mxu0 0.0
        %1599 = vmatprep.subr.mxu0 0.0
        %1600 = vmatpush1.xpose.msra.mxu0 0.0
        %1601 = vmatprep.subr.mxu0 0.0
        %1602 = vmatpush1.xpose.msra.mxu0 0.0
        %1603 = vmatprep.subr.mxu0 0.0
        %1604 = vmatpush1.xpose.msra.mxu0 0.0
        %1605 = vmatprep.subr.mxu0 0.0
        %1606 = vmatpush1.xpose.msra.mxu0 0.0
        %1607 = vmatprep.subr.mxu0 0.0
        %1608 = vmatpush1.xpose.msra.mxu0 0.0
        %1609 = vmatprep.mubr.f32.mxu0 0.0
        %1610 = vmatmul.mubr.f32.gmra.mrb[0].mxu0 %v1539
        %v1611 = vpop.f32.mrb[0].mxu0
        %v1612 = vadd.f32 0.0, %v1611
        %v1613 = vpop.f32.mrb[0].mxu0
        %1614 = vdwg.mxu0
        %v1615 = vlaneseq
        %v1616 = vshrl.u32 %v1615, 7
        %v1617 = vsub.s32 0, %v1616
        %v1618 = vrot.slane %v1286, %v1617
        %1620 = vrot.lane.b32.xlu0 %v1618, 32
        %v1621 = vpop.permute.xlu0 %1620
        %v1623 = vmul.f32 %v620, %v1621
        %v1624 = vmul.f32 %v621, %v1621
        %v1625 = vmul.f32 %v622, %v1621
        %v1626 = vmul.f32 %v623, %v1621
        %1631 = vrot.lane.b32.xlu0 %v1623, 96
        %v1632 = vpop.permute.xlu0 %1631
        %1633 = vrot.lane.b32.xlu0 %v1624, 96
        %v1634 = vpop.permute.xlu0 %1633
        %1635 = vrot.lane.b32.xlu0 %v1625, 96
        %v1636 = vpop.permute.xlu0 %1635
        %1637 = vrot.lane.b32.xlu0 %v1626, 96
        %v1638 = vpop.permute.xlu0 %1637
        %v1643 = vsel %vm876, %v1632, 0.0
        %1644 = vadd.xlane.f32.xlu0 %v1643
        %v1645 = vpop.xlane.xlu0 %1644
        %v1646 = vsel %vm876, %v1634, 0.0
        %1647 = vadd.xlane.f32.xlu0 %v1646
        %v1648 = vpop.xlane.xlu0 %1647
        %v1649 = vsel %vm876, %v1636, 0.0
        %1650 = vadd.xlane.f32.xlu0 %v1649
        %v1651 = vpop.xlane.xlu0 %1650
        %v1652 = vsel %vm876, %v1638, 0.0
        %1653 = vadd.xlane.f32.xlu0 %v1652
        %v1654 = vpop.xlane.xlu0 %1653
        %v1655 = vsel %vm1213, %v1366, -inf
        %1656 = vmax.xlane.f32.xlu0 %v1655
        %v1657 = vpop.xlane.xlu0 %1656
        %v1658 = vsel %vm1213, %v1448, -inf
        %1659 = vmax.xlane.f32.xlu0 %v1658
        %v1660 = vpop.xlane.xlu0 %1659
        %v1661 = vsel %vm1213, %v1530, -inf
        %1662 = vmax.xlane.f32.xlu0 %v1661
        %v1663 = vpop.xlane.xlu0 %1662
        %v1664 = vsel %vm1213, %v1612, -inf
        %1665 = vmax.xlane.f32.xlu0 %v1664
        %v1666 = vpop.xlane.xlu0 %1665
        %v1667 = vmax.f32 %v1657, %v1645
        %v1668 = vmax.f32 %v1660, %v1648
        %v1669 = vmax.f32 %v1663, %v1651
        %v1670 = vmax.f32 %v1666, %v1654
        %v1671 = vsub.f32 %v1366, %v1667
        %v1672 = vsub.f32 %v1448, %v1668
        %v1673 = vsub.f32 %v1530, %v1669
        %v1674 = vsub.f32 %v1612, %v1670
        %v1675 = vmul.f32 %v1671, 1.442695
        %v1676 = vpow.pop %v1675
        %v1677 = vmul.f32 %v1672, 1.442695
        %v1678 = vpow.pop %v1677
        %v1679 = vmul.f32 %v1673, 1.442695
        %v1680 = vpow.pop %v1679
        %v1681 = vmul.f32 %v1674, 1.442695
        %v1682 = vpow.pop %v1681
        %v1683 = vsub.f32 %v1645, %v1667
        %v1684 = vsub.f32 %v1648, %v1668
        %v1685 = vsub.f32 %v1651, %v1669
        %v1686 = vsub.f32 %v1654, %v1670
        %v1687 = vmul.f32 %v1683, 1.442695
        %v1688 = vpow.pop %v1687
        %v1689 = vmul.f32 %v1684, 1.442695
        %v1690 = vpow.pop %v1689
        %v1691 = vmul.f32 %v1685, 1.442695
        %v1692 = vpow.pop %v1691
        %v1693 = vmul.f32 %v1686, 1.442695
        %v1694 = vpow.pop %v1693
        %v1695 = vsel %vm1213, %v1676, 0.0
        %1696 = vadd.xlane.f32.xlu0 %v1695
        %v1697 = vpop.xlane.xlu0 %1696
        %v1698 = vsel %vm1213, %v1678, 0.0
        %1699 = vadd.xlane.f32.xlu0 %v1698
        %v1700 = vpop.xlane.xlu0 %1699
        %v1701 = vsel %vm1213, %v1680, 0.0
        %1702 = vadd.xlane.f32.xlu0 %v1701
        %v1703 = vpop.xlane.xlu0 %1702
        %v1704 = vsel %vm1213, %v1682, 0.0
        %1705 = vadd.xlane.f32.xlu0 %v1704
        %v1706 = vpop.xlane.xlu0 %1705
        %v1707 = vadd.f32 %v1697, %v1688
        %v1708 = vadd.f32 %v1700, %v1690
        %v1709 = vadd.f32 %v1703, %v1692
        %v1710 = vadd.f32 %v1706, %v1694
        %v1711 = vrcp.pop %v1707
        %v1712 = vmul.f32 1.0, %v1711
        %v1713 = vrcp.pop %v1708
        %v1714 = vmul.f32 1.0, %v1713
        %v1715 = vrcp.pop %v1709
        %v1716 = vmul.f32 1.0, %v1715
        %v1717 = vrcp.pop %v1710
        %v1718 = vmul.f32 1.0, %v1717
        %v1719 = vmul.f32 %v1676, %v1712
        %v1720 = vmul.f32 %v1678, %v1714
        %v1721 = vmul.f32 %v1680, %v1716
        %v1722 = vmul.f32 %v1682, %v1718
        %v1723 = vmul.f32 %v1688, %v1712
        %v1724 = vmul.f32 %v1690, %v1714
        %v1725 = vmul.f32 %v1692, %v1716
        %v1726 = vmul.f32 %v1694, %v1718
        %v1727 = vld [vmem:[%s6 + $0x2] sm:$0x1]
        %1728 = vrot.lane.b32.xlu0 %v620, 64
        %v1729 = vpop.permute.xlu0 %1728
        %1730 = vrot.lane.b32.xlu0 %v724, 64
        %v1731 = vpop.permute.xlu0 %1730
        %1732 = vrot.lane.b32.xlu0 %v729, 64
        %v1733 = vpop.permute.xlu0 %1732
        %v1734 = vsel %vm876, %v1729, 0
        %v1736 = vsel %vm876, %v1731, 0
        %v1738 = vsel %vm876, %v1733, 0
        %1740 = vmatprep.subr.mxu0 0.0
        %1741 = vmatpush1.xpose.msra.mxu0 %v1736
        %1742 = vmatprep.subr.mxu0 0.0
        %1743 = vmatpush1.xpose.msra.mxu0 %v1738
        %1744 = vmatprep.subr.mxu0 0.0
        %1745 = vmatpush1.xpose.msra.mxu0 0.0
        %1746 = vmatprep.subr.mxu0 0.0
        %1747 = vmatpush1.xpose.msra.mxu0 0.0
        %1748 = vmatprep.subr.mxu0 0.0
        %1749 = vmatpush1.xpose.msra.mxu0 0.0
        %1750 = vmatprep.subr.mxu0 0.0
        %1751 = vmatpush1.xpose.msra.mxu0 0.0
        %1752 = vmatprep.subr.mxu0 0.0
        %1753 = vmatpush1.xpose.msra.mxu0 0.0
        %1754 = vmatprep.subr.mxu0 0.0
        %1755 = vmatpush1.xpose.msra.mxu0 0.0
        %1756 = vmatprep.subr.mxu0 0.0
        %1757 = vmatpush1.xpose.msra.mxu0 0.0
        %1758 = vmatprep.subr.mxu0 0.0
        %1759 = vmatpush1.xpose.msra.mxu0 0.0
        %1760 = vmatprep.subr.mxu0 0.0
        %1761 = vmatpush1.xpose.msra.mxu0 0.0
        %1762 = vmatprep.subr.mxu0 0.0
        %1763 = vmatpush1.xpose.msra.mxu0 0.0
        %1764 = vmatprep.subr.mxu0 0.0
        %1765 = vmatpush1.xpose.msra.mxu0 0.0
        %1766 = vmatprep.subr.mxu0 0.0
        %1767 = vmatpush1.xpose.msra.mxu0 0.0
        %1768 = vmatprep.subr.mxu0 0.0
        %1769 = vmatpush1.xpose.msra.mxu0 0.0
        %1770 = vmatprep.subr.mxu0 0.0
        %1771 = vmatpush1.xpose.msra.mxu0 0.0
        %1772 = vmatprep.subr.mxu0 0.0
        %1773 = vmatpush1.xpose.msra.mxu0 0.0
        %1774 = vmatprep.subr.mxu0 0.0
        %1775 = vmatpush1.xpose.msra.mxu0 0.0
        %1776 = vmatprep.subr.mxu0 0.0
        %1777 = vmatpush1.xpose.msra.mxu0 0.0
        %1778 = vmatprep.subr.mxu0 0.0
        %1779 = vmatpush1.xpose.msra.mxu0 0.0
        %1780 = vmatprep.subr.mxu0 0.0
        %1781 = vmatpush1.xpose.msra.mxu0 0.0
        %1782 = vmatprep.subr.mxu0 0.0
        %1783 = vmatpush1.xpose.msra.mxu0 0.0
        %1784 = vmatprep.subr.mxu0 0.0
        %1785 = vmatpush1.xpose.msra.mxu0 0.0
        %1786 = vmatprep.subr.mxu0 0.0
        %1787 = vmatpush1.xpose.msra.mxu0 0.0
        %1788 = vmatprep.subr.mxu0 0.0
        %1789 = vmatpush1.xpose.msra.mxu0 0.0
        %1790 = vmatprep.subr.mxu0 0.0
        %1791 = vmatpush1.xpose.msra.mxu0 0.0
        %1792 = vmatprep.subr.mxu0 0.0
        %1793 = vmatpush1.xpose.msra.mxu0 0.0
        %1794 = vmatprep.subr.mxu0 0.0
        %1795 = vmatpush1.xpose.msra.mxu0 0.0
        %1796 = vmatprep.subr.mxu0 0.0
        %1797 = vmatpush1.xpose.msra.mxu0 0.0
        %1798 = vmatprep.subr.mxu0 0.0
        %1799 = vmatpush1.xpose.msra.mxu0 0.0
        %1800 = vmatprep.subr.mxu0 0.0
        %1801 = vmatpush1.xpose.msra.mxu0 0.0
        %1802 = vmatprep.subr.mxu0 0.0
        %1803 = vmatpush1.xpose.msra.mxu0 0.0
        %1804 = vmatprep.mubr.f32.mxu0 0.0
        %1805 = vmatmul.mubr.f32.gmra.mrb[0].mxu0 %v1734
        %v1806 = vpop.f32.mrb[0].mxu0
        %v1807 = vadd.f32 0.0, %v1806
        %v1808 = vpop.f32.mrb[0].mxu0
        %1809 = vdwg.mxu0
        %1810 = vrot.lane.b32.xlu0 %v621, 64
        %v1811 = vpop.permute.xlu0 %1810
        %1812 = vrot.lane.b32.xlu0 %v734, 64
        %v1813 = vpop.permute.xlu0 %1812
        %1814 = vrot.lane.b32.xlu0 %v739, 64
        %v1815 = vpop.permute.xlu0 %1814
        %v1816 = vsel %vm876, %v1811, 0
        %v1818 = vsel %vm876, %v1813, 0
        %v1820 = vsel %vm876, %v1815, 0
        %1822 = vmatprep.subr.mxu0 0.0
        %1823 = vmatpush1.xpose.msra.mxu0 %v1818
        %1824 = vmatprep.subr.mxu0 0.0
        %1825 = vmatpush1.xpose.msra.mxu0 %v1820
        %1826 = vmatprep.subr.mxu0 0.0
        %1827 = vmatpush1.xpose.msra.mxu0 0.0
        %1828 = vmatprep.subr.mxu0 0.0
        %1829 = vmatpush1.xpose.msra.mxu0 0.0
        %1830 = vmatprep.subr.mxu0 0.0
        %1831 = vmatpush1.xpose.msra.mxu0 0.0
        %1832 = vmatprep.subr.mxu0 0.0
        %1833 = vmatpush1.xpose.msra.mxu0 0.0
        %1834 = vmatprep.subr.mxu0 0.0
        %1835 = vmatpush1.xpose.msra.mxu0 0.0
        %1836 = vmatprep.subr.mxu0 0.0
        %1837 = vmatpush1.xpose.msra.mxu0 0.0
        %1838 = vmatprep.subr.mxu0 0.0
        %1839 = vmatpush1.xpose.msra.mxu0 0.0
        %1840 = vmatprep.subr.mxu0 0.0
        %1841 = vmatpush1.xpose.msra.mxu0 0.0
        %1842 = vmatprep.subr.mxu0 0.0
        %1843 = vmatpush1.xpose.msra.mxu0 0.0
        %1844 = vmatprep.subr.mxu0 0.0
        %1845 = vmatpush1.xpose.msra.mxu0 0.0
        %1846 = vmatprep.subr.mxu0 0.0
        %1847 = vmatpush1.xpose.msra.mxu0 0.0
        %1848 = vmatprep.subr.mxu0 0.0
        %1849 = vmatpush1.xpose.msra.mxu0 0.0
        %1850 = vmatprep.subr.mxu0 0.0
        %1851 = vmatpush1.xpose.msra.mxu0 0.0
        %1852 = vmatprep.subr.mxu0 0.0
        %1853 = vmatpush1.xpose.msra.mxu0 0.0
        %1854 = vmatprep.subr.mxu0 0.0
        %1855 = vmatpush1.xpose.msra.mxu0 0.0
        %1856 = vmatprep.subr.mxu0 0.0
        %1857 = vmatpush1.xpose.msra.mxu0 0.0
        %1858 = vmatprep.subr.mxu0 0.0
        %1859 = vmatpush1.xpose.msra.mxu0 0.0
        %1860 = vmatprep.subr.mxu0 0.0
        %1861 = vmatpush1.xpose.msra.mxu0 0.0
        %1862 = vmatprep.subr.mxu0 0.0
        %1863 = vmatpush1.xpose.msra.mxu0 0.0
        %1864 = vmatprep.subr.mxu0 0.0
        %1865 = vmatpush1.xpose.msra.mxu0 0.0
        %1866 = vmatprep.subr.mxu0 0.0
        %1867 = vmatpush1.xpose.msra.mxu0 0.0
        %1868 = vmatprep.subr.mxu0 0.0
        %1869 = vmatpush1.xpose.msra.mxu0 0.0
        %1870 = vmatprep.subr.mxu0 0.0
        %1871 = vmatpush1.xpose.msra.mxu0 0.0
        %1872 = vmatprep.subr.mxu0 0.0
        %1873 = vmatpush1.xpose.msra.mxu0 0.0
        %1874 = vmatprep.subr.mxu0 0.0
        %1875 = vmatpush1.xpose.msra.mxu0 0.0
        %1876 = vmatprep.subr.mxu0 0.0
        %1877 = vmatpush1.xpose.msra.mxu0 0.0
        %1878 = vmatprep.subr.mxu0 0.0
        %1879 = vmatpush1.xpose.msra.mxu0 0.0
        %1880 = vmatprep.subr.mxu0 0.0
        %1881 = vmatpush1.xpose.msra.mxu0 0.0
        %1882 = vmatprep.subr.mxu0 0.0
        %1883 = vmatpush1.xpose.msra.mxu0 0.0
        %1884 = vmatprep.subr.mxu0 0.0
        %1885 = vmatpush1.xpose.msra.mxu0 0.0
        %1886 = vmatprep.mubr.f32.mxu0 0.0
        %1887 = vmatmul.mubr.f32.gmra.mrb[0].mxu0 %v1816
        %v1888 = vpop.f32.mrb[0].mxu0
        %v1889 = vadd.f32 0.0, %v1888
        %v1890 = vpop.f32.mrb[0].mxu0
        %1891 = vdwg.mxu0
        %1892 = vrot.lane.b32.xlu0 %v622, 64
        %v1893 = vpop.permute.xlu0 %1892
        %1894 = vrot.lane.b32.xlu0 %v744, 64
        %v1895 = vpop.permute.xlu0 %1894
        %1896 = vrot.lane.b32.xlu0 %v749, 64
        %v1897 = vpop.permute.xlu0 %1896
        %v1898 = vsel %vm876, %v1893, 0
        %v1900 = vsel %vm876, %v1895, 0
        %v1902 = vsel %vm876, %v1897, 0
        %1904 = vmatprep.subr.mxu0 0.0
        %1905 = vmatpush1.xpose.msra.mxu0 %v1900
        %1906 = vmatprep.subr.mxu0 0.0
        %1907 = vmatpush1.xpose.msra.mxu0 %v1902
        %1908 = vmatprep.subr.mxu0 0.0
        %1909 = vmatpush1.xpose.msra.mxu0 0.0
        %1910 = vmatprep.subr.mxu0 0.0
        %1911 = vmatpush1.xpose.msra.mxu0 0.0
        %1912 = vmatprep.subr.mxu0 0.0
        %1913 = vmatpush1.xpose.msra.mxu0 0.0
        %1914 = vmatprep.subr.mxu0 0.0
        %1915 = vmatpush1.xpose.msra.mxu0 0.0
        %1916 = vmatprep.subr.mxu0 0.0
        %1917 = vmatpush1.xpose.msra.mxu0 0.0
        %1918 = vmatprep.subr.mxu0 0.0
        %1919 = vmatpush1.xpose.msra.mxu0 0.0
        %1920 = vmatprep.subr.mxu0 0.0
        %1921 = vmatpush1.xpose.msra.mxu0 0.0
        %1922 = vmatprep.subr.mxu0 0.0
        %1923 = vmatpush1.xpose.msra.mxu0 0.0
        %1924 = vmatprep.subr.mxu0 0.0
        %1925 = vmatpush1.xpose.msra.mxu0 0.0
        %1926 = vmatprep.subr.mxu0 0.0
        %1927 = vmatpush1.xpose.msra.mxu0 0.0
        %1928 = vmatprep.subr.mxu0 0.0
        %1929 = vmatpush1.xpose.msra.mxu0 0.0
        %1930 = vmatprep.subr.mxu0 0.0
        %1931 = vmatpush1.xpose.msra.mxu0 0.0
        %1932 = vmatprep.subr.mxu0 0.0
        %1933 = vmatpush1.xpose.msra.mxu0 0.0
        %1934 = vmatprep.subr.mxu0 0.0
        %1935 = vmatpush1.xpose.msra.mxu0 0.0
        %1936 = vmatprep.subr.mxu0 0.0
        %1937 = vmatpush1.xpose.msra.mxu0 0.0
        %1938 = vmatprep.subr.mxu0 0.0
        %1939 = vmatpush1.xpose.msra.mxu0 0.0
        %1940 = vmatprep.subr.mxu0 0.0
        %1941 = vmatpush1.xpose.msra.mxu0 0.0
        %1942 = vmatprep.subr.mxu0 0.0
        %1943 = vmatpush1.xpose.msra.mxu0 0.0
        %1944 = vmatprep.subr.mxu0 0.0
        %1945 = vmatpush1.xpose.msra.mxu0 0.0
        %1946 = vmatprep.subr.mxu0 0.0
        %1947 = vmatpush1.xpose.msra.mxu0 0.0
        %1948 = vmatprep.subr.mxu0 0.0
        %1949 = vmatpush1.xpose.msra.mxu0 0.0
        %1950 = vmatprep.subr.mxu0 0.0
        %1951 = vmatpush1.xpose.msra.mxu0 0.0
        %1952 = vmatprep.subr.mxu0 0.0
        %1953 = vmatpush1.xpose.msra.mxu0 0.0
        %1954 = vmatprep.subr.mxu0 0.0
        %1955 = vmatpush1.xpose.msra.mxu0 0.0
        %1956 = vmatprep.subr.mxu0 0.0
        %1957 = vmatpush1.xpose.msra.mxu0 0.0
        %1958 = vmatprep.subr.mxu0 0.0
        %1959 = vmatpush1.xpose.msra.mxu0 0.0
        %1960 = vmatprep.subr.mxu0 0.0
        %1961 = vmatpush1.xpose.msra.mxu0 0.0
        %1962 = vmatprep.subr.mxu0 0.0
        %1963 = vmatpush1.xpose.msra.mxu0 0.0
        %1964 = vmatprep.subr.mxu0 0.0
        %1965 = vmatpush1.xpose.msra.mxu0 0.0
        %1966 = vmatprep.subr.mxu0 0.0
        %1967 = vmatpush1.xpose.msra.mxu0 0.0
        %1968 = vmatprep.mubr.f32.mxu0 0.0
        %1969 = vmatmul.mubr.f32.gmra.mrb[0].mxu0 %v1898
        %v1970 = vpop.f32.mrb[0].mxu0
        %v1971 = vadd.f32 0.0, %v1970
        %v1972 = vpop.f32.mrb[0].mxu0
        %1973 = vdwg.mxu0
        %1974 = vrot.lane.b32.xlu0 %v623, 64
        %v1975 = vpop.permute.xlu0 %1974
        %1976 = vrot.lane.b32.xlu0 %v754, 64
        %v1977 = vpop.permute.xlu0 %1976
        %1978 = vrot.lane.b32.xlu0 %v759, 64
        %v1979 = vpop.permute.xlu0 %1978
        %v1980 = vsel %vm876, %v1975, 0
        %v1982 = vsel %vm876, %v1977, 0
        %v1984 = vsel %vm876, %v1979, 0
        %1986 = vmatprep.subr.mxu0 0.0
        %1987 = vmatpush1.xpose.msra.mxu0 %v1982
        %1988 = vmatprep.subr.mxu0 0.0
        %1989 = vmatpush1.xpose.msra.mxu0 %v1984
        %1990 = vmatprep.subr.mxu0 0.0
        %1991 = vmatpush1.xpose.msra.mxu0 0.0
        %1992 = vmatprep.subr.mxu0 0.0
        %1993 = vmatpush1.xpose.msra.mxu0 0.0
        %1994 = vmatprep.subr.mxu0 0.0
        %1995 = vmatpush1.xpose.msra.mxu0 0.0
        %1996 = vmatprep.subr.mxu0 0.0
        %1997 = vmatpush1.xpose.msra.mxu0 0.0
        %1998 = vmatprep.subr.mxu0 0.0
        %1999 = vmatpush1.xpose.msra.mxu0 0.0
        %2000 = vmatprep.subr.mxu0 0.0
        %2001 = vmatpush1.xpose.msra.mxu0 0.0
        %2002 = vmatprep.subr.mxu0 0.0
        %2003 = vmatpush1.xpose.msra.mxu0 0.0
        %2004 = vmatprep.subr.mxu0 0.0
        %2005 = vmatpush1.xpose.msra.mxu0 0.0
        %2006 = vmatprep.subr.mxu0 0.0
        %2007 = vmatpush1.xpose.msra.mxu0 0.0
        %2008 = vmatprep.subr.mxu0 0.0
        %2009 = vmatpush1.xpose.msra.mxu0 0.0
        %2010 = vmatprep.subr.mxu0 0.0
        %2011 = vmatpush1.xpose.msra.mxu0 0.0
        %2012 = vmatprep.subr.mxu0 0.0
        %2013 = vmatpush1.xpose.msra.mxu0 0.0
        %2014 = vmatprep.subr.mxu0 0.0
        %2015 = vmatpush1.xpose.msra.mxu0 0.0
        %2016 = vmatprep.subr.mxu0 0.0
        %2017 = vmatpush1.xpose.msra.mxu0 0.0
        %2018 = vmatprep.subr.mxu0 0.0
        %2019 = vmatpush1.xpose.msra.mxu0 0.0
        %2020 = vmatprep.subr.mxu0 0.0
        %2021 = vmatpush1.xpose.msra.mxu0 0.0
        %2022 = vmatprep.subr.mxu0 0.0
        %2023 = vmatpush1.xpose.msra.mxu0 0.0
        %2024 = vmatprep.subr.mxu0 0.0
        %2025 = vmatpush1.xpose.msra.mxu0 0.0
        %2026 = vmatprep.subr.mxu0 0.0
        %2027 = vmatpush1.xpose.msra.mxu0 0.0
        %2028 = vmatprep.subr.mxu0 0.0
        %2029 = vmatpush1.xpose.msra.mxu0 0.0
        %2030 = vmatprep.subr.mxu0 0.0
        %2031 = vmatpush1.xpose.msra.mxu0 0.0
        %2032 = vmatprep.subr.mxu0 0.0
        %2033 = vmatpush1.xpose.msra.mxu0 0.0
        %2034 = vmatprep.subr.mxu0 0.0
        %2035 = vmatpush1.xpose.msra.mxu0 0.0
        %2036 = vmatprep.subr.mxu0 0.0
        %2037 = vmatpush1.xpose.msra.mxu0 0.0
        %2038 = vmatprep.subr.mxu0 0.0
        %2039 = vmatpush1.xpose.msra.mxu0 0.0
        %2040 = vmatprep.subr.mxu0 0.0
        %2041 = vmatpush1.xpose.msra.mxu0 0.0
        %2042 = vmatprep.subr.mxu0 0.0
        %2043 = vmatpush1.xpose.msra.mxu0 0.0
        %2044 = vmatprep.subr.mxu0 0.0
        %2045 = vmatpush1.xpose.msra.mxu0 0.0
        %2046 = vmatprep.subr.mxu0 0.0
        %2047 = vmatpush1.xpose.msra.mxu0 0.0
        %2048 = vmatprep.subr.mxu0 0.0
        %2049 = vmatpush1.xpose.msra.mxu0 0.0
        %2050 = vmatprep.mubr.f32.mxu0 0.0
        %2051 = vmatmul.mubr.f32.gmra.mrb[0].mxu0 %v1980
        %v2052 = vpop.f32.mrb[0].mxu0
        %v2053 = vadd.f32 0.0, %v2052
        %v2054 = vpop.f32.mrb[0].mxu0
        %2055 = vdwg.mxu0
        %v2056 = vlaneseq
        %v2057 = vshrl.u32 %v2056, 7
        %v2058 = vsub.s32 0, %v2057
        %v2059 = vrot.slane %v1727, %v2058
        %2061 = vrot.lane.b32.xlu0 %v2059, 64
        %v2062 = vpop.permute.xlu0 %2061
        %v2064 = vmul.f32 %v620, %v2062
        %v2065 = vmul.f32 %v621, %v2062
        %v2066 = vmul.f32 %v622, %v2062
        %v2067 = vmul.f32 %v623, %v2062
        %2072 = vrot.lane.b32.xlu0 %v2064, 64
        %v2073 = vpop.permute.xlu0 %2072
        %2074 = vrot.lane.b32.xlu0 %v2065, 64
        %v2075 = vpop.permute.xlu0 %2074
        %2076 = vrot.lane.b32.xlu0 %v2066, 64
        %v2077 = vpop.permute.xlu0 %2076
        %2078 = vrot.lane.b32.xlu0 %v2067, 64
        %v2079 = vpop.permute.xlu0 %2078
        %v2084 = vsel %vm876, %v2073, 0.0
        %2085 = vadd.xlane.f32.xlu0 %v2084
        %v2086 = vpop.xlane.xlu0 %2085
        %v2087 = vsel %vm876, %v2075, 0.0
        %2088 = vadd.xlane.f32.xlu0 %v2087
        %v2089 = vpop.xlane.xlu0 %2088
        %v2090 = vsel %vm876, %v2077, 0.0
        %2091 = vadd.xlane.f32.xlu0 %v2090
        %v2092 = vpop.xlane.xlu0 %2091
        %v2093 = vsel %vm876, %v2079, 0.0
        %2094 = vadd.xlane.f32.xlu0 %v2093
        %v2095 = vpop.xlane.xlu0 %2094
        %v2096 = vsel %vm1213, %v1807, -inf
        %2097 = vmax.xlane.f32.xlu0 %v2096
        %v2098 = vpop.xlane.xlu0 %2097
        %v2099 = vsel %vm1213, %v1889, -inf
        %2100 = vmax.xlane.f32.xlu0 %v2099
        %v2101 = vpop.xlane.xlu0 %2100
        %v2102 = vsel %vm1213, %v1971, -inf
        %2103 = vmax.xlane.f32.xlu0 %v2102
        %v2104 = vpop.xlane.xlu0 %2103
        %v2105 = vsel %vm1213, %v2053, -inf
        %2106 = vmax.xlane.f32.xlu0 %v2105
        %v2107 = vpop.xlane.xlu0 %2106
        %v2108 = vmax.f32 %v2098, %v2086
        %v2109 = vmax.f32 %v2101, %v2089
        %v2110 = vmax.f32 %v2104, %v2092
        %v2111 = vmax.f32 %v2107, %v2095
        %v2112 = vsub.f32 %v1807, %v2108
        %v2113 = vsub.f32 %v1889, %v2109
        %v2114 = vsub.f32 %v1971, %v2110
        %v2115 = vsub.f32 %v2053, %v2111
        %v2116 = vmul.f32 %v2112, 1.442695
        %v2117 = vpow.pop %v2116
        %v2118 = vmul.f32 %v2113, 1.442695
        %v2119 = vpow.pop %v2118
        %v2120 = vmul.f32 %v2114, 1.442695
        %v2121 = vpow.pop %v2120
        %v2122 = vmul.f32 %v2115, 1.442695
        %v2123 = vpow.pop %v2122
        %v2124 = vsub.f32 %v2086, %v2108
        %v2125 = vsub.f32 %v2089, %v2109
        %v2126 = vsub.f32 %v2092, %v2110
        %v2127 = vsub.f32 %v2095, %v2111
        %v2128 = vmul.f32 %v2124, 1.442695
        %v2129 = vpow.pop %v2128
        %v2130 = vmul.f32 %v2125, 1.442695
        %v2131 = vpow.pop %v2130
        %v2132 = vmul.f32 %v2126, 1.442695
        %v2133 = vpow.pop %v2132
        %v2134 = vmul.f32 %v2127, 1.442695
        %v2135 = vpow.pop %v2134
        %v2136 = vsel %vm1213, %v2117, 0.0
        %2137 = vadd.xlane.f32.xlu0 %v2136
        %v2138 = vpop.xlane.xlu0 %2137
        %v2139 = vsel %vm1213, %v2119, 0.0
        %2140 = vadd.xlane.f32.xlu0 %v2139
        %v2141 = vpop.xlane.xlu0 %2140
        %v2142 = vsel %vm1213, %v2121, 0.0
        %2143 = vadd.xlane.f32.xlu0 %v2142
        %v2144 = vpop.xlane.xlu0 %2143
        %v2145 = vsel %vm1213, %v2123, 0.0
        %2146 = vadd.xlane.f32.xlu0 %v2145
        %v2147 = vpop.xlane.xlu0 %2146
        %v2148 = vadd.f32 %v2138, %v2129
        %v2149 = vadd.f32 %v2141, %v2131
        %v2150 = vadd.f32 %v2144, %v2133
        %v2151 = vadd.f32 %v2147, %v2135
        %v2152 = vrcp.pop %v2148
        %v2153 = vmul.f32 1.0, %v2152
        %v2154 = vrcp.pop %v2149
        %v2155 = vmul.f32 1.0, %v2154
        %v2156 = vrcp.pop %v2150
        %v2157 = vmul.f32 1.0, %v2156
        %v2158 = vrcp.pop %v2151
        %v2159 = vmul.f32 1.0, %v2158
        %v2160 = vmul.f32 %v2117, %v2153
        %v2161 = vmul.f32 %v2119, %v2155
        %v2162 = vmul.f32 %v2121, %v2157
        %v2163 = vmul.f32 %v2123, %v2159
        %v2164 = vmul.f32 %v2129, %v2153
        %v2165 = vmul.f32 %v2131, %v2155
        %v2166 = vmul.f32 %v2133, %v2157
        %v2167 = vmul.f32 %v2135, %v2159
        %v2168 = vld [vmem:[%s6 + $0x3] sm:$0x1]
        %2169 = vrot.lane.b32.xlu0 %v620, 32
        %v2170 = vpop.permute.xlu0 %2169
        %2171 = vrot.lane.b32.xlu0 %v724, 32
        %v2172 = vpop.permute.xlu0 %2171
        %2173 = vrot.lane.b32.xlu0 %v729, 32
        %v2174 = vpop.permute.xlu0 %2173
        %v2175 = vsel %vm876, %v2170, 0
        %v2177 = vsel %vm876, %v2172, 0
        %v2179 = vsel %vm876, %v2174, 0
        %2181 = vmatprep.subr.mxu0 0.0
        %2182 = vmatpush1.xpose.msra.mxu0 %v2177
        %2183 = vmatprep.subr.mxu0 0.0
        %2184 = vmatpush1.xpose.msra.mxu0 %v2179
        %2185 = vmatprep.subr.mxu0 0.0
        %2186 = vmatpush1.xpose.msra.mxu0 0.0
        %2187 = vmatprep.subr.mxu0 0.0
        %2188 = vmatpush1.xpose.msra.mxu0 0.0
        %2189 = vmatprep.subr.mxu0 0.0
        %2190 = vmatpush1.xpose.msra.mxu0 0.0
        %2191 = vmatprep.subr.mxu0 0.0
        %2192 = vmatpush1.xpose.msra.mxu0 0.0
        %2193 = vmatprep.subr.mxu0 0.0
        %2194 = vmatpush1.xpose.msra.mxu0 0.0
        %2195 = vmatprep.subr.mxu0 0.0
        %2196 = vmatpush1.xpose.msra.mxu0 0.0
        %2197 = vmatprep.subr.mxu0 0.0
        %2198 = vmatpush1.xpose.msra.mxu0 0.0
        %2199 = vmatprep.subr.mxu0 0.0
        %2200 = vmatpush1.xpose.msra.mxu0 0.0
        %2201 = vmatprep.subr.mxu0 0.0
        %2202 = vmatpush1.xpose.msra.mxu0 0.0
        %2203 = vmatprep.subr.mxu0 0.0
        %2204 = vmatpush1.xpose.msra.mxu0 0.0
        %2205 = vmatprep.subr.mxu0 0.0
        %2206 = vmatpush1.xpose.msra.mxu0 0.0
        %2207 = vmatprep.subr.mxu0 0.0
        %2208 = vmatpush1.xpose.msra.mxu0 0.0
        %2209 = vmatprep.subr.mxu0 0.0
        %2210 = vmatpush1.xpose.msra.mxu0 0.0
        %2211 = vmatprep.subr.mxu0 0.0
        %2212 = vmatpush1.xpose.msra.mxu0 0.0
        %2213 = vmatprep.subr.mxu0 0.0
        %2214 = vmatpush1.xpose.msra.mxu0 0.0
        %2215 = vmatprep.subr.mxu0 0.0
        %2216 = vmatpush1.xpose.msra.mxu0 0.0
        %2217 = vmatprep.subr.mxu0 0.0
        %2218 = vmatpush1.xpose.msra.mxu0 0.0
        %2219 = vmatprep.subr.mxu0 0.0
        %2220 = vmatpush1.xpose.msra.mxu0 0.0
        %2221 = vmatprep.subr.mxu0 0.0
        %2222 = vmatpush1.xpose.msra.mxu0 0.0
        %2223 = vmatprep.subr.mxu0 0.0
        %2224 = vmatpush1.xpose.msra.mxu0 0.0
        %2225 = vmatprep.subr.mxu0 0.0
        %2226 = vmatpush1.xpose.msra.mxu0 0.0
        %2227 = vmatprep.subr.mxu0 0.0
        %2228 = vmatpush1.xpose.msra.mxu0 0.0
        %2229 = vmatprep.subr.mxu0 0.0
        %2230 = vmatpush1.xpose.msra.mxu0 0.0
        %2231 = vmatprep.subr.mxu0 0.0
        %2232 = vmatpush1.xpose.msra.mxu0 0.0
        %2233 = vmatprep.subr.mxu0 0.0
        %2234 = vmatpush1.xpose.msra.mxu0 0.0
        %2235 = vmatprep.subr.mxu0 0.0
        %2236 = vmatpush1.xpose.msra.mxu0 0.0
        %2237 = vmatprep.subr.mxu0 0.0
        %2238 = vmatpush1.xpose.msra.mxu0 0.0
        %2239 = vmatprep.subr.mxu0 0.0
        %2240 = vmatpush1.xpose.msra.mxu0 0.0
        %2241 = vmatprep.subr.mxu0 0.0
        %2242 = vmatpush1.xpose.msra.mxu0 0.0
        %2243 = vmatprep.subr.mxu0 0.0
        %2244 = vmatpush1.xpose.msra.mxu0 0.0
        %2245 = vmatprep.mubr.f32.mxu0 0.0
        %2246 = vmatmul.mubr.f32.gmra.mrb[0].mxu0 %v2175
        %v2247 = vpop.f32.mrb[0].mxu0
        %v2248 = vadd.f32 0.0, %v2247
        %v2249 = vpop.f32.mrb[0].mxu0
        %2250 = vdwg.mxu0
        %2251 = vrot.lane.b32.xlu0 %v621, 32
        %v2252 = vpop.permute.xlu0 %2251
        %2253 = vrot.lane.b32.xlu0 %v734, 32
        %v2254 = vpop.permute.xlu0 %2253
        %2255 = vrot.lane.b32.xlu0 %v739, 32
        %v2256 = vpop.permute.xlu0 %2255
        %v2257 = vsel %vm876, %v2252, 0
        %v2259 = vsel %vm876, %v2254, 0
        %v2261 = vsel %vm876, %v2256, 0
        %2263 = vmatprep.subr.mxu0 0.0
        %2264 = vmatpush1.xpose.msra.mxu0 %v2259
        %2265 = vmatprep.subr.mxu0 0.0
        %2266 = vmatpush1.xpose.msra.mxu0 %v2261
        %2267 = vmatprep.subr.mxu0 0.0
        %2268 = vmatpush1.xpose.msra.mxu0 0.0
        %2269 = vmatprep.subr.mxu0 0.0
        %2270 = vmatpush1.xpose.msra.mxu0 0.0
        %2271 = vmatprep.subr.mxu0 0.0
        %2272 = vmatpush1.xpose.msra.mxu0 0.0
        %2273 = vmatprep.subr.mxu0 0.0
        %2274 = vmatpush1.xpose.msra.mxu0 0.0
        %2275 = vmatprep.subr.mxu0 0.0
        %2276 = vmatpush1.xpose.msra.mxu0 0.0
        %2277 = vmatprep.subr.mxu0 0.0
        %2278 = vmatpush1.xpose.msra.mxu0 0.0
        %2279 = vmatprep.subr.mxu0 0.0
        %2280 = vmatpush1.xpose.msra.mxu0 0.0
        %2281 = vmatprep.subr.mxu0 0.0
        %2282 = vmatpush1.xpose.msra.mxu0 0.0
        %2283 = vmatprep.subr.mxu0 0.0
        %2284 = vmatpush1.xpose.msra.mxu0 0.0
        %2285 = vmatprep.subr.mxu0 0.0
        %2286 = vmatpush1.xpose.msra.mxu0 0.0
        %2287 = vmatprep.subr.mxu0 0.0
        %2288 = vmatpush1.xpose.msra.mxu0 0.0
        %2289 = vmatprep.subr.mxu0 0.0
        %2290 = vmatpush1.xpose.msra.mxu0 0.0
        %2291 = vmatprep.subr.mxu0 0.0
        %2292 = vmatpush1.xpose.msra.mxu0 0.0
        %2293 = vmatprep.subr.mxu0 0.0
        %2294 = vmatpush1.xpose.msra.mxu0 0.0
        %2295 = vmatprep.subr.mxu0 0.0
        %2296 = vmatpush1.xpose.msra.mxu0 0.0
        %2297 = vmatprep.subr.mxu0 0.0
        %2298 = vmatpush1.xpose.msra.mxu0 0.0
        %2299 = vmatprep.subr.mxu0 0.0
        %2300 = vmatpush1.xpose.msra.mxu0 0.0
        %2301 = vmatprep.subr.mxu0 0.0
        %2302 = vmatpush1.xpose.msra.mxu0 0.0
        %2303 = vmatprep.subr.mxu0 0.0
        %2304 = vmatpush1.xpose.msra.mxu0 0.0
        %2305 = vmatprep.subr.mxu0 0.0
        %2306 = vmatpush1.xpose.msra.mxu0 0.0
        %2307 = vmatprep.subr.mxu0 0.0
        %2308 = vmatpush1.xpose.msra.mxu0 0.0
        %2309 = vmatprep.subr.mxu0 0.0
        %2310 = vmatpush1.xpose.msra.mxu0 0.0
        %2311 = vmatprep.subr.mxu0 0.0
        %2312 = vmatpush1.xpose.msra.mxu0 0.0
        %2313 = vmatprep.subr.mxu0 0.0
        %2314 = vmatpush1.xpose.msra.mxu0 0.0
        %2315 = vmatprep.subr.mxu0 0.0
        %2316 = vmatpush1.xpose.msra.mxu0 0.0
        %2317 = vmatprep.subr.mxu0 0.0
        %2318 = vmatpush1.xpose.msra.mxu0 0.0
        %2319 = vmatprep.subr.mxu0 0.0
        %2320 = vmatpush1.xpose.msra.mxu0 0.0
        %2321 = vmatprep.subr.mxu0 0.0
        %2322 = vmatpush1.xpose.msra.mxu0 0.0
        %2323 = vmatprep.subr.mxu0 0.0
        %2324 = vmatpush1.xpose.msra.mxu0 0.0
        %2325 = vmatprep.subr.mxu0 0.0
        %2326 = vmatpush1.xpose.msra.mxu0 0.0
        %2327 = vmatprep.mubr.f32.mxu0 0.0
        %2328 = vmatmul.mubr.f32.gmra.mrb[0].mxu0 %v2257
        %v2329 = vpop.f32.mrb[0].mxu0
        %v2330 = vadd.f32 0.0, %v2329
        %v2331 = vpop.f32.mrb[0].mxu0
        %2332 = vdwg.mxu0
        %2333 = vrot.lane.b32.xlu0 %v622, 32
        %v2334 = vpop.permute.xlu0 %2333
        %2335 = vrot.lane.b32.xlu0 %v744, 32
        %v2336 = vpop.permute.xlu0 %2335
        %2337 = vrot.lane.b32.xlu0 %v749, 32
        %v2338 = vpop.permute.xlu0 %2337
        %v2339 = vsel %vm876, %v2334, 0
        %v2341 = vsel %vm876, %v2336, 0
        %v2343 = vsel %vm876, %v2338, 0
        %2345 = vmatprep.subr.mxu0 0.0
        %2346 = vmatpush1.xpose.msra.mxu0 %v2341
        %2347 = vmatprep.subr.mxu0 0.0
        %2348 = vmatpush1.xpose.msra.mxu0 %v2343
        %2349 = vmatprep.subr.mxu0 0.0
        %2350 = vmatpush1.xpose.msra.mxu0 0.0
        %2351 = vmatprep.subr.mxu0 0.0
        %2352 = vmatpush1.xpose.msra.mxu0 0.0
        %2353 = vmatprep.subr.mxu0 0.0
        %2354 = vmatpush1.xpose.msra.mxu0 0.0
        %2355 = vmatprep.subr.mxu0 0.0
        %2356 = vmatpush1.xpose.msra.mxu0 0.0
        %2357 = vmatprep.subr.mxu0 0.0
        %2358 = vmatpush1.xpose.msra.mxu0 0.0
        %2359 = vmatprep.subr.mxu0 0.0
        %2360 = vmatpush1.xpose.msra.mxu0 0.0
        %2361 = vmatprep.subr.mxu0 0.0
        %2362 = vmatpush1.xpose.msra.mxu0 0.0
        %2363 = vmatprep.subr.mxu0 0.0
        %2364 = vmatpush1.xpose.msra.mxu0 0.0
        %2365 = vmatprep.subr.mxu0 0.0
        %2366 = vmatpush1.xpose.msra.mxu0 0.0
        %2367 = vmatprep.subr.mxu0 0.0
        %2368 = vmatpush1.xpose.msra.mxu0 0.0
        %2369 = vmatprep.subr.mxu0 0.0
        %2370 = vmatpush1.xpose.msra.mxu0 0.0
        %2371 = vmatprep.subr.mxu0 0.0
        %2372 = vmatpush1.xpose.msra.mxu0 0.0
        %2373 = vmatprep.subr.mxu0 0.0
        %2374 = vmatpush1.xpose.msra.mxu0 0.0
        %2375 = vmatprep.subr.mxu0 0.0
        %2376 = vmatpush1.xpose.msra.mxu0 0.0
        %2377 = vmatprep.subr.mxu0 0.0
        %2378 = vmatpush1.xpose.msra.mxu0 0.0
        %2379 = vmatprep.subr.mxu0 0.0
        %2380 = vmatpush1.xpose.msra.mxu0 0.0
        %2381 = vmatprep.subr.mxu0 0.0
        %2382 = vmatpush1.xpose.msra.mxu0 0.0
        %2383 = vmatprep.subr.mxu0 0.0
        %2384 = vmatpush1.xpose.msra.mxu0 0.0
        %2385 = vmatprep.subr.mxu0 0.0
        %2386 = vmatpush1.xpose.msra.mxu0 0.0
        %2387 = vmatprep.subr.mxu0 0.0
        %2388 = vmatpush1.xpose.msra.mxu0 0.0
        %2389 = vmatprep.subr.mxu0 0.0
        %2390 = vmatpush1.xpose.msra.mxu0 0.0
        %2391 = vmatprep.subr.mxu0 0.0
        %2392 = vmatpush1.xpose.msra.mxu0 0.0
        %2393 = vmatprep.subr.mxu0 0.0
        %2394 = vmatpush1.xpose.msra.mxu0 0.0
        %2395 = vmatprep.subr.mxu0 0.0
        %2396 = vmatpush1.xpose.msra.mxu0 0.0
        %2397 = vmatprep.subr.mxu0 0.0
        %2398 = vmatpush1.xpose.msra.mxu0 0.0
        %2399 = vmatprep.subr.mxu0 0.0
        %2400 = vmatpush1.xpose.msra.mxu0 0.0
        %2401 = vmatprep.subr.mxu0 0.0
        %2402 = vmatpush1.xpose.msra.mxu0 0.0
        %2403 = vmatprep.subr.mxu0 0.0
        %2404 = vmatpush1.xpose.msra.mxu0 0.0
        %2405 = vmatprep.subr.mxu0 0.0
        %2406 = vmatpush1.xpose.msra.mxu0 0.0
        %2407 = vmatprep.subr.mxu0 0.0
        %2408 = vmatpush1.xpose.msra.mxu0 0.0
        %2409 = vmatprep.mubr.f32.mxu0 0.0
        %2410 = vmatmul.mubr.f32.gmra.mrb[0].mxu0 %v2339
        %v2411 = vpop.f32.mrb[0].mxu0
        %v2412 = vadd.f32 0.0, %v2411
        %v2413 = vpop.f32.mrb[0].mxu0
        %2414 = vdwg.mxu0
        %2415 = vrot.lane.b32.xlu0 %v623, 32
        %v2416 = vpop.permute.xlu0 %2415
        %2417 = vrot.lane.b32.xlu0 %v754, 32
        %v2418 = vpop.permute.xlu0 %2417
        %2419 = vrot.lane.b32.xlu0 %v759, 32
        %v2420 = vpop.permute.xlu0 %2419
        %v2421 = vsel %vm876, %v2416, 0
        %v2423 = vsel %vm876, %v2418, 0
        %v2425 = vsel %vm876, %v2420, 0
        %2427 = vmatprep.subr.mxu0 0.0
        %2428 = vmatpush1.xpose.msra.mxu0 %v2423
        %2429 = vmatprep.subr.mxu0 0.0
        %2430 = vmatpush1.xpose.msra.mxu0 %v2425
        %2431 = vmatprep.subr.mxu0 0.0
        %2432 = vmatpush1.xpose.msra.mxu0 0.0
        %2433 = vmatprep.subr.mxu0 0.0
        %2434 = vmatpush1.xpose.msra.mxu0 0.0
        %2435 = vmatprep.subr.mxu0 0.0
        %2436 = vmatpush1.xpose.msra.mxu0 0.0
        %2437 = vmatprep.subr.mxu0 0.0
        %2438 = vmatpush1.xpose.msra.mxu0 0.0
        %2439 = vmatprep.subr.mxu0 0.0
        %2440 = vmatpush1.xpose.msra.mxu0 0.0
        %2441 = vmatprep.subr.mxu0 0.0
        %2442 = vmatpush1.xpose.msra.mxu0 0.0
        %2443 = vmatprep.subr.mxu0 0.0
        %2444 = vmatpush1.xpose.msra.mxu0 0.0
        %2445 = vmatprep.subr.mxu0 0.0
        %2446 = vmatpush1.xpose.msra.mxu0 0.0
        %2447 = vmatprep.subr.mxu0 0.0
        %2448 = vmatpush1.xpose.msra.mxu0 0.0
        %2449 = vmatprep.subr.mxu0 0.0
        %2450 = vmatpush1.xpose.msra.mxu0 0.0
        %2451 = vmatprep.subr.mxu0 0.0
        %2452 = vmatpush1.xpose.msra.mxu0 0.0
        %2453 = vmatprep.subr.mxu0 0.0
        %2454 = vmatpush1.xpose.msra.mxu0 0.0
        %2455 = vmatprep.subr.mxu0 0.0
        %2456 = vmatpush1.xpose.msra.mxu0 0.0
        %2457 = vmatprep.subr.mxu0 0.0
        %2458 = vmatpush1.xpose.msra.mxu0 0.0
        %2459 = vmatprep.subr.mxu0 0.0
        %2460 = vmatpush1.xpose.msra.mxu0 0.0
        %2461 = vmatprep.subr.mxu0 0.0
        %2462 = vmatpush1.xpose.msra.mxu0 0.0
        %2463 = vmatprep.subr.mxu0 0.0
        %2464 = vmatpush1.xpose.msra.mxu0 0.0
        %2465 = vmatprep.subr.mxu0 0.0
        %2466 = vmatpush1.xpose.msra.mxu0 0.0
        %2467 = vmatprep.subr.mxu0 0.0
        %2468 = vmatpush1.xpose.msra.mxu0 0.0
        %2469 = vmatprep.subr.mxu0 0.0
        %2470 = vmatpush1.xpose.msra.mxu0 0.0
        %2471 = vmatprep.subr.mxu0 0.0
        %2472 = vmatpush1.xpose.msra.mxu0 0.0
        %2473 = vmatprep.subr.mxu0 0.0
        %2474 = vmatpush1.xpose.msra.mxu0 0.0
        %2475 = vmatprep.subr.mxu0 0.0
        %2476 = vmatpush1.xpose.msra.mxu0 0.0
        %2477 = vmatprep.subr.mxu0 0.0
        %2478 = vmatpush1.xpose.msra.mxu0 0.0
        %2479 = vmatprep.subr.mxu0 0.0
        %2480 = vmatpush1.xpose.msra.mxu0 0.0
        %2481 = vmatprep.subr.mxu0 0.0
        %2482 = vmatpush1.xpose.msra.mxu0 0.0
        %2483 = vmatprep.subr.mxu0 0.0
        %2484 = vmatpush1.xpose.msra.mxu0 0.0
        %2485 = vmatprep.subr.mxu0 0.0
        %2486 = vmatpush1.xpose.msra.mxu0 0.0
        %2487 = vmatprep.subr.mxu0 0.0
        %2488 = vmatpush1.xpose.msra.mxu0 0.0
        %2489 = vmatprep.subr.mxu0 0.0
        %2490 = vmatpush1.xpose.msra.mxu0 0.0
        %2491 = vmatprep.mubr.f32.mxu0 0.0
        %2492 = vmatmul.mubr.f32.gmra.mrb[0].mxu0 %v2421
        %v2493 = vpop.f32.mrb[0].mxu0
        %v2494 = vadd.f32 0.0, %v2493
        %v2495 = vpop.f32.mrb[0].mxu0
        %2496 = vdwg.mxu0
        %v2497 = vlaneseq
        %v2498 = vshrl.u32 %v2497, 7
        %v2499 = vsub.s32 0, %v2498
        %v2500 = vrot.slane %v2168, %v2499
        %2502 = vrot.lane.b32.xlu0 %v2500, 96
        %v2503 = vpop.permute.xlu0 %2502
        %v2505 = vmul.f32 %v620, %v2503
        %v2506 = vmul.f32 %v621, %v2503
        %v2507 = vmul.f32 %v622, %v2503
        %v2508 = vmul.f32 %v623, %v2503
        %2513 = vrot.lane.b32.xlu0 %v2505, 32
        %v2514 = vpop.permute.xlu0 %2513
        %2515 = vrot.lane.b32.xlu0 %v2506, 32
        %v2516 = vpop.permute.xlu0 %2515
        %2517 = vrot.lane.b32.xlu0 %v2507, 32
        %v2518 = vpop.permute.xlu0 %2517
        %2519 = vrot.lane.b32.xlu0 %v2508, 32
        %v2520 = vpop.permute.xlu0 %2519
        %v2525 = vsel %vm876, %v2514, 0.0
        %2526 = vadd.xlane.f32.xlu0 %v2525
        %v2527 = vpop.xlane.xlu0 %2526
        %v2528 = vsel %vm876, %v2516, 0.0
        %2529 = vadd.xlane.f32.xlu0 %v2528
        %v2530 = vpop.xlane.xlu0 %2529
        %v2531 = vsel %vm876, %v2518, 0.0
        %2532 = vadd.xlane.f32.xlu0 %v2531
        %v2533 = vpop.xlane.xlu0 %2532
        %v2534 = vsel %vm876, %v2520, 0.0
        %2535 = vadd.xlane.f32.xlu0 %v2534
        %v2536 = vpop.xlane.xlu0 %2535
        %v2537 = vsel %vm1213, %v2248, -inf
        %2538 = vmax.xlane.f32.xlu0 %v2537
        %v2539 = vpop.xlane.xlu0 %2538
        %v2540 = vsel %vm1213, %v2330, -inf
        %2541 = vmax.xlane.f32.xlu0 %v2540
        %v2542 = vpop.xlane.xlu0 %2541
        %v2543 = vsel %vm1213, %v2412, -inf
        %2544 = vmax.xlane.f32.xlu0 %v2543
        %v2545 = vpop.xlane.xlu0 %2544
        %v2546 = vsel %vm1213, %v2494, -inf
        %2547 = vmax.xlane.f32.xlu0 %v2546
        %v2548 = vpop.xlane.xlu0 %2547
        %v2549 = vmax.f32 %v2539, %v2527
        %v2550 = vmax.f32 %v2542, %v2530
        %v2551 = vmax.f32 %v2545, %v2533
        %v2552 = vmax.f32 %v2548, %v2536
        %v2553 = vsub.f32 %v2248, %v2549
        %v2554 = vsub.f32 %v2330, %v2550
        %v2555 = vsub.f32 %v2412, %v2551
        %v2556 = vsub.f32 %v2494, %v2552
        %v2557 = vmul.f32 %v2553, 1.442695
        %v2558 = vpow.pop %v2557
        %v2559 = vmul.f32 %v2554, 1.442695
        %v2560 = vpow.pop %v2559
        %v2561 = vmul.f32 %v2555, 1.442695
        %v2562 = vpow.pop %v2561
        %v2563 = vmul.f32 %v2556, 1.442695
        %v2564 = vpow.pop %v2563
        %v2565 = vsub.f32 %v2527, %v2549
        %v2566 = vsub.f32 %v2530, %v2550
        %v2567 = vsub.f32 %v2533, %v2551
        %v2568 = vsub.f32 %v2536, %v2552
        %v2569 = vmul.f32 %v2565, 1.442695
        %v2570 = vpow.pop %v2569
        %v2571 = vmul.f32 %v2566, 1.442695
        %v2572 = vpow.pop %v2571
        %v2573 = vmul.f32 %v2567, 1.442695
        %v2574 = vpow.pop %v2573
        %v2575 = vmul.f32 %v2568, 1.442695
        %v2576 = vpow.pop %v2575
        %v2577 = vsel %vm1213, %v2558, 0.0
        %2578 = vadd.xlane.f32.xlu0 %v2577
        %v2579 = vpop.xlane.xlu0 %2578
        %v2580 = vsel %vm1213, %v2560, 0.0
        %2581 = vadd.xlane.f32.xlu0 %v2580
        %v2582 = vpop.xlane.xlu0 %2581
        %v2583 = vsel %vm1213, %v2562, 0.0
        %2584 = vadd.xlane.f32.xlu0 %v2583
        %v2585 = vpop.xlane.xlu0 %2584
        %v2586 = vsel %vm1213, %v2564, 0.0
        %2587 = vadd.xlane.f32.xlu0 %v2586
        %v2588 = vpop.xlane.xlu0 %2587
        %v2589 = vadd.f32 %v2579, %v2570
        %v2590 = vadd.f32 %v2582, %v2572
        %v2591 = vadd.f32 %v2585, %v2574
        %v2592 = vadd.f32 %v2588, %v2576
        %v2593 = vrcp.pop %v2589
        %v2594 = vmul.f32 1.0, %v2593
        %v2595 = vrcp.pop %v2590
        %v2596 = vmul.f32 1.0, %v2595
        %v2597 = vrcp.pop %v2591
        %v2598 = vmul.f32 1.0, %v2597
        %v2599 = vrcp.pop %v2592
        %v2600 = vmul.f32 1.0, %v2599
        %v2601 = vmul.f32 %v2558, %v2594
        %v2602 = vmul.f32 %v2560, %v2596
        %v2603 = vmul.f32 %v2562, %v2598
        %v2604 = vmul.f32 %v2564, %v2600
        %v2605 = vmul.f32 %v2570, %v2594
        %v2606 = vmul.f32 %v2572, %v2596
        %v2607 = vmul.f32 %v2574, %v2598
        %v2608 = vmul.f32 %v2576, %v2600
        %s2609 = sld [smem:[#allocation14]]
        %v2610 = vstv %s2609
        %v2611 = vmul.f32 %v1278, %v2610
        %v2612 = vmul.f32 %v1279, %v2610
        %v2613 = vmul.f32 %v1280, %v2610
        %v2614 = vmul.f32 %v1281, %v2610
        %v2615 = vmul.f32 %v1282, %v2610
        %v2616 = vmul.f32 %v1283, %v2610
        %v2617 = vmul.f32 %v1284, %v2610
        %v2618 = vmul.f32 %v1285, %v2610
        %s2619 = sld [smem:[#allocation14 + $0x1]]
        %v2620 = vstv %s2619
        %v2621 = vmul.f32 %v1719, %v2620
        %v2622 = vmul.f32 %v1720, %v2620
        %v2623 = vmul.f32 %v1721, %v2620
        %v2624 = vmul.f32 %v1722, %v2620
        %v2625 = vadd.f32 %v2611, %v2621
        %v2626 = vadd.f32 %v2612, %v2622
        %v2627 = vadd.f32 %v2613, %v2623
        %v2628 = vadd.f32 %v2614, %v2624
        %v2629 = vmul.f32 %v1723, %v2620
        %v2630 = vmul.f32 %v1724, %v2620
        %v2631 = vmul.f32 %v1725, %v2620
        %v2632 = vmul.f32 %v1726, %v2620
        %v2633 = vadd.f32 %v2615, %v2629
        %v2634 = vadd.f32 %v2616, %v2630
        %v2635 = vadd.f32 %v2617, %v2631
        %v2636 = vadd.f32 %v2618, %v2632
        %s2637 = sld [smem:[#allocation14 + $0x2]]
        %v2638 = vstv %s2637
        %v2639 = vmul.f32 %v2160, %v2638
        %v2640 = vmul.f32 %v2161, %v2638
        %v2641 = vmul.f32 %v2162, %v2638
        %v2642 = vmul.f32 %v2163, %v2638
        %v2643 = vadd.f32 %v2625, %v2639
        %v2644 = vadd.f32 %v2626, %v2640
        %v2645 = vadd.f32 %v2627, %v2641
        %v2646 = vadd.f32 %v2628, %v2642
        %v2647 = vmul.f32 %v2164, %v2638
        %v2648 = vmul.f32 %v2165, %v2638
        %v2649 = vmul.f32 %v2166, %v2638
        %v2650 = vmul.f32 %v2167, %v2638
        %v2651 = vadd.f32 %v2633, %v2647
        %v2652 = vadd.f32 %v2634, %v2648
        %v2653 = vadd.f32 %v2635, %v2649
        %v2654 = vadd.f32 %v2636, %v2650
        %s2655 = sld [smem:[#allocation14 + $0x3]]
        %v2656 = vstv %s2655
        %v2657 = vmul.f32 %v2601, %v2656
        %v2658 = vmul.f32 %v2602, %v2656
        %v2659 = vmul.f32 %v2603, %v2656
        %v2660 = vmul.f32 %v2604, %v2656
        %v2661 = vadd.f32 %v2643, %v2657
        %v2662 = vadd.f32 %v2644, %v2658
        %v2663 = vadd.f32 %v2645, %v2659
        %v2664 = vadd.f32 %v2646, %v2660
        %v2665 = vmul.f32 %v2605, %v2656
        %v2666 = vmul.f32 %v2606, %v2656
        %v2667 = vmul.f32 %v2607, %v2656
        %v2668 = vmul.f32 %v2608, %v2656
        %v2669 = vadd.f32 %v2651, %v2665
        %v2670 = vadd.f32 %v2652, %v2666
        %v2671 = vadd.f32 %v2653, %v2667
        %v2672 = vadd.f32 %v2654, %v2668
        %s2673 = sld [smem:[#allocation15]]
        %v2674 = vstv %s2673
        %v2675 = vadd.f32 %v2661, %v2674
        %v2676 = vadd.f32 %v2662, %v2674
        %v2677 = vadd.f32 %v2663, %v2674
        %v2678 = vadd.f32 %v2664, %v2674
        %v2679 = vadd.f32 %v2669, %v2674
        %v2680 = vadd.f32 %v2670, %v2674
        %v2681 = vadd.f32 %v2671, %v2674
        %v2682 = vadd.f32 %v2672, %v2674
        %v2683 = vld [vmem:[%s7] sm:$0x1]
        %v2684 = vlaneseq
        %v2685 = vshrl.u32 %v2684, 7
        %v2686 = vsub.s32 0, %v2685
        %v2687 = vrot.slane %v2683, %v2686
        %v2688 = vmul.f32 %v2679, %v2687
        %v2689 = vmul.f32 %v2680, %v2687
        %v2690 = vmul.f32 %v2681, %v2687
        %v2691 = vmul.f32 %v2682, %v2687
        %v2693 = vsel %vm1213, %v2675, 0
        %2695 = vmatprep.subr.mxu0 0.0
        %2696 = vmatpush1.msra.mxu0 %v837
        %2697 = vmatprep.subr.mxu0 0.0
        %2698 = vmatpush1.msra.mxu0 %v842
        %2699 = vmatprep.subr.mxu0 0.0
        %2700 = vmatpush1.msra.mxu0 0.0
        %2701 = vmatprep.subr.mxu0 0.0
        %2702 = vmatpush1.msra.mxu0 0.0
        %2703 = vmatprep.subr.mxu0 0.0
        %2704 = vmatpush1.msra.mxu0 0.0
        %2705 = vmatprep.subr.mxu0 0.0
        %2706 = vmatpush1.msra.mxu0 0.0
        %2707 = vmatprep.subr.mxu0 0.0
        %2708 = vmatpush1.msra.mxu0 0.0
        %2709 = vmatprep.subr.mxu0 0.0
        %2710 = vmatpush1.msra.mxu0 0.0
        %2711 = vmatprep.subr.mxu0 0.0
        %2712 = vmatpush1.msra.mxu0 0.0
        %2713 = vmatprep.subr.mxu0 0.0
        %2714 = vmatpush1.msra.mxu0 0.0
        %2715 = vmatprep.subr.mxu0 0.0
        %2716 = vmatpush1.msra.mxu0 0.0
        %2717 = vmatprep.subr.mxu0 0.0
        %2718 = vmatpush1.msra.mxu0 0.0
        %2719 = vmatprep.subr.mxu0 0.0
        %2720 = vmatpush1.msra.mxu0 0.0
        %2721 = vmatprep.subr.mxu0 0.0
        %2722 = vmatpush1.msra.mxu0 0.0
        %2723 = vmatprep.subr.mxu0 0.0
        %2724 = vmatpush1.msra.mxu0 0.0
        %2725 = vmatprep.subr.mxu0 0.0
        %2726 = vmatpush1.msra.mxu0 0.0
        %2727 = vmatprep.subr.mxu0 0.0
        %2728 = vmatpush1.msra.mxu0 0.0
        %2729 = vmatprep.subr.mxu0 0.0
        %2730 = vmatpush1.msra.mxu0 0.0
        %2731 = vmatprep.subr.mxu0 0.0
        %2732 = vmatpush1.msra.mxu0 0.0
        %2733 = vmatprep.subr.mxu0 0.0
        %2734 = vmatpush1.msra.mxu0 0.0
        %2735 = vmatprep.subr.mxu0 0.0
        %2736 = vmatpush1.msra.mxu0 0.0
        %2737 = vmatprep.subr.mxu0 0.0
        %2738 = vmatpush1.msra.mxu0 0.0
        %2739 = vmatprep.subr.mxu0 0.0
        %2740 = vmatpush1.msra.mxu0 0.0
        %2741 = vmatprep.subr.mxu0 0.0
        %2742 = vmatpush1.msra.mxu0 0.0
        %2743 = vmatprep.subr.mxu0 0.0
        %2744 = vmatpush1.msra.mxu0 0.0
        %2745 = vmatprep.subr.mxu0 0.0
        %2746 = vmatpush1.msra.mxu0 0.0
        %2747 = vmatprep.subr.mxu0 0.0
        %2748 = vmatpush1.msra.mxu0 0.0
        %2749 = vmatprep.subr.mxu0 0.0
        %2750 = vmatpush1.msra.mxu0 0.0
        %2751 = vmatprep.subr.mxu0 0.0
        %2752 = vmatpush1.msra.mxu0 0.0
        %2753 = vmatprep.subr.mxu0 0.0
        %2754 = vmatpush1.msra.mxu0 0.0
        %2755 = vmatprep.subr.mxu0 0.0
        %2756 = vmatpush1.msra.mxu0 0.0
        %2757 = vmatprep.subr.mxu0 0.0
        %2758 = vmatpush1.msra.mxu0 0.0
        %2759 = vmatprep.mubr.f32.mxu0 0.0
        %2760 = vmatmul.mubr.f32.gmra.mrb[0].mxu0 %v2693
        %v2761 = vpop.f32.mrb[0].mxu0
        %v2762 = vadd.f32 %v2688, %v2761
        %v2763 = vpop.f32.mrb[0].mxu0
        %2764 = vdwg.mxu0
        %v2766 = vsel %vm1213, %v2676, 0
        %2768 = vmatprep.subr.mxu0 0.0
        %2769 = vmatpush1.msra.mxu0 %v847
        %2770 = vmatprep.subr.mxu0 0.0
        %2771 = vmatpush1.msra.mxu0 %v852
        %2772 = vmatprep.subr.mxu0 0.0
        %2773 = vmatpush1.msra.mxu0 0.0
        %2774 = vmatprep.subr.mxu0 0.0
        %2775 = vmatpush1.msra.mxu0 0.0
        %2776 = vmatprep.subr.mxu0 0.0
        %2777 = vmatpush1.msra.mxu0 0.0
        %2778 = vmatprep.subr.mxu0 0.0
        %2779 = vmatpush1.msra.mxu0 0.0
        %2780 = vmatprep.subr.mxu0 0.0
        %2781 = vmatpush1.msra.mxu0 0.0
        %2782 = vmatprep.subr.mxu0 0.0
        %2783 = vmatpush1.msra.mxu0 0.0
        %2784 = vmatprep.subr.mxu0 0.0
        %2785 = vmatpush1.msra.mxu0 0.0
        %2786 = vmatprep.subr.mxu0 0.0
        %2787 = vmatpush1.msra.mxu0 0.0
        %2788 = vmatprep.subr.mxu0 0.0
        %2789 = vmatpush1.msra.mxu0 0.0
        %2790 = vmatprep.subr.mxu0 0.0
        %2791 = vmatpush1.msra.mxu0 0.0
        %2792 = vmatprep.subr.mxu0 0.0
        %2793 = vmatpush1.msra.mxu0 0.0
        %2794 = vmatprep.subr.mxu0 0.0
        %2795 = vmatpush1.msra.mxu0 0.0
        %2796 = vmatprep.subr.mxu0 0.0
        %2797 = vmatpush1.msra.mxu0 0.0
        %2798 = vmatprep.subr.mxu0 0.0
        %2799 = vmatpush1.msra.mxu0 0.0
        %2800 = vmatprep.subr.mxu0 0.0
        %2801 = vmatpush1.msra.mxu0 0.0
        %2802 = vmatprep.subr.mxu0 0.0
        %2803 = vmatpush1.msra.mxu0 0.0
        %2804 = vmatprep.subr.mxu0 0.0
        %2805 = vmatpush1.msra.mxu0 0.0
        %2806 = vmatprep.subr.mxu0 0.0
        %2807 = vmatpush1.msra.mxu0 0.0
        %2808 = vmatprep.subr.mxu0 0.0
        %2809 = vmatpush1.msra.mxu0 0.0
        %2810 = vmatprep.subr.mxu0 0.0
        %2811 = vmatpush1.msra.mxu0 0.0
        %2812 = vmatprep.subr.mxu0 0.0
        %2813 = vmatpush1.msra.mxu0 0.0
        %2814 = vmatprep.subr.mxu0 0.0
        %2815 = vmatpush1.msra.mxu0 0.0
        %2816 = vmatprep.subr.mxu0 0.0
        %2817 = vmatpush1.msra.mxu0 0.0
        %2818 = vmatprep.subr.mxu0 0.0
        %2819 = vmatpush1.msra.mxu0 0.0
        %2820 = vmatprep.subr.mxu0 0.0
        %2821 = vmatpush1.msra.mxu0 0.0
        %2822 = vmatprep.subr.mxu0 0.0
        %2823 = vmatpush1.msra.mxu0 0.0
        %2824 = vmatprep.subr.mxu0 0.0
        %2825 = vmatpush1.msra.mxu0 0.0
        %2826 = vmatprep.subr.mxu0 0.0
        %2827 = vmatpush1.msra.mxu0 0.0
        %2828 = vmatprep.subr.mxu0 0.0
        %2829 = vmatpush1.msra.mxu0 0.0
        %2830 = vmatprep.subr.mxu0 0.0
        %2831 = vmatpush1.msra.mxu0 0.0
        %2832 = vmatprep.mubr.f32.mxu0 0.0
        %2833 = vmatmul.mubr.f32.gmra.mrb[0].mxu0 %v2766
        %v2834 = vpop.f32.mrb[0].mxu0
        %v2835 = vadd.f32 %v2689, %v2834
        %v2836 = vpop.f32.mrb[0].mxu0
        %2837 = vdwg.mxu0
        %v2839 = vsel %vm1213, %v2677, 0
        %2841 = vmatprep.subr.mxu0 0.0
        %2842 = vmatpush1.msra.mxu0 %v857
        %2843 = vmatprep.subr.mxu0 0.0
        %2844 = vmatpush1.msra.mxu0 %v862
        %2845 = vmatprep.subr.mxu0 0.0
        %2846 = vmatpush1.msra.mxu0 0.0
        %2847 = vmatprep.subr.mxu0 0.0
        %2848 = vmatpush1.msra.mxu0 0.0
        %2849 = vmatprep.subr.mxu0 0.0
        %2850 = vmatpush1.msra.mxu0 0.0
        %2851 = vmatprep.subr.mxu0 0.0
        %2852 = vmatpush1.msra.mxu0 0.0
        %2853 = vmatprep.subr.mxu0 0.0
        %2854 = vmatpush1.msra.mxu0 0.0
        %2855 = vmatprep.subr.mxu0 0.0
        %2856 = vmatpush1.msra.mxu0 0.0
        %2857 = vmatprep.subr.mxu0 0.0
        %2858 = vmatpush1.msra.mxu0 0.0
        %2859 = vmatprep.subr.mxu0 0.0
        %2860 = vmatpush1.msra.mxu0 0.0
        %2861 = vmatprep.subr.mxu0 0.0
        %2862 = vmatpush1.msra.mxu0 0.0
        %2863 = vmatprep.subr.mxu0 0.0
        %2864 = vmatpush1.msra.mxu0 0.0
        %2865 = vmatprep.subr.mxu0 0.0
        %2866 = vmatpush1.msra.mxu0 0.0
        %2867 = vmatprep.subr.mxu0 0.0
        %2868 = vmatpush1.msra.mxu0 0.0
        %2869 = vmatprep.subr.mxu0 0.0
        %2870 = vmatpush1.msra.mxu0 0.0
        %2871 = vmatprep.subr.mxu0 0.0
        %2872 = vmatpush1.msra.mxu0 0.0
        %2873 = vmatprep.subr.mxu0 0.0
        %2874 = vmatpush1.msra.mxu0 0.0
        %2875 = vmatprep.subr.mxu0 0.0
        %2876 = vmatpush1.msra.mxu0 0.0
        %2877 = vmatprep.subr.mxu0 0.0
        %2878 = vmatpush1.msra.mxu0 0.0
        %2879 = vmatprep.subr.mxu0 0.0
        %2880 = vmatpush1.msra.mxu0 0.0
        %2881 = vmatprep.subr.mxu0 0.0
        %2882 = vmatpush1.msra.mxu0 0.0
        %2883 = vmatprep.subr.mxu0 0.0
        %2884 = vmatpush1.msra.mxu0 0.0
        %2885 = vmatprep.subr.mxu0 0.0
        %2886 = vmatpush1.msra.mxu0 0.0
        %2887 = vmatprep.subr.mxu0 0.0
        %2888 = vmatpush1.msra.mxu0 0.0
        %2889 = vmatprep.subr.mxu0 0.0
        %2890 = vmatpush1.msra.mxu0 0.0
        %2891 = vmatprep.subr.mxu0 0.0
        %2892 = vmatpush1.msra.mxu0 0.0
        %2893 = vmatprep.subr.mxu0 0.0
        %2894 = vmatpush1.msra.mxu0 0.0
        %2895 = vmatprep.subr.mxu0 0.0
        %2896 = vmatpush1.msra.mxu0 0.0
        %2897 = vmatprep.subr.mxu0 0.0
        %2898 = vmatpush1.msra.mxu0 0.0
        %2899 = vmatprep.subr.mxu0 0.0
        %2900 = vmatpush1.msra.mxu0 0.0
        %2901 = vmatprep.subr.mxu0 0.0
        %2902 = vmatpush1.msra.mxu0 0.0
        %2903 = vmatprep.subr.mxu0 0.0
        %2904 = vmatpush1.msra.mxu0 0.0
        %2905 = vmatprep.mubr.f32.mxu0 0.0
        %2906 = vmatmul.mubr.f32.gmra.mrb[0].mxu0 %v2839
        %v2907 = vpop.f32.mrb[0].mxu0
        %v2908 = vadd.f32 %v2690, %v2907
        %v2909 = vpop.f32.mrb[0].mxu0
        %2910 = vdwg.mxu0
        %v2912 = vsel %vm1213, %v2678, 0
        %2914 = vmatprep.subr.mxu0 0.0
        %2915 = vmatpush1.msra.mxu0 %v867
        %2916 = vmatprep.subr.mxu0 0.0
        %2917 = vmatpush1.msra.mxu0 %v872
        %2918 = vmatprep.subr.mxu0 0.0
        %2919 = vmatpush1.msra.mxu0 0.0
        %2920 = vmatprep.subr.mxu0 0.0
        %2921 = vmatpush1.msra.mxu0 0.0
        %2922 = vmatprep.subr.mxu0 0.0
        %2923 = vmatpush1.msra.mxu0 0.0
        %2924 = vmatprep.subr.mxu0 0.0
        %2925 = vmatpush1.msra.mxu0 0.0
        %2926 = vmatprep.subr.mxu0 0.0
        %2927 = vmatpush1.msra.mxu0 0.0
        %2928 = vmatprep.subr.mxu0 0.0
        %2929 = vmatpush1.msra.mxu0 0.0
        %2930 = vmatprep.subr.mxu0 0.0
        %2931 = vmatpush1.msra.mxu0 0.0
        %2932 = vmatprep.subr.mxu0 0.0
        %2933 = vmatpush1.msra.mxu0 0.0
        %2934 = vmatprep.subr.mxu0 0.0
        %2935 = vmatpush1.msra.mxu0 0.0
        %2936 = vmatprep.subr.mxu0 0.0
        %2937 = vmatpush1.msra.mxu0 0.0
        %2938 = vmatprep.subr.mxu0 0.0
        %2939 = vmatpush1.msra.mxu0 0.0
        %2940 = vmatprep.subr.mxu0 0.0
        %2941 = vmatpush1.msra.mxu0 0.0
        %2942 = vmatprep.subr.mxu0 0.0
        %2943 = vmatpush1.msra.mxu0 0.0
        %2944 = vmatprep.subr.mxu0 0.0
        %2945 = vmatpush1.msra.mxu0 0.0
        %2946 = vmatprep.subr.mxu0 0.0
        %2947 = vmatpush1.msra.mxu0 0.0
        %2948 = vmatprep.subr.mxu0 0.0
        %2949 = vmatpush1.msra.mxu0 0.0
        %2950 = vmatprep.subr.mxu0 0.0
        %2951 = vmatpush1.msra.mxu0 0.0
        %2952 = vmatprep.subr.mxu0 0.0
        %2953 = vmatpush1.msra.mxu0 0.0
        %2954 = vmatprep.subr.mxu0 0.0
        %2955 = vmatpush1.msra.mxu0 0.0
        %2956 = vmatprep.subr.mxu0 0.0
        %2957 = vmatpush1.msra.mxu0 0.0
        %2958 = vmatprep.subr.mxu0 0.0
        %2959 = vmatpush1.msra.mxu0 0.0
        %2960 = vmatprep.subr.mxu0 0.0
        %2961 = vmatpush1.msra.mxu0 0.0
        %2962 = vmatprep.subr.mxu0 0.0
        %2963 = vmatpush1.msra.mxu0 0.0
        %2964 = vmatprep.subr.mxu0 0.0
        %2965 = vmatpush1.msra.mxu0 0.0
        %2966 = vmatprep.subr.mxu0 0.0
        %2967 = vmatpush1.msra.mxu0 0.0
        %2968 = vmatprep.subr.mxu0 0.0
        %2969 = vmatpush1.msra.mxu0 0.0
        %2970 = vmatprep.subr.mxu0 0.0
        %2971 = vmatpush1.msra.mxu0 0.0
        %2972 = vmatprep.subr.mxu0 0.0
        %2973 = vmatpush1.msra.mxu0 0.0
        %2974 = vmatprep.subr.mxu0 0.0
        %2975 = vmatpush1.msra.mxu0 0.0
        %2976 = vmatprep.subr.mxu0 0.0
        %2977 = vmatpush1.msra.mxu0 0.0
        %2978 = vmatprep.mubr.f32.mxu0 0.0
        %2979 = vmatmul.mubr.f32.gmra.mrb[0].mxu0 %v2912
        %v2980 = vpop.f32.mrb[0].mxu0
        %v2981 = vadd.f32 %v2691, %v2980
        %v2982 = vpop.f32.mrb[0].mxu0
        %2983 = vdwg.mxu0
        %v2984 = vld [vmem:[#allocation12] sm:$0xff]
        %v2985 = vld [vmem:[#allocation12 + $0x8] sm:$0xff]
        %v2986 = vld [vmem:[#allocation12 + $0x10] sm:$0xff]
        %v2987 = vld [vmem:[#allocation12 + $0x18] sm:$0xff]
        %s2988 = sld [smem:[#allocation14 + $0x80]]
        %v2989 = vstv %s2988
        %v2990 = vmul.f32 %v1278, %v2989
        %v2991 = vmul.f32 %v1279, %v2989
        %v2992 = vmul.f32 %v1280, %v2989
        %v2993 = vmul.f32 %v1281, %v2989
        %v2994 = vmul.f32 %v1282, %v2989
        %v2995 = vmul.f32 %v1283, %v2989
        %v2996 = vmul.f32 %v1284, %v2989
        %v2997 = vmul.f32 %v1285, %v2989
        %s2998 = sld [smem:[#allocation14 + $0x81]]
        %v2999 = vstv %s2998
        %v3000 = vmul.f32 %v1719, %v2999
        %v3001 = vmul.f32 %v1720, %v2999
        %v3002 = vmul.f32 %v1721, %v2999
        %v3003 = vmul.f32 %v1722, %v2999
        %v3004 = vadd.f32 %v2990, %v3000
        %v3005 = vadd.f32 %v2991, %v3001
        %v3006 = vadd.f32 %v2992, %v3002
        %v3007 = vadd.f32 %v2993, %v3003
        %v3008 = vmul.f32 %v1723, %v2999
        %v3009 = vmul.f32 %v1724, %v2999
        %v3010 = vmul.f32 %v1725, %v2999
        %v3011 = vmul.f32 %v1726, %v2999
        %v3012 = vadd.f32 %v2994, %v3008
        %v3013 = vadd.f32 %v2995, %v3009
        %v3014 = vadd.f32 %v2996, %v3010
        %v3015 = vadd.f32 %v2997, %v3011
        %s3016 = sld [smem:[#allocation14 + $0x82]]
        %v3017 = vstv %s3016
        %v3018 = vmul.f32 %v2160, %v3017
        %v3019 = vmul.f32 %v2161, %v3017
        %v3020 = vmul.f32 %v2162, %v3017
        %v3021 = vmul.f32 %v2163, %v3017
        %v3022 = vadd.f32 %v3004, %v3018
        %v3023 = vadd.f32 %v3005, %v3019
        %v3024 = vadd.f32 %v3006, %v3020
        %v3025 = vadd.f32 %v3007, %v3021
        %v3026 = vmul.f32 %v2164, %v3017
        %v3027 = vmul.f32 %v2165, %v3017
        %v3028 = vmul.f32 %v2166, %v3017
        %v3029 = vmul.f32 %v2167, %v3017
        %v3030 = vadd.f32 %v3012, %v3026
        %v3031 = vadd.f32 %v3013, %v3027
        %v3032 = vadd.f32 %v3014, %v3028
        %v3033 = vadd.f32 %v3015, %v3029
        %s3034 = sld [smem:[#allocation14 + $0x83]]
        %v3035 = vstv %s3034
        %v3036 = vmul.f32 %v2601, %v3035
        %v3037 = vmul.f32 %v2602, %v3035
        %v3038 = vmul.f32 %v2603, %v3035
        %v3039 = vmul.f32 %v2604, %v3035
        %v3040 = vadd.f32 %v3022, %v3036
        %v3041 = vadd.f32 %v3023, %v3037
        %v3042 = vadd.f32 %v3024, %v3038
        %v3043 = vadd.f32 %v3025, %v3039
        %v3044 = vmul.f32 %v2605, %v3035
        %v3045 = vmul.f32 %v2606, %v3035
        %v3046 = vmul.f32 %v2607, %v3035
        %v3047 = vmul.f32 %v2608, %v3035
        %v3048 = vadd.f32 %v3030, %v3044
        %v3049 = vadd.f32 %v3031, %v3045
        %v3050 = vadd.f32 %v3032, %v3046
        %v3051 = vadd.f32 %v3033, %v3047
        %s3052 = sld [smem:[#allocation15 + $0x1]]
        %v3053 = vstv %s3052
        %v3054 = vadd.f32 %v3040, %v3053
        %v3055 = vadd.f32 %v3041, %v3053
        %v3056 = vadd.f32 %v3042, %v3053
        %v3057 = vadd.f32 %v3043, %v3053
        %v3058 = vadd.f32 %v3048, %v3053
        %v3059 = vadd.f32 %v3049, %v3053
        %v3060 = vadd.f32 %v3050, %v3053
        %v3061 = vadd.f32 %v3051, %v3053
        %v3062 = vld [vmem:[%s7 + $0x1] sm:$0x1]
        %v3063 = vlaneseq
        %v3064 = vshrl.u32 %v3063, 7
        %v3065 = vsub.s32 0, %v3064
        %v3066 = vrot.slane %v3062, %v3065
        %v3067 = vmul.f32 %v3058, %v3066
        %v3068 = vmul.f32 %v3059, %v3066
        %v3069 = vmul.f32 %v3060, %v3066
        %v3070 = vmul.f32 %v3061, %v3066
        %3073 = vrot.lane.b32.xlu0 %v837, 96
        %v3074 = vpop.permute.xlu0 %3073
        %3075 = vrot.lane.b32.xlu0 %v842, 96
        %v3076 = vpop.permute.xlu0 %3075
        %v3080 = vsel %vm1213, %v3054, 0
        %3082 = vmatprep.subr.mxu0 0.0
        %3083 = vmatpush1.msra.mxu0 %v3074
        %3084 = vmatprep.subr.mxu0 0.0
        %3085 = vmatpush1.msra.mxu0 %v3076
        %3086 = vmatprep.subr.mxu0 0.0
        %3087 = vmatpush1.msra.mxu0 0.0
        %3088 = vmatprep.subr.mxu0 0.0
        %3089 = vmatpush1.msra.mxu0 0.0
        %3090 = vmatprep.subr.mxu0 0.0
        %3091 = vmatpush1.msra.mxu0 0.0
        %3092 = vmatprep.subr.mxu0 0.0
        %3093 = vmatpush1.msra.mxu0 0.0
        %3094 = vmatprep.subr.mxu0 0.0
        %3095 = vmatpush1.msra.mxu0 0.0
        %3096 = vmatprep.subr.mxu0 0.0
        %3097 = vmatpush1.msra.mxu0 0.0
        %3098 = vmatprep.subr.mxu0 0.0
        %3099 = vmatpush1.msra.mxu0 0.0
        %3100 = vmatprep.subr.mxu0 0.0
        %3101 = vmatpush1.msra.mxu0 0.0
        %3102 = vmatprep.subr.mxu0 0.0
        %3103 = vmatpush1.msra.mxu0 0.0
        %3104 = vmatprep.subr.mxu0 0.0
        %3105 = vmatpush1.msra.mxu0 0.0
        %3106 = vmatprep.subr.mxu0 0.0
        %3107 = vmatpush1.msra.mxu0 0.0
        %3108 = vmatprep.subr.mxu0 0.0
        %3109 = vmatpush1.msra.mxu0 0.0
        %3110 = vmatprep.subr.mxu0 0.0
        %3111 = vmatpush1.msra.mxu0 0.0
        %3112 = vmatprep.subr.mxu0 0.0
        %3113 = vmatpush1.msra.mxu0 0.0
        %3114 = vmatprep.subr.mxu0 0.0
        %3115 = vmatpush1.msra.mxu0 0.0
        %3116 = vmatprep.subr.mxu0 0.0
        %3117 = vmatpush1.msra.mxu0 0.0
        %3118 = vmatprep.subr.mxu0 0.0
        %3119 = vmatpush1.msra.mxu0 0.0
        %3120 = vmatprep.subr.mxu0 0.0
        %3121 = vmatpush1.msra.mxu0 0.0
        %3122 = vmatprep.subr.mxu0 0.0
        %3123 = vmatpush1.msra.mxu0 0.0
        %3124 = vmatprep.subr.mxu0 0.0
        %3125 = vmatpush1.msra.mxu0 0.0
        %3126 = vmatprep.subr.mxu0 0.0
        %3127 = vmatpush1.msra.mxu0 0.0
        %3128 = vmatprep.subr.mxu0 0.0
        %3129 = vmatpush1.msra.mxu0 0.0
        %3130 = vmatprep.subr.mxu0 0.0
        %3131 = vmatpush1.msra.mxu0 0.0
        %3132 = vmatprep.subr.mxu0 0.0
        %3133 = vmatpush1.msra.mxu0 0.0
        %3134 = vmatprep.subr.mxu0 0.0
        %3135 = vmatpush1.msra.mxu0 0.0
        %3136 = vmatprep.subr.mxu0 0.0
        %3137 = vmatpush1.msra.mxu0 0.0
        %3138 = vmatprep.subr.mxu0 0.0
        %3139 = vmatpush1.msra.mxu0 0.0
        %3140 = vmatprep.subr.mxu0 0.0
        %3141 = vmatpush1.msra.mxu0 0.0
        %3142 = vmatprep.subr.mxu0 0.0
        %3143 = vmatpush1.msra.mxu0 0.0
        %3144 = vmatprep.subr.mxu0 0.0
        %3145 = vmatpush1.msra.mxu0 0.0
        %3146 = vmatprep.mubr.f32.mxu0 0.0
        %3147 = vmatmul.mubr.f32.gmra.mrb[0].mxu0 %v3080
        %v3148 = vpop.f32.mrb[0].mxu0
        %v3149 = vadd.f32 %v3067, %v3148
        %v3150 = vpop.f32.mrb[0].mxu0
        %3151 = vdwg.mxu0
        %3154 = vrot.lane.b32.xlu0 %v847, 96
        %v3155 = vpop.permute.xlu0 %3154
        %3156 = vrot.lane.b32.xlu0 %v852, 96
        %v3157 = vpop.permute.xlu0 %3156
        %v3161 = vsel %vm1213, %v3055, 0
        %3163 = vmatprep.subr.mxu0 0.0
        %3164 = vmatpush1.msra.mxu0 %v3155
        %3165 = vmatprep.subr.mxu0 0.0
        %3166 = vmatpush1.msra.mxu0 %v3157
        %3167 = vmatprep.subr.mxu0 0.0
        %3168 = vmatpush1.msra.mxu0 0.0
        %3169 = vmatprep.subr.mxu0 0.0
        %3170 = vmatpush1.msra.mxu0 0.0
        %3171 = vmatprep.subr.mxu0 0.0
        %3172 = vmatpush1.msra.mxu0 0.0
        %3173 = vmatprep.subr.mxu0 0.0
        %3174 = vmatpush1.msra.mxu0 0.0
        %3175 = vmatprep.subr.mxu0 0.0
        %3176 = vmatpush1.msra.mxu0 0.0
        %3177 = vmatprep.subr.mxu0 0.0
        %3178 = vmatpush1.msra.mxu0 0.0
        %3179 = vmatprep.subr.mxu0 0.0
        %3180 = vmatpush1.msra.mxu0 0.0
        %3181 = vmatprep.subr.mxu0 0.0
        %3182 = vmatpush1.msra.mxu0 0.0
        %3183 = vmatprep.subr.mxu0 0.0
        %3184 = vmatpush1.msra.mxu0 0.0
        %3185 = vmatprep.subr.mxu0 0.0
        %3186 = vmatpush1.msra.mxu0 0.0
        %3187 = vmatprep.subr.mxu0 0.0
        %3188 = vmatpush1.msra.mxu0 0.0
        %3189 = vmatprep.subr.mxu0 0.0
        %3190 = vmatpush1.msra.mxu0 0.0
        %3191 = vmatprep.subr.mxu0 0.0
        %3192 = vmatpush1.msra.mxu0 0.0
        %3193 = vmatprep.subr.mxu0 0.0
        %3194 = vmatpush1.msra.mxu0 0.0
        %3195 = vmatprep.subr.mxu0 0.0
        %3196 = vmatpush1.msra.mxu0 0.0
        %3197 = vmatprep.subr.mxu0 0.0
        %3198 = vmatpush1.msra.mxu0 0.0
        %3199 = vmatprep.subr.mxu0 0.0
        %3200 = vmatpush1.msra.mxu0 0.0
        %3201 = vmatprep.subr.mxu0 0.0
        %3202 = vmatpush1.msra.mxu0 0.0
        %3203 = vmatprep.subr.mxu0 0.0
        %3204 = vmatpush1.msra.mxu0 0.0
        %3205 = vmatprep.subr.mxu0 0.0
        %3206 = vmatpush1.msra.mxu0 0.0
        %3207 = vmatprep.subr.mxu0 0.0
        %3208 = vmatpush1.msra.mxu0 0.0
        %3209 = vmatprep.subr.mxu0 0.0
        %3210 = vmatpush1.msra.mxu0 0.0
        %3211 = vmatprep.subr.mxu0 0.0
        %3212 = vmatpush1.msra.mxu0 0.0
        %3213 = vmatprep.subr.mxu0 0.0
        %3214 = vmatpush1.msra.mxu0 0.0
        %3215 = vmatprep.subr.mxu0 0.0
        %3216 = vmatpush1.msra.mxu0 0.0
        %3217 = vmatprep.subr.mxu0 0.0
        %3218 = vmatpush1.msra.mxu0 0.0
        %3219 = vmatprep.subr.mxu0 0.0
        %3220 = vmatpush1.msra.mxu0 0.0
        %3221 = vmatprep.subr.mxu0 0.0
        %3222 = vmatpush1.msra.mxu0 0.0
        %3223 = vmatprep.subr.mxu0 0.0
        %3224 = vmatpush1.msra.mxu0 0.0
        %3225 = vmatprep.subr.mxu0 0.0
        %3226 = vmatpush1.msra.mxu0 0.0
        %3227 = vmatprep.mubr.f32.mxu0 0.0
        %3228 = vmatmul.mubr.f32.gmra.mrb[0].mxu0 %v3161
        %v3229 = vpop.f32.mrb[0].mxu0
        %v3230 = vadd.f32 %v3068, %v3229
        %v3231 = vpop.f32.mrb[0].mxu0
        %3232 = vdwg.mxu0
        %3235 = vrot.lane.b32.xlu0 %v857, 96
        %v3236 = vpop.permute.xlu0 %3235
        %3237 = vrot.lane.b32.xlu0 %v862, 96
        %v3238 = vpop.permute.xlu0 %3237
        %v3242 = vsel %vm1213, %v3056, 0
        %3244 = vmatprep.subr.mxu0 0.0
        %3245 = vmatpush1.msra.mxu0 %v3236
        %3246 = vmatprep.subr.mxu0 0.0
        %3247 = vmatpush1.msra.mxu0 %v3238
        %3248 = vmatprep.subr.mxu0 0.0
        %3249 = vmatpush1.msra.mxu0 0.0
        %3250 = vmatprep.subr.mxu0 0.0
        %3251 = vmatpush1.msra.mxu0 0.0
        %3252 = vmatprep.subr.mxu0 0.0
        %3253 = vmatpush1.msra.mxu0 0.0
        %3254 = vmatprep.subr.mxu0 0.0
        %3255 = vmatpush1.msra.mxu0 0.0
        %3256 = vmatprep.subr.mxu0 0.0
        %3257 = vmatpush1.msra.mxu0 0.0
        %3258 = vmatprep.subr.mxu0 0.0
        %3259 = vmatpush1.msra.mxu0 0.0
        %3260 = vmatprep.subr.mxu0 0.0
        %3261 = vmatpush1.msra.mxu0 0.0
        %3262 = vmatprep.subr.mxu0 0.0
        %3263 = vmatpush1.msra.mxu0 0.0
        %3264 = vmatprep.subr.mxu0 0.0
        %3265 = vmatpush1.msra.mxu0 0.0
        %3266 = vmatprep.subr.mxu0 0.0
        %3267 = vmatpush1.msra.mxu0 0.0
        %3268 = vmatprep.subr.mxu0 0.0
        %3269 = vmatpush1.msra.mxu0 0.0
        %3270 = vmatprep.subr.mxu0 0.0
        %3271 = vmatpush1.msra.mxu0 0.0
        %3272 = vmatprep.subr.mxu0 0.0
        %3273 = vmatpush1.msra.mxu0 0.0
        %3274 = vmatprep.subr.mxu0 0.0
        %3275 = vmatpush1.msra.mxu0 0.0
        %3276 = vmatprep.subr.mxu0 0.0
        %3277 = vmatpush1.msra.mxu0 0.0
        %3278 = vmatprep.subr.mxu0 0.0
        %3279 = vmatpush1.msra.mxu0 0.0
        %3280 = vmatprep.subr.mxu0 0.0
        %3281 = vmatpush1.msra.mxu0 0.0
        %3282 = vmatprep.subr.mxu0 0.0
        %3283 = vmatpush1.msra.mxu0 0.0
        %3284 = vmatprep.subr.mxu0 0.0
        %3285 = vmatpush1.msra.mxu0 0.0
        %3286 = vmatprep.subr.mxu0 0.0
        %3287 = vmatpush1.msra.mxu0 0.0
        %3288 = vmatprep.subr.mxu0 0.0
        %3289 = vmatpush1.msra.mxu0 0.0
        %3290 = vmatprep.subr.mxu0 0.0
        %3291 = vmatpush1.msra.mxu0 0.0
        %3292 = vmatprep.subr.mxu0 0.0
        %3293 = vmatpush1.msra.mxu0 0.0
        %3294 = vmatprep.subr.mxu0 0.0
        %3295 = vmatpush1.msra.mxu0 0.0
        %3296 = vmatprep.subr.mxu0 0.0
        %3297 = vmatpush1.msra.mxu0 0.0
        %3298 = vmatprep.subr.mxu0 0.0
        %3299 = vmatpush1.msra.mxu0 0.0
        %3300 = vmatprep.subr.mxu0 0.0
        %3301 = vmatpush1.msra.mxu0 0.0
        %3302 = vmatprep.subr.mxu0 0.0
        %3303 = vmatpush1.msra.mxu0 0.0
        %3304 = vmatprep.subr.mxu0 0.0
        %3305 = vmatpush1.msra.mxu0 0.0
        %3306 = vmatprep.subr.mxu0 0.0
        %3307 = vmatpush1.msra.mxu0 0.0
        %3308 = vmatprep.mubr.f32.mxu0 0.0
        %3309 = vmatmul.mubr.f32.gmra.mrb[0].mxu0 %v3242
        %v3310 = vpop.f32.mrb[0].mxu0
        %v3311 = vadd.f32 %v3069, %v3310
        %v3312 = vpop.f32.mrb[0].mxu0
        %3313 = vdwg.mxu0
        %3316 = vrot.lane.b32.xlu0 %v867, 96
        %v3317 = vpop.permute.xlu0 %3316
        %3318 = vrot.lane.b32.xlu0 %v872, 96
        %v3319 = vpop.permute.xlu0 %3318
        %v3323 = vsel %vm1213, %v3057, 0
        %3325 = vmatprep.subr.mxu0 0.0
        %3326 = vmatpush1.msra.mxu0 %v3317
        %3327 = vmatprep.subr.mxu0 0.0
        %3328 = vmatpush1.msra.mxu0 %v3319
        %3329 = vmatprep.subr.mxu0 0.0
        %3330 = vmatpush1.msra.mxu0 0.0
        %3331 = vmatprep.subr.mxu0 0.0
        %3332 = vmatpush1.msra.mxu0 0.0
        %3333 = vmatprep.subr.mxu0 0.0
        %3334 = vmatpush1.msra.mxu0 0.0
        %3335 = vmatprep.subr.mxu0 0.0
        %3336 = vmatpush1.msra.mxu0 0.0
        %3337 = vmatprep.subr.mxu0 0.0
        %3338 = vmatpush1.msra.mxu0 0.0
        %3339 = vmatprep.subr.mxu0 0.0
        %3340 = vmatpush1.msra.mxu0 0.0
        %3341 = vmatprep.subr.mxu0 0.0
        %3342 = vmatpush1.msra.mxu0 0.0
        %3343 = vmatprep.subr.mxu0 0.0
        %3344 = vmatpush1.msra.mxu0 0.0
        %3345 = vmatprep.subr.mxu0 0.0
        %3346 = vmatpush1.msra.mxu0 0.0
        %3347 = vmatprep.subr.mxu0 0.0
        %3348 = vmatpush1.msra.mxu0 0.0
        %3349 = vmatprep.subr.mxu0 0.0
        %3350 = vmatpush1.msra.mxu0 0.0
        %3351 = vmatprep.subr.mxu0 0.0
        %3352 = vmatpush1.msra.mxu0 0.0
        %3353 = vmatprep.subr.mxu0 0.0
        %3354 = vmatpush1.msra.mxu0 0.0
        %3355 = vmatprep.subr.mxu0 0.0
        %3356 = vmatpush1.msra.mxu0 0.0
        %3357 = vmatprep.subr.mxu0 0.0
        %3358 = vmatpush1.msra.mxu0 0.0
        %3359 = vmatprep.subr.mxu0 0.0
        %3360 = vmatpush1.msra.mxu0 0.0
        %3361 = vmatprep.subr.mxu0 0.0
        %3362 = vmatpush1.msra.mxu0 0.0
        %3363 = vmatprep.subr.mxu0 0.0
        %3364 = vmatpush1.msra.mxu0 0.0
        %3365 = vmatprep.subr.mxu0 0.0
        %3366 = vmatpush1.msra.mxu0 0.0
        %3367 = vmatprep.subr.mxu0 0.0
        %3368 = vmatpush1.msra.mxu0 0.0
        %3369 = vmatprep.subr.mxu0 0.0
        %3370 = vmatpush1.msra.mxu0 0.0
        %3371 = vmatprep.subr.mxu0 0.0
        %3372 = vmatpush1.msra.mxu0 0.0
        %3373 = vmatprep.subr.mxu0 0.0
        %3374 = vmatpush1.msra.mxu0 0.0
        %3375 = vmatprep.subr.mxu0 0.0
        %3376 = vmatpush1.msra.mxu0 0.0
        %3377 = vmatprep.subr.mxu0 0.0
        %3378 = vmatpush1.msra.mxu0 0.0
        %3379 = vmatprep.subr.mxu0 0.0
        %3380 = vmatpush1.msra.mxu0 0.0
        %3381 = vmatprep.subr.mxu0 0.0
        %3382 = vmatpush1.msra.mxu0 0.0
        %3383 = vmatprep.subr.mxu0 0.0
        %3384 = vmatpush1.msra.mxu0 0.0
        %3385 = vmatprep.subr.mxu0 0.0
        %3386 = vmatpush1.msra.mxu0 0.0
        %3387 = vmatprep.subr.mxu0 0.0
        %3388 = vmatpush1.msra.mxu0 0.0
        %3389 = vmatprep.mubr.f32.mxu0 0.0
        %3390 = vmatmul.mubr.f32.gmra.mrb[0].mxu0 %v3323
        %v3391 = vpop.f32.mrb[0].mxu0
        %v3392 = vadd.f32 %v3070, %v3391
        %v3393 = vpop.f32.mrb[0].mxu0
        %3394 = vdwg.mxu0
        %s3395 = scalar_lea.vmem [#allocation12], 32
        %v3396 = vld [vmem:[%s3395] sm:$0xff]
        %v3397 = vld [vmem:[%s3395 + $0x8] sm:$0xff]
        %v3398 = vld [vmem:[%s3395 + $0x10] sm:$0xff]
        %v3399 = vld [vmem:[%s3395 + $0x18] sm:$0xff]
        %v3401 = vsel %vm876, %v3149, 0
        %v3404 = vsel %vm876, %v3230, 0
        %v3407 = vsel %vm876, %v3311, 0
        %v3410 = vsel %vm876, %v3392, 0
        %3412 = vmatprep.subr.mxu0 0.0
        %3413 = vmatpush1.msra.mxu0 %v3396
        %3414 = vmatprep.subr.mxu0 0.0
        %3415 = vmatpush1.msra.mxu0 %v3397
        %3416 = vmatprep.subr.mxu0 0.0
        %3417 = vmatpush1.msra.mxu0 %v3398
        %3418 = vmatprep.subr.mxu0 0.0
        %3419 = vmatpush1.msra.mxu0 %v3399
        %3420 = vmatprep.subr.mxu0 0.0
        %3421 = vmatpush1.msra.mxu0 0.0
        %3422 = vmatprep.subr.mxu0 0.0
        %3423 = vmatpush1.msra.mxu0 0.0
        %3424 = vmatprep.subr.mxu0 0.0
        %3425 = vmatpush1.msra.mxu0 0.0
        %3426 = vmatprep.subr.mxu0 0.0
        %3427 = vmatpush1.msra.mxu0 0.0
        %3428 = vmatprep.subr.mxu0 0.0
        %3429 = vmatpush1.msra.mxu0 0.0
        %3430 = vmatprep.subr.mxu0 0.0
        %3431 = vmatpush1.msra.mxu0 0.0
        %3432 = vmatprep.subr.mxu0 0.0
        %3433 = vmatpush1.msra.mxu0 0.0
        %3434 = vmatprep.subr.mxu0 0.0
        %3435 = vmatpush1.msra.mxu0 0.0
        %3436 = vmatprep.subr.mxu0 0.0
        %3437 = vmatpush1.msra.mxu0 0.0
        %3438 = vmatprep.subr.mxu0 0.0
        %3439 = vmatpush1.msra.mxu0 0.0
        %3440 = vmatprep.subr.mxu0 0.0
        %3441 = vmatpush1.msra.mxu0 0.0
        %3442 = vmatprep.subr.mxu0 0.0
        %3443 = vmatpush1.msra.mxu0 0.0
        %3444 = vmatprep.subr.mxu0 0.0
        %3445 = vmatpush1.msra.mxu0 0.0
        %3446 = vmatprep.subr.mxu0 0.0
        %3447 = vmatpush1.msra.mxu0 0.0
        %3448 = vmatprep.subr.mxu0 0.0
        %3449 = vmatpush1.msra.mxu0 0.0
        %3450 = vmatprep.subr.mxu0 0.0
        %3451 = vmatpush1.msra.mxu0 0.0
        %3452 = vmatprep.subr.mxu0 0.0
        %3453 = vmatpush1.msra.mxu0 0.0
        %3454 = vmatprep.subr.mxu0 0.0
        %3455 = vmatpush1.msra.mxu0 0.0
        %3456 = vmatprep.subr.mxu0 0.0
        %3457 = vmatpush1.msra.mxu0 0.0
        %3458 = vmatprep.subr.mxu0 0.0
        %3459 = vmatpush1.msra.mxu0 0.0
        %3460 = vmatprep.subr.mxu0 0.0
        %3461 = vmatpush1.msra.mxu0 0.0
        %3462 = vmatprep.subr.mxu0 0.0
        %3463 = vmatpush1.msra.mxu0 0.0
        %3464 = vmatprep.subr.mxu0 0.0
        %3465 = vmatpush1.msra.mxu0 0.0
        %3466 = vmatprep.subr.mxu0 0.0
        %3467 = vmatpush1.msra.mxu0 0.0
        %3468 = vmatprep.subr.mxu0 0.0
        %3469 = vmatpush1.msra.mxu0 0.0
        %3470 = vmatprep.subr.mxu0 0.0
        %3471 = vmatpush1.msra.mxu0 0.0
        %3472 = vmatprep.subr.mxu0 0.0
        %3473 = vmatpush1.msra.mxu0 0.0
        %3474 = vmatprep.subr.mxu0 0.0
        %3475 = vmatpush1.msra.mxu0 0.0
        %3476 = vmatprep.mubr.f32.mxu0 0.0
        %3477 = vmatmul.mubr.f32.gmra.mrb[0].mxu0 %v3401
        %v3478 = vpop.f32.mrb[0].mxu0
        %v3479 = vadd.f32 0.0, %v3478
        %v3480 = vpop.f32.mrb[0].mxu0
        %3481 = vmatprep.mubr.f32.mxu0 0.0
        %3482 = vmatmul.mubr.f32.gmra.mrb[0].mxu0 %v3404
        %v3483 = vpop.f32.mrb[0].mxu0
        %v3484 = vadd.f32 0.0, %v3483
        %v3485 = vpop.f32.mrb[0].mxu0
        %3486 = vmatprep.mubr.f32.mxu0 0.0
        %3487 = vmatmul.mubr.f32.gmra.mrb[0].mxu0 %v3407
        %v3488 = vpop.f32.mrb[0].mxu0
        %v3489 = vadd.f32 0.0, %v3488
        %v3490 = vpop.f32.mrb[0].mxu0
        %3491 = vmatprep.mubr.f32.mxu0 0.0
        %3492 = vmatmul.mubr.f32.gmra.mrb[0].mxu0 %v3410
        %v3493 = vpop.f32.mrb[0].mxu0
        %v3494 = vadd.f32 0.0, %v3493
        %v3495 = vpop.f32.mrb[0].mxu0
        %3496 = vdwg.mxu0
        %v3498 = vsel %vm876, %v2762, 0
        %v3501 = vsel %vm876, %v2835, 0
        %v3504 = vsel %vm876, %v2908, 0
        %v3507 = vsel %vm876, %v2981, 0
        %3509 = vmatprep.subr.mxu0 0.0
        %3510 = vmatpush1.msra.mxu0 %v2984
        %3511 = vmatprep.subr.mxu0 0.0
        %3512 = vmatpush1.msra.mxu0 %v2985
        %3513 = vmatprep.subr.mxu0 0.0
        %3514 = vmatpush1.msra.mxu0 %v2986
        %3515 = vmatprep.subr.mxu0 0.0
        %3516 = vmatpush1.msra.mxu0 %v2987
        %3517 = vmatprep.subr.mxu0 0.0
        %3518 = vmatpush1.msra.mxu0 0.0
        %3519 = vmatprep.subr.mxu0 0.0
        %3520 = vmatpush1.msra.mxu0 0.0
        %3521 = vmatprep.subr.mxu0 0.0
        %3522 = vmatpush1.msra.mxu0 0.0
        %3523 = vmatprep.subr.mxu0 0.0
        %3524 = vmatpush1.msra.mxu0 0.0
        %3525 = vmatprep.subr.mxu0 0.0
        %3526 = vmatpush1.msra.mxu0 0.0
        %3527 = vmatprep.subr.mxu0 0.0
        %3528 = vmatpush1.msra.mxu0 0.0
        %3529 = vmatprep.subr.mxu0 0.0
        %3530 = vmatpush1.msra.mxu0 0.0
        %3531 = vmatprep.subr.mxu0 0.0
        %3532 = vmatpush1.msra.mxu0 0.0
        %3533 = vmatprep.subr.mxu0 0.0
        %3534 = vmatpush1.msra.mxu0 0.0
        %3535 = vmatprep.subr.mxu0 0.0
        %3536 = vmatpush1.msra.mxu0 0.0
        %3537 = vmatprep.subr.mxu0 0.0
        %3538 = vmatpush1.msra.mxu0 0.0
        %3539 = vmatprep.subr.mxu0 0.0
        %3540 = vmatpush1.msra.mxu0 0.0
        %3541 = vmatprep.subr.mxu0 0.0
        %3542 = vmatpush1.msra.mxu0 0.0
        %3543 = vmatprep.subr.mxu0 0.0
        %3544 = vmatpush1.msra.mxu0 0.0
        %3545 = vmatprep.subr.mxu0 0.0
        %3546 = vmatpush1.msra.mxu0 0.0
        %3547 = vmatprep.subr.mxu0 0.0
        %3548 = vmatpush1.msra.mxu0 0.0
        %3549 = vmatprep.subr.mxu0 0.0
        %3550 = vmatpush1.msra.mxu0 0.0
        %3551 = vmatprep.subr.mxu0 0.0
        %3552 = vmatpush1.msra.mxu0 0.0
        %3553 = vmatprep.subr.mxu0 0.0
        %3554 = vmatpush1.msra.mxu0 0.0
        %3555 = vmatprep.subr.mxu0 0.0
        %3556 = vmatpush1.msra.mxu0 0.0
        %3557 = vmatprep.subr.mxu0 0.0
        %3558 = vmatpush1.msra.mxu0 0.0
        %3559 = vmatprep.subr.mxu0 0.0
        %3560 = vmatpush1.msra.mxu0 0.0
        %3561 = vmatprep.subr.mxu0 0.0
        %3562 = vmatpush1.msra.mxu0 0.0
        %3563 = vmatprep.subr.mxu0 0.0
        %3564 = vmatpush1.msra.mxu0 0.0
        %3565 = vmatprep.subr.mxu0 0.0
        %3566 = vmatpush1.msra.mxu0 0.0
        %3567 = vmatprep.subr.mxu0 0.0
        %3568 = vmatpush1.msra.mxu0 0.0
        %3569 = vmatprep.subr.mxu0 0.0
        %3570 = vmatpush1.msra.mxu0 0.0
        %3571 = vmatprep.subr.mxu0 0.0
        %3572 = vmatpush1.msra.mxu0 0.0
        %3573 = vmatprep.mubr.f32.mxu0 0.0
        %3574 = vmatmul.mubr.f32.gmra.mrb[0].mxu0 %v3498
        %v3575 = vpop.f32.mrb[0].mxu0
        %v3576 = vadd.f32 %v3479, %v3575
        %v3577 = vpop.f32.mrb[0].mxu0
        %3578 = vmatprep.mubr.f32.mxu0 0.0
        %3579 = vmatmul.mubr.f32.gmra.mrb[0].mxu0 %v3501
        %v3580 = vpop.f32.mrb[0].mxu0
        %v3581 = vadd.f32 %v3484, %v3580
        %v3582 = vpop.f32.mrb[0].mxu0
        %3583 = vmatprep.mubr.f32.mxu0 0.0
        %3584 = vmatmul.mubr.f32.gmra.mrb[0].mxu0 %v3504
        %v3585 = vpop.f32.mrb[0].mxu0
        %v3586 = vadd.f32 %v3489, %v3585
        %v3587 = vpop.f32.mrb[0].mxu0
        %3588 = vmatprep.mubr.f32.mxu0 0.0
        %3589 = vmatmul.mubr.f32.gmra.mrb[0].mxu0 %v3507
        %v3590 = vpop.f32.mrb[0].mxu0
        %v3591 = vadd.f32 %v3494, %v3590
        %v3592 = vpop.f32.mrb[0].mxu0
        %3593 = vdwg.mxu0
        %s3594 = sld [smem:[#allocation14 + $0x100]]
        %v3595 = vstv %s3594
        %v3596 = vmul.f32 %v1278, %v3595
        %v3597 = vmul.f32 %v1279, %v3595
        %v3598 = vmul.f32 %v1280, %v3595
        %v3599 = vmul.f32 %v1281, %v3595
        %v3600 = vmul.f32 %v1282, %v3595
        %v3601 = vmul.f32 %v1283, %v3595
        %v3602 = vmul.f32 %v1284, %v3595
        %v3603 = vmul.f32 %v1285, %v3595
        %s3604 = sld [smem:[#allocation14 + $0x101]]
        %v3605 = vstv %s3604
        %v3606 = vmul.f32 %v1719, %v3605
        %v3607 = vmul.f32 %v1720, %v3605
        %v3608 = vmul.f32 %v1721, %v3605
        %v3609 = vmul.f32 %v1722, %v3605
        %v3610 = vadd.f32 %v3596, %v3606
        %v3611 = vadd.f32 %v3597, %v3607
        %v3612 = vadd.f32 %v3598, %v3608
        %v3613 = vadd.f32 %v3599, %v3609
        %v3614 = vmul.f32 %v1723, %v3605
        %v3615 = vmul.f32 %v1724, %v3605
        %v3616 = vmul.f32 %v1725, %v3605
        %v3617 = vmul.f32 %v1726, %v3605
        %v3618 = vadd.f32 %v3600, %v3614
        %v3619 = vadd.f32 %v3601, %v3615
        %v3620 = vadd.f32 %v3602, %v3616
        %v3621 = vadd.f32 %v3603, %v3617
        %s3622 = sld [smem:[#allocation14 + $0x102]]
        %v3623 = vstv %s3622
        %v3624 = vmul.f32 %v2160, %v3623
        %v3625 = vmul.f32 %v2161, %v3623
        %v3626 = vmul.f32 %v2162, %v3623
        %v3627 = vmul.f32 %v2163, %v3623
        %v3628 = vadd.f32 %v3610, %v3624
        %v3629 = vadd.f32 %v3611, %v3625
        %v3630 = vadd.f32 %v3612, %v3626
        %v3631 = vadd.f32 %v3613, %v3627
        %v3632 = vmul.f32 %v2164, %v3623
        %v3633 = vmul.f32 %v2165, %v3623
        %v3634 = vmul.f32 %v2166, %v3623
        %v3635 = vmul.f32 %v2167, %v3623
        %v3636 = vadd.f32 %v3618, %v3632
        %v3637 = vadd.f32 %v3619, %v3633
        %v3638 = vadd.f32 %v3620, %v3634
        %v3639 = vadd.f32 %v3621, %v3635
        %s3640 = sld [smem:[#allocation14 + $0x103]]
        %v3641 = vstv %s3640
        %v3642 = vmul.f32 %v2601, %v3641
        %v3643 = vmul.f32 %v2602, %v3641
        %v3644 = vmul.f32 %v2603, %v3641
        %v3645 = vmul.f32 %v2604, %v3641
        %v3646 = vadd.f32 %v3628, %v3642
        %v3647 = vadd.f32 %v3629, %v3643
        %v3648 = vadd.f32 %v3630, %v3644
        %v3649 = vadd.f32 %v3631, %v3645
        %v3650 = vmul.f32 %v2605, %v3641
        %v3651 = vmul.f32 %v2606, %v3641
        %v3652 = vmul.f32 %v2607, %v3641
        %v3653 = vmul.f32 %v2608, %v3641
        %v3654 = vadd.f32 %v3636, %v3650
        %v3655 = vadd.f32 %v3637, %v3651
        %v3656 = vadd.f32 %v3638, %v3652
        %v3657 = vadd.f32 %v3639, %v3653
        %s3658 = sld [smem:[#allocation15 + $0x2]]
        %v3659 = vstv %s3658
        %v3660 = vadd.f32 %v3646, %v3659
        %v3661 = vadd.f32 %v3647, %v3659
        %v3662 = vadd.f32 %v3648, %v3659
        %v3663 = vadd.f32 %v3649, %v3659
        %v3664 = vadd.f32 %v3654, %v3659
        %v3665 = vadd.f32 %v3655, %v3659
        %v3666 = vadd.f32 %v3656, %v3659
        %v3667 = vadd.f32 %v3657, %v3659
        %v3668 = vld [vmem:[%s7 + $0x2] sm:$0x1]
        %v3669 = vlaneseq
        %v3670 = vshrl.u32 %v3669, 7
        %v3671 = vsub.s32 0, %v3670
        %v3672 = vrot.slane %v3668, %v3671
        %v3673 = vmul.f32 %v3664, %v3672
        %v3674 = vmul.f32 %v3665, %v3672
        %v3675 = vmul.f32 %v3666, %v3672
        %v3676 = vmul.f32 %v3667, %v3672
        %3677 = vrot.lane.b32.xlu0 %v837, 64
        %v3678 = vpop.permute.xlu0 %3677
        %3679 = vrot.lane.b32.xlu0 %v842, 64
        %v3680 = vpop.permute.xlu0 %3679
        %v3684 = vsel %vm1213, %v3660, 0
        %3686 = vmatprep.subr.mxu0 0.0
        %3687 = vmatpush1.msra.mxu0 %v3678
        %3688 = vmatprep.subr.mxu0 0.0
        %3689 = vmatpush1.msra.mxu0 %v3680
        %3690 = vmatprep.subr.mxu0 0.0
        %3691 = vmatpush1.msra.mxu0 0.0
        %3692 = vmatprep.subr.mxu0 0.0
        %3693 = vmatpush1.msra.mxu0 0.0
        %3694 = vmatprep.subr.mxu0 0.0
        %3695 = vmatpush1.msra.mxu0 0.0
        %3696 = vmatprep.subr.mxu0 0.0
        %3697 = vmatpush1.msra.mxu0 0.0
        %3698 = vmatprep.subr.mxu0 0.0
        %3699 = vmatpush1.msra.mxu0 0.0
        %3700 = vmatprep.subr.mxu0 0.0
        %3701 = vmatpush1.msra.mxu0 0.0
        %3702 = vmatprep.subr.mxu0 0.0
        %3703 = vmatpush1.msra.mxu0 0.0
        %3704 = vmatprep.subr.mxu0 0.0
        %3705 = vmatpush1.msra.mxu0 0.0
        %3706 = vmatprep.subr.mxu0 0.0
        %3707 = vmatpush1.msra.mxu0 0.0
        %3708 = vmatprep.subr.mxu0 0.0
        %3709 = vmatpush1.msra.mxu0 0.0
        %3710 = vmatprep.subr.mxu0 0.0
        %3711 = vmatpush1.msra.mxu0 0.0
        %3712 = vmatprep.subr.mxu0 0.0
        %3713 = vmatpush1.msra.mxu0 0.0
        %3714 = vmatprep.subr.mxu0 0.0
        %3715 = vmatpush1.msra.mxu0 0.0
        %3716 = vmatprep.subr.mxu0 0.0
        %3717 = vmatpush1.msra.mxu0 0.0
        %3718 = vmatprep.subr.mxu0 0.0
        %3719 = vmatpush1.msra.mxu0 0.0
        %3720 = vmatprep.subr.mxu0 0.0
        %3721 = vmatpush1.msra.mxu0 0.0
        %3722 = vmatprep.subr.mxu0 0.0
        %3723 = vmatpush1.msra.mxu0 0.0
        %3724 = vmatprep.subr.mxu0 0.0
        %3725 = vmatpush1.msra.mxu0 0.0
        %3726 = vmatprep.subr.mxu0 0.0
        %3727 = vmatpush1.msra.mxu0 0.0
        %3728 = vmatprep.subr.mxu0 0.0
        %3729 = vmatpush1.msra.mxu0 0.0
        %3730 = vmatprep.subr.mxu0 0.0
        %3731 = vmatpush1.msra.mxu0 0.0
        %3732 = vmatprep.subr.mxu0 0.0
        %3733 = vmatpush1.msra.mxu0 0.0
        %3734 = vmatprep.subr.mxu0 0.0
        %3735 = vmatpush1.msra.mxu0 0.0
        %3736 = vmatprep.subr.mxu0 0.0
        %3737 = vmatpush1.msra.mxu0 0.0
        %3738 = vmatprep.subr.mxu0 0.0
        %3739 = vmatpush1.msra.mxu0 0.0
        %3740 = vmatprep.subr.mxu0 0.0
        %3741 = vmatpush1.msra.mxu0 0.0
        %3742 = vmatprep.subr.mxu0 0.0
        %3743 = vmatpush1.msra.mxu0 0.0
        %3744 = vmatprep.subr.mxu0 0.0
        %3745 = vmatpush1.msra.mxu0 0.0
        %3746 = vmatprep.subr.mxu0 0.0
        %3747 = vmatpush1.msra.mxu0 0.0
        %3748 = vmatprep.subr.mxu0 0.0
        %3749 = vmatpush1.msra.mxu0 0.0
        %3750 = vmatprep.mubr.f32.mxu0 0.0
        %3751 = vmatmul.mubr.f32.gmra.mrb[0].mxu0 %v3684
        %v3752 = vpop.f32.mrb[0].mxu0
        %v3753 = vadd.f32 %v3673, %v3752
        %v3754 = vpop.f32.mrb[0].mxu0
        %3755 = vdwg.mxu0
        %3756 = vrot.lane.b32.xlu0 %v847, 64
        %v3757 = vpop.permute.xlu0 %3756
        %3758 = vrot.lane.b32.xlu0 %v852, 64
        %v3759 = vpop.permute.xlu0 %3758
        %v3763 = vsel %vm1213, %v3661, 0
        %3765 = vmatprep.subr.mxu0 0.0
        %3766 = vmatpush1.msra.mxu0 %v3757
        %3767 = vmatprep.subr.mxu0 0.0
        %3768 = vmatpush1.msra.mxu0 %v3759
        %3769 = vmatprep.subr.mxu0 0.0
        %3770 = vmatpush1.msra.mxu0 0.0
        %3771 = vmatprep.subr.mxu0 0.0
        %3772 = vmatpush1.msra.mxu0 0.0
        %3773 = vmatprep.subr.mxu0 0.0
        %3774 = vmatpush1.msra.mxu0 0.0
        %3775 = vmatprep.subr.mxu0 0.0
        %3776 = vmatpush1.msra.mxu0 0.0
        %3777 = vmatprep.subr.mxu0 0.0
        %3778 = vmatpush1.msra.mxu0 0.0
        %3779 = vmatprep.subr.mxu0 0.0
        %3780 = vmatpush1.msra.mxu0 0.0
        %3781 = vmatprep.subr.mxu0 0.0
        %3782 = vmatpush1.msra.mxu0 0.0
        %3783 = vmatprep.subr.mxu0 0.0
        %3784 = vmatpush1.msra.mxu0 0.0
        %3785 = vmatprep.subr.mxu0 0.0
        %3786 = vmatpush1.msra.mxu0 0.0
        %3787 = vmatprep.subr.mxu0 0.0
        %3788 = vmatpush1.msra.mxu0 0.0
        %3789 = vmatprep.subr.mxu0 0.0
        %3790 = vmatpush1.msra.mxu0 0.0
        %3791 = vmatprep.subr.mxu0 0.0
        %3792 = vmatpush1.msra.mxu0 0.0
        %3793 = vmatprep.subr.mxu0 0.0
        %3794 = vmatpush1.msra.mxu0 0.0
        %3795 = vmatprep.subr.mxu0 0.0
        %3796 = vmatpush1.msra.mxu0 0.0
        %3797 = vmatprep.subr.mxu0 0.0
        %3798 = vmatpush1.msra.mxu0 0.0
        %3799 = vmatprep.subr.mxu0 0.0
        %3800 = vmatpush1.msra.mxu0 0.0
        %3801 = vmatprep.subr.mxu0 0.0
        %3802 = vmatpush1.msra.mxu0 0.0
        %3803 = vmatprep.subr.mxu0 0.0
        %3804 = vmatpush1.msra.mxu0 0.0
        %3805 = vmatprep.subr.mxu0 0.0
        %3806 = vmatpush1.msra.mxu0 0.0
        %3807 = vmatprep.subr.mxu0 0.0
        %3808 = vmatpush1.msra.mxu0 0.0
        %3809 = vmatprep.subr.mxu0 0.0
        %3810 = vmatpush1.msra.mxu0 0.0
        %3811 = vmatprep.subr.mxu0 0.0
        %3812 = vmatpush1.msra.mxu0 0.0
        %3813 = vmatprep.subr.mxu0 0.0
        %3814 = vmatpush1.msra.mxu0 0.0
        %3815 = vmatprep.subr.mxu0 0.0
        %3816 = vmatpush1.msra.mxu0 0.0
        %3817 = vmatprep.subr.mxu0 0.0
        %3818 = vmatpush1.msra.mxu0 0.0
        %3819 = vmatprep.subr.mxu0 0.0
        %3820 = vmatpush1.msra.mxu0 0.0
        %3821 = vmatprep.subr.mxu0 0.0
        %3822 = vmatpush1.msra.mxu0 0.0
        %3823 = vmatprep.subr.mxu0 0.0
        %3824 = vmatpush1.msra.mxu0 0.0
        %3825 = vmatprep.subr.mxu0 0.0
        %3826 = vmatpush1.msra.mxu0 0.0
        %3827 = vmatprep.subr.mxu0 0.0
        %3828 = vmatpush1.msra.mxu0 0.0
        %3829 = vmatprep.mubr.f32.mxu0 0.0
        %3830 = vmatmul.mubr.f32.gmra.mrb[0].mxu0 %v3763
        %v3831 = vpop.f32.mrb[0].mxu0
        %v3832 = vadd.f32 %v3674, %v3831
        %v3833 = vpop.f32.mrb[0].mxu0
        %3834 = vdwg.mxu0
        %3835 = vrot.lane.b32.xlu0 %v857, 64
        %v3836 = vpop.permute.xlu0 %3835
        %3837 = vrot.lane.b32.xlu0 %v862, 64
        %v3838 = vpop.permute.xlu0 %3837
        %v3842 = vsel %vm1213, %v3662, 0
        %3844 = vmatprep.subr.mxu0 0.0
        %3845 = vmatpush1.msra.mxu0 %v3836
        %3846 = vmatprep.subr.mxu0 0.0
        %3847 = vmatpush1.msra.mxu0 %v3838
        %3848 = vmatprep.subr.mxu0 0.0
        %3849 = vmatpush1.msra.mxu0 0.0
        %3850 = vmatprep.subr.mxu0 0.0
        %3851 = vmatpush1.msra.mxu0 0.0
        %3852 = vmatprep.subr.mxu0 0.0
        %3853 = vmatpush1.msra.mxu0 0.0
        %3854 = vmatprep.subr.mxu0 0.0
        %3855 = vmatpush1.msra.mxu0 0.0
        %3856 = vmatprep.subr.mxu0 0.0
        %3857 = vmatpush1.msra.mxu0 0.0
        %3858 = vmatprep.subr.mxu0 0.0
        %3859 = vmatpush1.msra.mxu0 0.0
        %3860 = vmatprep.subr.mxu0 0.0
        %3861 = vmatpush1.msra.mxu0 0.0
        %3862 = vmatprep.subr.mxu0 0.0
        %3863 = vmatpush1.msra.mxu0 0.0
        %3864 = vmatprep.subr.mxu0 0.0
        %3865 = vmatpush1.msra.mxu0 0.0
        %3866 = vmatprep.subr.mxu0 0.0
        %3867 = vmatpush1.msra.mxu0 0.0
        %3868 = vmatprep.subr.mxu0 0.0
        %3869 = vmatpush1.msra.mxu0 0.0
        %3870 = vmatprep.subr.mxu0 0.0
        %3871 = vmatpush1.msra.mxu0 0.0
        %3872 = vmatprep.subr.mxu0 0.0
        %3873 = vmatpush1.msra.mxu0 0.0
        %3874 = vmatprep.subr.mxu0 0.0
        %3875 = vmatpush1.msra.mxu0 0.0
        %3876 = vmatprep.subr.mxu0 0.0
        %3877 = vmatpush1.msra.mxu0 0.0
        %3878 = vmatprep.subr.mxu0 0.0
        %3879 = vmatpush1.msra.mxu0 0.0
        %3880 = vmatprep.subr.mxu0 0.0
        %3881 = vmatpush1.msra.mxu0 0.0
        %3882 = vmatprep.subr.mxu0 0.0
        %3883 = vmatpush1.msra.mxu0 0.0
        %3884 = vmatprep.subr.mxu0 0.0
        %3885 = vmatpush1.msra.mxu0 0.0
        %3886 = vmatprep.subr.mxu0 0.0
        %3887 = vmatpush1.msra.mxu0 0.0
        %3888 = vmatprep.subr.mxu0 0.0
        %3889 = vmatpush1.msra.mxu0 0.0
        %3890 = vmatprep.subr.mxu0 0.0
        %3891 = vmatpush1.msra.mxu0 0.0
        %3892 = vmatprep.subr.mxu0 0.0
        %3893 = vmatpush1.msra.mxu0 0.0
        %3894 = vmatprep.subr.mxu0 0.0
        %3895 = vmatpush1.msra.mxu0 0.0
        %3896 = vmatprep.subr.mxu0 0.0
        %3897 = vmatpush1.msra.mxu0 0.0
        %3898 = vmatprep.subr.mxu0 0.0
        %3899 = vmatpush1.msra.mxu0 0.0
        %3900 = vmatprep.subr.mxu0 0.0
        %3901 = vmatpush1.msra.mxu0 0.0
        %3902 = vmatprep.subr.mxu0 0.0
        %3903 = vmatpush1.msra.mxu0 0.0
        %3904 = vmatprep.subr.mxu0 0.0
        %3905 = vmatpush1.msra.mxu0 0.0
        %3906 = vmatprep.subr.mxu0 0.0
        %3907 = vmatpush1.msra.mxu0 0.0
        %3908 = vmatprep.mubr.f32.mxu0 0.0
        %3909 = vmatmul.mubr.f32.gmra.mrb[0].mxu0 %v3842
        %v3910 = vpop.f32.mrb[0].mxu0
        %v3911 = vadd.f32 %v3675, %v3910
        %v3912 = vpop.f32.mrb[0].mxu0
        %3913 = vdwg.mxu0
        %3914 = vrot.lane.b32.xlu0 %v867, 64
        %v3915 = vpop.permute.xlu0 %3914
        %3916 = vrot.lane.b32.xlu0 %v872, 64
        %v3917 = vpop.permute.xlu0 %3916
        %v3921 = vsel %vm1213, %v3663, 0
        %3923 = vmatprep.subr.mxu0 0.0
        %3924 = vmatpush1.msra.mxu0 %v3915
        %3925 = vmatprep.subr.mxu0 0.0
        %3926 = vmatpush1.msra.mxu0 %v3917
        %3927 = vmatprep.subr.mxu0 0.0
        %3928 = vmatpush1.msra.mxu0 0.0
        %3929 = vmatprep.subr.mxu0 0.0
        %3930 = vmatpush1.msra.mxu0 0.0
        %3931 = vmatprep.subr.mxu0 0.0
        %3932 = vmatpush1.msra.mxu0 0.0
        %3933 = vmatprep.subr.mxu0 0.0
        %3934 = vmatpush1.msra.mxu0 0.0
        %3935 = vmatprep.subr.mxu0 0.0
        %3936 = vmatpush1.msra.mxu0 0.0
        %3937 = vmatprep.subr.mxu0 0.0
        %3938 = vmatpush1.msra.mxu0 0.0
        %3939 = vmatprep.subr.mxu0 0.0
        %3940 = vmatpush1.msra.mxu0 0.0
        %3941 = vmatprep.subr.mxu0 0.0
        %3942 = vmatpush1.msra.mxu0 0.0
        %3943 = vmatprep.subr.mxu0 0.0
        %3944 = vmatpush1.msra.mxu0 0.0
        %3945 = vmatprep.subr.mxu0 0.0
        %3946 = vmatpush1.msra.mxu0 0.0
        %3947 = vmatprep.subr.mxu0 0.0
        %3948 = vmatpush1.msra.mxu0 0.0
        %3949 = vmatprep.subr.mxu0 0.0
        %3950 = vmatpush1.msra.mxu0 0.0
        %3951 = vmatprep.subr.mxu0 0.0
        %3952 = vmatpush1.msra.mxu0 0.0
        %3953 = vmatprep.subr.mxu0 0.0
        %3954 = vmatpush1.msra.mxu0 0.0
        %3955 = vmatprep.subr.mxu0 0.0
        %3956 = vmatpush1.msra.mxu0 0.0
        %3957 = vmatprep.subr.mxu0 0.0
        %3958 = vmatpush1.msra.mxu0 0.0
        %3959 = vmatprep.subr.mxu0 0.0
        %3960 = vmatpush1.msra.mxu0 0.0
        %3961 = vmatprep.subr.mxu0 0.0
        %3962 = vmatpush1.msra.mxu0 0.0
        %3963 = vmatprep.subr.mxu0 0.0
        %3964 = vmatpush1.msra.mxu0 0.0
        %3965 = vmatprep.subr.mxu0 0.0
        %3966 = vmatpush1.msra.mxu0 0.0
        %3967 = vmatprep.subr.mxu0 0.0
        %3968 = vmatpush1.msra.mxu0 0.0
        %3969 = vmatprep.subr.mxu0 0.0
        %3970 = vmatpush1.msra.mxu0 0.0
        %3971 = vmatprep.subr.mxu0 0.0
        %3972 = vmatpush1.msra.mxu0 0.0
        %3973 = vmatprep.subr.mxu0 0.0
        %3974 = vmatpush1.msra.mxu0 0.0
        %3975 = vmatprep.subr.mxu0 0.0
        %3976 = vmatpush1.msra.mxu0 0.0
        %3977 = vmatprep.subr.mxu0 0.0
        %3978 = vmatpush1.msra.mxu0 0.0
        %3979 = vmatprep.subr.mxu0 0.0
        %3980 = vmatpush1.msra.mxu0 0.0
        %3981 = vmatprep.subr.mxu0 0.0
        %3982 = vmatpush1.msra.mxu0 0.0
        %3983 = vmatprep.subr.mxu0 0.0
        %3984 = vmatpush1.msra.mxu0 0.0
        %3985 = vmatprep.subr.mxu0 0.0
        %3986 = vmatpush1.msra.mxu0 0.0
        %3987 = vmatprep.mubr.f32.mxu0 0.0
        %3988 = vmatmul.mubr.f32.gmra.mrb[0].mxu0 %v3921
        %v3989 = vpop.f32.mrb[0].mxu0
        %v3990 = vadd.f32 %v3676, %v3989
        %v3991 = vpop.f32.mrb[0].mxu0
        %3992 = vdwg.mxu0
        %s3993 = scalar_lea.vmem [#allocation12], 64
        %v3994 = vld [vmem:[%s3993] sm:$0xff]
        %v3995 = vld [vmem:[%s3993 + $0x8] sm:$0xff]
        %v3996 = vld [vmem:[%s3993 + $0x10] sm:$0xff]
        %v3997 = vld [vmem:[%s3993 + $0x18] sm:$0xff]
        %v3999 = vsel %vm876, %v3753, 0
        %v4002 = vsel %vm876, %v3832, 0
        %v4005 = vsel %vm876, %v3911, 0
        %v4008 = vsel %vm876, %v3990, 0
        %4010 = vmatprep.subr.mxu0 0.0
        %4011 = vmatpush1.msra.mxu0 %v3994
        %4012 = vmatprep.subr.mxu0 0.0
        %4013 = vmatpush1.msra.mxu0 %v3995
        %4014 = vmatprep.subr.mxu0 0.0
        %4015 = vmatpush1.msra.mxu0 %v3996
        %4016 = vmatprep.subr.mxu0 0.0
        %4017 = vmatpush1.msra.mxu0 %v3997
        %4018 = vmatprep.subr.mxu0 0.0
        %4019 = vmatpush1.msra.mxu0 0.0
        %4020 = vmatprep.subr.mxu0 0.0
        %4021 = vmatpush1.msra.mxu0 0.0
        %4022 = vmatprep.subr.mxu0 0.0
        %4023 = vmatpush1.msra.mxu0 0.0
        %4024 = vmatprep.subr.mxu0 0.0
        %4025 = vmatpush1.msra.mxu0 0.0
        %4026 = vmatprep.subr.mxu0 0.0
        %4027 = vmatpush1.msra.mxu0 0.0
        %4028 = vmatprep.subr.mxu0 0.0
        %4029 = vmatpush1.msra.mxu0 0.0
        %4030 = vmatprep.subr.mxu0 0.0
        %4031 = vmatpush1.msra.mxu0 0.0
        %4032 = vmatprep.subr.mxu0 0.0
        %4033 = vmatpush1.msra.mxu0 0.0
        %4034 = vmatprep.subr.mxu0 0.0
        %4035 = vmatpush1.msra.mxu0 0.0
        %4036 = vmatprep.subr.mxu0 0.0
        %4037 = vmatpush1.msra.mxu0 0.0
        %4038 = vmatprep.subr.mxu0 0.0
        %4039 = vmatpush1.msra.mxu0 0.0
        %4040 = vmatprep.subr.mxu0 0.0
        %4041 = vmatpush1.msra.mxu0 0.0
        %4042 = vmatprep.subr.mxu0 0.0
        %4043 = vmatpush1.msra.mxu0 0.0
        %4044 = vmatprep.subr.mxu0 0.0
        %4045 = vmatpush1.msra.mxu0 0.0
        %4046 = vmatprep.subr.mxu0 0.0
        %4047 = vmatpush1.msra.mxu0 0.0
        %4048 = vmatprep.subr.mxu0 0.0
        %4049 = vmatpush1.msra.mxu0 0.0
        %4050 = vmatprep.subr.mxu0 0.0
        %4051 = vmatpush1.msra.mxu0 0.0
        %4052 = vmatprep.subr.mxu0 0.0
        %4053 = vmatpush1.msra.mxu0 0.0
        %4054 = vmatprep.subr.mxu0 0.0
        %4055 = vmatpush1.msra.mxu0 0.0
        %4056 = vmatprep.subr.mxu0 0.0
        %4057 = vmatpush1.msra.mxu0 0.0
        %4058 = vmatprep.subr.mxu0 0.0
        %4059 = vmatpush1.msra.mxu0 0.0
        %4060 = vmatprep.subr.mxu0 0.0
        %4061 = vmatpush1.msra.mxu0 0.0
        %4062 = vmatprep.subr.mxu0 0.0
        %4063 = vmatpush1.msra.mxu0 0.0
        %4064 = vmatprep.subr.mxu0 0.0
        %4065 = vmatpush1.msra.mxu0 0.0
        %4066 = vmatprep.subr.mxu0 0.0
        %4067 = vmatpush1.msra.mxu0 0.0
        %4068 = vmatprep.subr.mxu0 0.0
        %4069 = vmatpush1.msra.mxu0 0.0
        %4070 = vmatprep.subr.mxu0 0.0
        %4071 = vmatpush1.msra.mxu0 0.0
        %4072 = vmatprep.subr.mxu0 0.0
        %4073 = vmatpush1.msra.mxu0 0.0
        %4074 = vmatprep.mubr.f32.mxu0 0.0
        %4075 = vmatmul.mubr.f32.gmra.mrb[0].mxu0 %v3999
        %v4076 = vpop.f32.mrb[0].mxu0
        %v4077 = vadd.f32 0.0, %v4076
        %v4078 = vpop.f32.mrb[0].mxu0
        %4079 = vmatprep.mubr.f32.mxu0 0.0
        %4080 = vmatmul.mubr.f32.gmra.mrb[0].mxu0 %v4002
        %v4081 = vpop.f32.mrb[0].mxu0
        %v4082 = vadd.f32 0.0, %v4081
        %v4083 = vpop.f32.mrb[0].mxu0
        %4084 = vmatprep.mubr.f32.mxu0 0.0
        %4085 = vmatmul.mubr.f32.gmra.mrb[0].mxu0 %v4005
        %v4086 = vpop.f32.mrb[0].mxu0
        %v4087 = vadd.f32 0.0, %v4086
        %v4088 = vpop.f32.mrb[0].mxu0
        %4089 = vmatprep.mubr.f32.mxu0 0.0
        %4090 = vmatmul.mubr.f32.gmra.mrb[0].mxu0 %v4008
        %v4091 = vpop.f32.mrb[0].mxu0
        %v4092 = vadd.f32 0.0, %v4091
        %v4093 = vpop.f32.mrb[0].mxu0
        %4094 = vdwg.mxu0
        %v4095 = vadd.f32 %v3576, %v4077
        %v4096 = vadd.f32 %v3581, %v4082
        %v4097 = vadd.f32 %v3586, %v4087
        %v4098 = vadd.f32 %v3591, %v4092
        %s4099 = sld [smem:[#allocation14 + $0x180]]
        %v4100 = vstv %s4099
        %v4101 = vmul.f32 %v1278, %v4100
        %v4102 = vmul.f32 %v1279, %v4100
        %v4103 = vmul.f32 %v1280, %v4100
        %v4104 = vmul.f32 %v1281, %v4100
        %v4105 = vmul.f32 %v1282, %v4100
        %v4106 = vmul.f32 %v1283, %v4100
        %v4107 = vmul.f32 %v1284, %v4100
        %v4108 = vmul.f32 %v1285, %v4100
        %s4109 = sld [smem:[#allocation14 + $0x181]]
        %v4110 = vstv %s4109
        %v4111 = vmul.f32 %v1719, %v4110
        %v4112 = vmul.f32 %v1720, %v4110
        %v4113 = vmul.f32 %v1721, %v4110
        %v4114 = vmul.f32 %v1722, %v4110
        %v4115 = vadd.f32 %v4101, %v4111
        %v4116 = vadd.f32 %v4102, %v4112
        %v4117 = vadd.f32 %v4103, %v4113
        %v4118 = vadd.f32 %v4104, %v4114
        %v4119 = vmul.f32 %v1723, %v4110
        %v4120 = vmul.f32 %v1724, %v4110
        %v4121 = vmul.f32 %v1725, %v4110
        %v4122 = vmul.f32 %v1726, %v4110
        %v4123 = vadd.f32 %v4105, %v4119
        %v4124 = vadd.f32 %v4106, %v4120
        %v4125 = vadd.f32 %v4107, %v4121
        %v4126 = vadd.f32 %v4108, %v4122
        %s4127 = sld [smem:[#allocation14 + $0x182]]
        %v4128 = vstv %s4127
        %v4129 = vmul.f32 %v2160, %v4128
        %v4130 = vmul.f32 %v2161, %v4128
        %v4131 = vmul.f32 %v2162, %v4128
        %v4132 = vmul.f32 %v2163, %v4128
        %v4133 = vadd.f32 %v4115, %v4129
        %v4134 = vadd.f32 %v4116, %v4130
        %v4135 = vadd.f32 %v4117, %v4131
        %v4136 = vadd.f32 %v4118, %v4132
        %v4137 = vmul.f32 %v2164, %v4128
        %v4138 = vmul.f32 %v2165, %v4128
        %v4139 = vmul.f32 %v2166, %v4128
        %v4140 = vmul.f32 %v2167, %v4128
        %v4141 = vadd.f32 %v4123, %v4137
        %v4142 = vadd.f32 %v4124, %v4138
        %v4143 = vadd.f32 %v4125, %v4139
        %v4144 = vadd.f32 %v4126, %v4140
        %s4145 = sld [smem:[#allocation14 + $0x183]]
        %v4146 = vstv %s4145
        %v4147 = vmul.f32 %v2601, %v4146
        %v4148 = vmul.f32 %v2602, %v4146
        %v4149 = vmul.f32 %v2603, %v4146
        %v4150 = vmul.f32 %v2604, %v4146
        %v4151 = vadd.f32 %v4133, %v4147
        %v4152 = vadd.f32 %v4134, %v4148
        %v4153 = vadd.f32 %v4135, %v4149
        %v4154 = vadd.f32 %v4136, %v4150
        %v4155 = vmul.f32 %v2605, %v4146
        %v4156 = vmul.f32 %v2606, %v4146
        %v4157 = vmul.f32 %v2607, %v4146
        %v4158 = vmul.f32 %v2608, %v4146
        %v4159 = vadd.f32 %v4141, %v4155
        %v4160 = vadd.f32 %v4142, %v4156
        %v4161 = vadd.f32 %v4143, %v4157
        %v4162 = vadd.f32 %v4144, %v4158
        %s4163 = sld [smem:[#allocation15 + $0x3]]
        %v4164 = vstv %s4163
        %v4165 = vadd.f32 %v4151, %v4164
        %v4166 = vadd.f32 %v4152, %v4164
        %v4167 = vadd.f32 %v4153, %v4164
        %v4168 = vadd.f32 %v4154, %v4164
        %v4169 = vadd.f32 %v4159, %v4164
        %v4170 = vadd.f32 %v4160, %v4164
        %v4171 = vadd.f32 %v4161, %v4164
        %v4172 = vadd.f32 %v4162, %v4164
        %v4173 = vld [vmem:[%s7 + $0x3] sm:$0x1]
        %v4174 = vlaneseq
        %v4175 = vshrl.u32 %v4174, 7
        %v4176 = vsub.s32 0, %v4175
        %v4177 = vrot.slane %v4173, %v4176
        %v4178 = vmul.f32 %v4169, %v4177
        %v4179 = vmul.f32 %v4170, %v4177
        %v4180 = vmul.f32 %v4171, %v4177
        %v4181 = vmul.f32 %v4172, %v4177
        %4182 = vrot.lane.b32.xlu0 %v837, 32
        %v4183 = vpop.permute.xlu0 %4182
        %4184 = vrot.lane.b32.xlu0 %v842, 32
        %v4185 = vpop.permute.xlu0 %4184
        %v4189 = vsel %vm1213, %v4165, 0
        %4191 = vmatprep.subr.mxu0 0.0
        %4192 = vmatpush1.msra.mxu0 %v4183
        %4193 = vmatprep.subr.mxu0 0.0
        %4194 = vmatpush1.msra.mxu0 %v4185
        %4195 = vmatprep.subr.mxu0 0.0
        %4196 = vmatpush1.msra.mxu0 0.0
        %4197 = vmatprep.subr.mxu0 0.0
        %4198 = vmatpush1.msra.mxu0 0.0
        %4199 = vmatprep.subr.mxu0 0.0
        %4200 = vmatpush1.msra.mxu0 0.0
        %4201 = vmatprep.subr.mxu0 0.0
        %4202 = vmatpush1.msra.mxu0 0.0
        %4203 = vmatprep.subr.mxu0 0.0
        %4204 = vmatpush1.msra.mxu0 0.0
        %4205 = vmatprep.subr.mxu0 0.0
        %4206 = vmatpush1.msra.mxu0 0.0
        %4207 = vmatprep.subr.mxu0 0.0
        %4208 = vmatpush1.msra.mxu0 0.0
        %4209 = vmatprep.subr.mxu0 0.0
        %4210 = vmatpush1.msra.mxu0 0.0
        %4211 = vmatprep.subr.mxu0 0.0
        %4212 = vmatpush1.msra.mxu0 0.0
        %4213 = vmatprep.subr.mxu0 0.0
        %4214 = vmatpush1.msra.mxu0 0.0
        %4215 = vmatprep.subr.mxu0 0.0
        %4216 = vmatpush1.msra.mxu0 0.0
        %4217 = vmatprep.subr.mxu0 0.0
        %4218 = vmatpush1.msra.mxu0 0.0
        %4219 = vmatprep.subr.mxu0 0.0
        %4220 = vmatpush1.msra.mxu0 0.0
        %4221 = vmatprep.subr.mxu0 0.0
        %4222 = vmatpush1.msra.mxu0 0.0
        %4223 = vmatprep.subr.mxu0 0.0
        %4224 = vmatpush1.msra.mxu0 0.0
        %4225 = vmatprep.subr.mxu0 0.0
        %4226 = vmatpush1.msra.mxu0 0.0
        %4227 = vmatprep.subr.mxu0 0.0
        %4228 = vmatpush1.msra.mxu0 0.0
        %4229 = vmatprep.subr.mxu0 0.0
        %4230 = vmatpush1.msra.mxu0 0.0
        %4231 = vmatprep.subr.mxu0 0.0
        %4232 = vmatpush1.msra.mxu0 0.0
        %4233 = vmatprep.subr.mxu0 0.0
        %4234 = vmatpush1.msra.mxu0 0.0
        %4235 = vmatprep.subr.mxu0 0.0
        %4236 = vmatpush1.msra.mxu0 0.0
        %4237 = vmatprep.subr.mxu0 0.0
        %4238 = vmatpush1.msra.mxu0 0.0
        %4239 = vmatprep.subr.mxu0 0.0
        %4240 = vmatpush1.msra.mxu0 0.0
        %4241 = vmatprep.subr.mxu0 0.0
        %4242 = vmatpush1.msra.mxu0 0.0
        %4243 = vmatprep.subr.mxu0 0.0
        %4244 = vmatpush1.msra.mxu0 0.0
        %4245 = vmatprep.subr.mxu0 0.0
        %4246 = vmatpush1.msra.mxu0 0.0
        %4247 = vmatprep.subr.mxu0 0.0
        %4248 = vmatpush1.msra.mxu0 0.0
        %4249 = vmatprep.subr.mxu0 0.0
        %4250 = vmatpush1.msra.mxu0 0.0
        %4251 = vmatprep.subr.mxu0 0.0
        %4252 = vmatpush1.msra.mxu0 0.0
        %4253 = vmatprep.subr.mxu0 0.0
        %4254 = vmatpush1.msra.mxu0 0.0
        %4255 = vmatprep.mubr.f32.mxu0 0.0
        %4256 = vmatmul.mubr.f32.gmra.mrb[0].mxu0 %v4189
        %v4257 = vpop.f32.mrb[0].mxu0
        %v4258 = vadd.f32 %v4178, %v4257
        %v4259 = vpop.f32.mrb[0].mxu0
        %4260 = vdwg.mxu0
        %4261 = vrot.lane.b32.xlu0 %v847, 32
        %v4262 = vpop.permute.xlu0 %4261
        %4263 = vrot.lane.b32.xlu0 %v852, 32
        %v4264 = vpop.permute.xlu0 %4263
        %v4268 = vsel %vm1213, %v4166, 0
        %4270 = vmatprep.subr.mxu0 0.0
        %4271 = vmatpush1.msra.mxu0 %v4262
        %4272 = vmatprep.subr.mxu0 0.0
        %4273 = vmatpush1.msra.mxu0 %v4264
        %4274 = vmatprep.subr.mxu0 0.0
        %4275 = vmatpush1.msra.mxu0 0.0
        %4276 = vmatprep.subr.mxu0 0.0
        %4277 = vmatpush1.msra.mxu0 0.0
        %4278 = vmatprep.subr.mxu0 0.0
        %4279 = vmatpush1.msra.mxu0 0.0
        %4280 = vmatprep.subr.mxu0 0.0
        %4281 = vmatpush1.msra.mxu0 0.0
        %4282 = vmatprep.subr.mxu0 0.0
        %4283 = vmatpush1.msra.mxu0 0.0
        %4284 = vmatprep.subr.mxu0 0.0
        %4285 = vmatpush1.msra.mxu0 0.0
        %4286 = vmatprep.subr.mxu0 0.0
        %4287 = vmatpush1.msra.mxu0 0.0
        %4288 = vmatprep.subr.mxu0 0.0
        %4289 = vmatpush1.msra.mxu0 0.0
        %4290 = vmatprep.subr.mxu0 0.0
        %4291 = vmatpush1.msra.mxu0 0.0
        %4292 = vmatprep.subr.mxu0 0.0
        %4293 = vmatpush1.msra.mxu0 0.0
        %4294 = vmatprep.subr.mxu0 0.0
        %4295 = vmatpush1.msra.mxu0 0.0
        %4296 = vmatprep.subr.mxu0 0.0
        %4297 = vmatpush1.msra.mxu0 0.0
        %4298 = vmatprep.subr.mxu0 0.0
        %4299 = vmatpush1.msra.mxu0 0.0
        %4300 = vmatprep.subr.mxu0 0.0
        %4301 = vmatpush1.msra.mxu0 0.0
        %4302 = vmatprep.subr.mxu0 0.0
        %4303 = vmatpush1.msra.mxu0 0.0
        %4304 = vmatprep.subr.mxu0 0.0
        %4305 = vmatpush1.msra.mxu0 0.0
        %4306 = vmatprep.subr.mxu0 0.0
        %4307 = vmatpush1.msra.mxu0 0.0
        %4308 = vmatprep.subr.mxu0 0.0
        %4309 = vmatpush1.msra.mxu0 0.0
        %4310 = vmatprep.subr.mxu0 0.0
        %4311 = vmatpush1.msra.mxu0 0.0
        %4312 = vmatprep.subr.mxu0 0.0
        %4313 = vmatpush1.msra.mxu0 0.0
        %4314 = vmatprep.subr.mxu0 0.0
        %4315 = vmatpush1.msra.mxu0 0.0
        %4316 = vmatprep.subr.mxu0 0.0
        %4317 = vmatpush1.msra.mxu0 0.0
        %4318 = vmatprep.subr.mxu0 0.0
        %4319 = vmatpush1.msra.mxu0 0.0
        %4320 = vmatprep.subr.mxu0 0.0
        %4321 = vmatpush1.msra.mxu0 0.0
        %4322 = vmatprep.subr.mxu0 0.0
        %4323 = vmatpush1.msra.mxu0 0.0
        %4324 = vmatprep.subr.mxu0 0.0
        %4325 = vmatpush1.msra.mxu0 0.0
        %4326 = vmatprep.subr.mxu0 0.0
        %4327 = vmatpush1.msra.mxu0 0.0
        %4328 = vmatprep.subr.mxu0 0.0
        %4329 = vmatpush1.msra.mxu0 0.0
        %4330 = vmatprep.subr.mxu0 0.0
        %4331 = vmatpush1.msra.mxu0 0.0
        %4332 = vmatprep.subr.mxu0 0.0
        %4333 = vmatpush1.msra.mxu0 0.0
        %4334 = vmatprep.mubr.f32.mxu0 0.0
        %4335 = vmatmul.mubr.f32.gmra.mrb[0].mxu0 %v4268
        %v4336 = vpop.f32.mrb[0].mxu0
        %v4337 = vadd.f32 %v4179, %v4336
        %v4338 = vpop.f32.mrb[0].mxu0
        %4339 = vdwg.mxu0
        %4340 = vrot.lane.b32.xlu0 %v857, 32
        %v4341 = vpop.permute.xlu0 %4340
        %4342 = vrot.lane.b32.xlu0 %v862, 32
        %v4343 = vpop.permute.xlu0 %4342
        %v4347 = vsel %vm1213, %v4167, 0
        %4349 = vmatprep.subr.mxu0 0.0
        %4350 = vmatpush1.msra.mxu0 %v4341
        %4351 = vmatprep.subr.mxu0 0.0
        %4352 = vmatpush1.msra.mxu0 %v4343
        %4353 = vmatprep.subr.mxu0 0.0
        %4354 = vmatpush1.msra.mxu0 0.0
        %4355 = vmatprep.subr.mxu0 0.0
        %4356 = vmatpush1.msra.mxu0 0.0
        %4357 = vmatprep.subr.mxu0 0.0
        %4358 = vmatpush1.msra.mxu0 0.0
        %4359 = vmatprep.subr.mxu0 0.0
        %4360 = vmatpush1.msra.mxu0 0.0
        %4361 = vmatprep.subr.mxu0 0.0
        %4362 = vmatpush1.msra.mxu0 0.0
        %4363 = vmatprep.subr.mxu0 0.0
        %4364 = vmatpush1.msra.mxu0 0.0
        %4365 = vmatprep.subr.mxu0 0.0
        %4366 = vmatpush1.msra.mxu0 0.0
        %4367 = vmatprep.subr.mxu0 0.0
        %4368 = vmatpush1.msra.mxu0 0.0
        %4369 = vmatprep.subr.mxu0 0.0
        %4370 = vmatpush1.msra.mxu0 0.0
        %4371 = vmatprep.subr.mxu0 0.0
        %4372 = vmatpush1.msra.mxu0 0.0
        %4373 = vmatprep.subr.mxu0 0.0
        %4374 = vmatpush1.msra.mxu0 0.0
        %4375 = vmatprep.subr.mxu0 0.0
        %4376 = vmatpush1.msra.mxu0 0.0
        %4377 = vmatprep.subr.mxu0 0.0
        %4378 = vmatpush1.msra.mxu0 0.0
        %4379 = vmatprep.subr.mxu0 0.0
        %4380 = vmatpush1.msra.mxu0 0.0
        %4381 = vmatprep.subr.mxu0 0.0
        %4382 = vmatpush1.msra.mxu0 0.0
        %4383 = vmatprep.subr.mxu0 0.0
        %4384 = vmatpush1.msra.mxu0 0.0
        %4385 = vmatprep.subr.mxu0 0.0
        %4386 = vmatpush1.msra.mxu0 0.0
        %4387 = vmatprep.subr.mxu0 0.0
        %4388 = vmatpush1.msra.mxu0 0.0
        %4389 = vmatprep.subr.mxu0 0.0
        %4390 = vmatpush1.msra.mxu0 0.0
        %4391 = vmatprep.subr.mxu0 0.0
        %4392 = vmatpush1.msra.mxu0 0.0
        %4393 = vmatprep.subr.mxu0 0.0
        %4394 = vmatpush1.msra.mxu0 0.0
        %4395 = vmatprep.subr.mxu0 0.0
        %4396 = vmatpush1.msra.mxu0 0.0
        %4397 = vmatprep.subr.mxu0 0.0
        %4398 = vmatpush1.msra.mxu0 0.0
        %4399 = vmatprep.subr.mxu0 0.0
        %4400 = vmatpush1.msra.mxu0 0.0
        %4401 = vmatprep.subr.mxu0 0.0
        %4402 = vmatpush1.msra.mxu0 0.0
        %4403 = vmatprep.subr.mxu0 0.0
        %4404 = vmatpush1.msra.mxu0 0.0
        %4405 = vmatprep.subr.mxu0 0.0
        %4406 = vmatpush1.msra.mxu0 0.0
        %4407 = vmatprep.subr.mxu0 0.0
        %4408 = vmatpush1.msra.mxu0 0.0
        %4409 = vmatprep.subr.mxu0 0.0
        %4410 = vmatpush1.msra.mxu0 0.0
        %4411 = vmatprep.subr.mxu0 0.0
        %4412 = vmatpush1.msra.mxu0 0.0
        %4413 = vmatprep.mubr.f32.mxu0 0.0
        %4414 = vmatmul.mubr.f32.gmra.mrb[0].mxu0 %v4347
        %v4415 = vpop.f32.mrb[0].mxu0
        %v4416 = vadd.f32 %v4180, %v4415
        %v4417 = vpop.f32.mrb[0].mxu0
        %4418 = vdwg.mxu0
        %4419 = vrot.lane.b32.xlu0 %v867, 32
        %v4420 = vpop.permute.xlu0 %4419
        %4421 = vrot.lane.b32.xlu0 %v872, 32
        %v4422 = vpop.permute.xlu0 %4421
        %v4426 = vsel %vm1213, %v4168, 0
        %4428 = vmatprep.subr.mxu0 0.0
        %4429 = vmatpush1.msra.mxu0 %v4420
        %4430 = vmatprep.subr.mxu0 0.0
        %4431 = vmatpush1.msra.mxu0 %v4422
        %4432 = vmatprep.subr.mxu0 0.0
        %4433 = vmatpush1.msra.mxu0 0.0
        %4434 = vmatprep.subr.mxu0 0.0
        %4435 = vmatpush1.msra.mxu0 0.0
        %4436 = vmatprep.subr.mxu0 0.0
        %4437 = vmatpush1.msra.mxu0 0.0
        %4438 = vmatprep.subr.mxu0 0.0
        %4439 = vmatpush1.msra.mxu0 0.0
        %4440 = vmatprep.subr.mxu0 0.0
        %4441 = vmatpush1.msra.mxu0 0.0
        %4442 = vmatprep.subr.mxu0 0.0
        %4443 = vmatpush1.msra.mxu0 0.0
        %4444 = vmatprep.subr.mxu0 0.0
        %4445 = vmatpush1.msra.mxu0 0.0
        %4446 = vmatprep.subr.mxu0 0.0
        %4447 = vmatpush1.msra.mxu0 0.0
        %4448 = vmatprep.subr.mxu0 0.0
        %4449 = vmatpush1.msra.mxu0 0.0
        %4450 = vmatprep.subr.mxu0 0.0
        %4451 = vmatpush1.msra.mxu0 0.0
        %4452 = vmatprep.subr.mxu0 0.0
        %4453 = vmatpush1.msra.mxu0 0.0
        %4454 = vmatprep.subr.mxu0 0.0
        %4455 = vmatpush1.msra.mxu0 0.0
        %4456 = vmatprep.subr.mxu0 0.0
        %4457 = vmatpush1.msra.mxu0 0.0
        %4458 = vmatprep.subr.mxu0 0.0
        %4459 = vmatpush1.msra.mxu0 0.0
        %4460 = vmatprep.subr.mxu0 0.0
        %4461 = vmatpush1.msra.mxu0 0.0
        %4462 = vmatprep.subr.mxu0 0.0
        %4463 = vmatpush1.msra.mxu0 0.0
        %4464 = vmatprep.subr.mxu0 0.0
        %4465 = vmatpush1.msra.mxu0 0.0
        %4466 = vmatprep.subr.mxu0 0.0
        %4467 = vmatpush1.msra.mxu0 0.0
        %4468 = vmatprep.subr.mxu0 0.0
        %4469 = vmatpush1.msra.mxu0 0.0
        %4470 = vmatprep.subr.mxu0 0.0
        %4471 = vmatpush1.msra.mxu0 0.0
        %4472 = vmatprep.subr.mxu0 0.0
        %4473 = vmatpush1.msra.mxu0 0.0
        %4474 = vmatprep.subr.mxu0 0.0
        %4475 = vmatpush1.msra.mxu0 0.0
        %4476 = vmatprep.subr.mxu0 0.0
        %4477 = vmatpush1.msra.mxu0 0.0
        %4478 = vmatprep.subr.mxu0 0.0
        %4479 = vmatpush1.msra.mxu0 0.0
        %4480 = vmatprep.subr.mxu0 0.0
        %4481 = vmatpush1.msra.mxu0 0.0
        %4482 = vmatprep.subr.mxu0 0.0
        %4483 = vmatpush1.msra.mxu0 0.0
        %4484 = vmatprep.subr.mxu0 0.0
        %4485 = vmatpush1.msra.mxu0 0.0
        %4486 = vmatprep.subr.mxu0 0.0
        %4487 = vmatpush1.msra.mxu0 0.0
        %4488 = vmatprep.subr.mxu0 0.0
        %4489 = vmatpush1.msra.mxu0 0.0
        %4490 = vmatprep.subr.mxu0 0.0
        %4491 = vmatpush1.msra.mxu0 0.0
        %4492 = vmatprep.mubr.f32.mxu0 0.0
        %4493 = vmatmul.mubr.f32.gmra.mrb[0].mxu0 %v4426
        %v4494 = vpop.f32.mrb[0].mxu0
        %v4495 = vadd.f32 %v4181, %v4494
        %v4496 = vpop.f32.mrb[0].mxu0
        %4497 = vdwg.mxu0
        %s4498 = scalar_lea.vmem [#allocation12], 96
        %v4499 = vld [vmem:[%s4498] sm:$0xff]
        %v4500 = vld [vmem:[%s4498 + $0x8] sm:$0xff]
        %v4501 = vld [vmem:[%s4498 + $0x10] sm:$0xff]
        %v4502 = vld [vmem:[%s4498 + $0x18] sm:$0xff]
        %v4504 = vsel %vm876, %v4258, 0
        %v4507 = vsel %vm876, %v4337, 0
        %v4510 = vsel %vm876, %v4416, 0
        %v4513 = vsel %vm876, %v4495, 0
        %4515 = vmatprep.subr.mxu0 0.0
        %4516 = vmatpush1.msra.mxu0 %v4499
        %4517 = vmatprep.subr.mxu0 0.0
        %4518 = vmatpush1.msra.mxu0 %v4500
        %4519 = vmatprep.subr.mxu0 0.0
        %4520 = vmatpush1.msra.mxu0 %v4501
        %4521 = vmatprep.subr.mxu0 0.0
        %4522 = vmatpush1.msra.mxu0 %v4502
        %4523 = vmatprep.subr.mxu0 0.0
        %4524 = vmatpush1.msra.mxu0 0.0
        %4525 = vmatprep.subr.mxu0 0.0
        %4526 = vmatpush1.msra.mxu0 0.0
        %4527 = vmatprep.subr.mxu0 0.0
        %4528 = vmatpush1.msra.mxu0 0.0
        %4529 = vmatprep.subr.mxu0 0.0
        %4530 = vmatpush1.msra.mxu0 0.0
        %4531 = vmatprep.subr.mxu0 0.0
        %4532 = vmatpush1.msra.mxu0 0.0
        %4533 = vmatprep.subr.mxu0 0.0
        %4534 = vmatpush1.msra.mxu0 0.0
        %4535 = vmatprep.subr.mxu0 0.0
        %4536 = vmatpush1.msra.mxu0 0.0
        %4537 = vmatprep.subr.mxu0 0.0
        %4538 = vmatpush1.msra.mxu0 0.0
        %4539 = vmatprep.subr.mxu0 0.0
        %4540 = vmatpush1.msra.mxu0 0.0
        %4541 = vmatprep.subr.mxu0 0.0
        %4542 = vmatpush1.msra.mxu0 0.0
        %4543 = vmatprep.subr.mxu0 0.0
        %4544 = vmatpush1.msra.mxu0 0.0
        %4545 = vmatprep.subr.mxu0 0.0
        %4546 = vmatpush1.msra.mxu0 0.0
        %4547 = vmatprep.subr.mxu0 0.0
        %4548 = vmatpush1.msra.mxu0 0.0
        %4549 = vmatprep.subr.mxu0 0.0
        %4550 = vmatpush1.msra.mxu0 0.0
        %4551 = vmatprep.subr.mxu0 0.0
        %4552 = vmatpush1.msra.mxu0 0.0
        %4553 = vmatprep.subr.mxu0 0.0
        %4554 = vmatpush1.msra.mxu0 0.0
        %4555 = vmatprep.subr.mxu0 0.0
        %4556 = vmatpush1.msra.mxu0 0.0
        %4557 = vmatprep.subr.mxu0 0.0
        %4558 = vmatpush1.msra.mxu0 0.0
        %4559 = vmatprep.subr.mxu0 0.0
        %4560 = vmatpush1.msra.mxu0 0.0
        %4561 = vmatprep.subr.mxu0 0.0
        %4562 = vmatpush1.msra.mxu0 0.0
        %4563 = vmatprep.subr.mxu0 0.0
        %4564 = vmatpush1.msra.mxu0 0.0
        %4565 = vmatprep.subr.mxu0 0.0
        %4566 = vmatpush1.msra.mxu0 0.0
        %4567 = vmatprep.subr.mxu0 0.0
        %4568 = vmatpush1.msra.mxu0 0.0
        %4569 = vmatprep.subr.mxu0 0.0
        %4570 = vmatpush1.msra.mxu0 0.0
        %4571 = vmatprep.subr.mxu0 0.0
        %4572 = vmatpush1.msra.mxu0 0.0
        %4573 = vmatprep.subr.mxu0 0.0
        %4574 = vmatpush1.msra.mxu0 0.0
        %4575 = vmatprep.subr.mxu0 0.0
        %4576 = vmatpush1.msra.mxu0 0.0
        %4577 = vmatprep.subr.mxu0 0.0
        %4578 = vmatpush1.msra.mxu0 0.0
        %4579 = vmatprep.mubr.f32.mxu0 0.0
        %4580 = vmatmul.mubr.f32.gmra.mrb[0].mxu0 %v4504
        %v4581 = vpop.f32.mrb[0].mxu0
        %v4582 = vadd.f32 0.0, %v4581
        %v4583 = vpop.f32.mrb[0].mxu0
        %4584 = vmatprep.mubr.f32.mxu0 0.0
        %4585 = vmatmul.mubr.f32.gmra.mrb[0].mxu0 %v4507
        %v4586 = vpop.f32.mrb[0].mxu0
        %v4587 = vadd.f32 0.0, %v4586
        %v4588 = vpop.f32.mrb[0].mxu0
        %4589 = vmatprep.mubr.f32.mxu0 0.0
        %4590 = vmatmul.mubr.f32.gmra.mrb[0].mxu0 %v4510
        %v4591 = vpop.f32.mrb[0].mxu0
        %v4592 = vadd.f32 0.0, %v4591
        %v4593 = vpop.f32.mrb[0].mxu0
        %4594 = vmatprep.mubr.f32.mxu0 0.0
        %4595 = vmatmul.mubr.f32.gmra.mrb[0].mxu0 %v4513
        %v4596 = vpop.f32.mrb[0].mxu0
        %v4597 = vadd.f32 0.0, %v4596
        %v4598 = vpop.f32.mrb[0].mxu0
        %4599 = vdwg.mxu0
        %v4600 = vadd.f32 %v4095, %v4582
        %v4601 = vadd.f32 %v4096, %v4587
        %v4602 = vadd.f32 %v4097, %v4592
        %v4603 = vadd.f32 %v4098, %v4597
        %4604 = vst [vmem:[%s503] sm:$0xff] %v4600
        %4605 = vst [vmem:[%s503 + $0x8] sm:$0xff] %v4601
        %4606 = vst [vmem:[%s503 + $0x10] sm:$0xff] %v4602
        %4607 = vst [vmem:[%s503 + $0x18] sm:$0xff] %v4603
        %s4608 = sand.u32 %s262, 1
        %s4609 = scalar_lea.sflag [#allocation4], %s4608
        %s4610 = sand.u32 %s262, 1
        %s4611 = smul.addr %s4610, 32
        %s4612 = scalar_lea.vmem [#allocation17], %s4611
        // Predicated region
        $region93: #{tpu_custom_call.1} parent=59 // pred_check
          %p4613 = pneg %p272
        $region94: #{tpu_custom_call.1} parent=59 // pred_check_branch
          %4615 = sbr.rel (%p4613) target = $region96
        $region95: #{tpu_custom_call.1} parent=59 // pred_region
          %s4616 = smul.u32 4, %s34
          %s4618 = ssub.s32 512, 512
          %4619 = vsyncadd %s4609, %s4618
          %s4620 = smul.addr %s4616, 128
          %s4621 = scalar_lea.hbm %s10, %s4620
          %s4622 = sshll.u32 %s4612, 4
          %s4623 = int_to_ptr.vmem [resolvable:$true] %s4622
          %4628 = dma.vmem_to_hbm [thread:$0]  %s4623, 512, %s4621, %s4609, 128, 128, 8
        $region96: #{tpu_custom_call.1} parent=59 // pred_fallthru
          _
      $region60: #{tpu_custom_call.1} parent=5 // pred_fallthru
        _
      %p4629 = scmp.le.s32.totalorder 2, %s29
      // Predicated region
      $region97: #{tpu_custom_call.1} parent=5 // pred_check
        %p4630 = pneg %p4629
      $region98: #{tpu_custom_call.1} parent=5 // pred_check_branch
        %4632 = sbr.rel (%p4630) target = $region100
      $region99: #{tpu_custom_call.1} parent=5 // pred_region
        %s4633 = ssub.s32 %s29, 2
        // Predicated region
        $region101: #{tpu_custom_call.1} parent=99 // pred_check
          %p4634 = pneg %p278
        $region102: #{tpu_custom_call.1} parent=99 // pred_check_branch
          %4636 = sbr.rel (%p4634) target = $region104
        $region103: #{tpu_custom_call.1} parent=99 // pred_region
          %s4637 = sand.u32 %s263, 1
          %s4638 = scalar_lea.sflag [#allocation4], %s4637
          %s4639 = sand.u32 %s263, 1
          %s4640 = smul.addr %s4639, 32
          %s4641 = scalar_lea.vmem [#allocation17], %s4640
          %4642 = dma.done %s4638, 512
        $region104: #{tpu_custom_call.1} parent=99 // pred_fallthru
          _
      $region100: #{tpu_custom_call.1} parent=5 // pred_fallthru
        _
    $region6: #{tpu_custom_call.1} parent=1 // loop_footer
      %s33 = sadd.s32 1, %s29
    $region7: #{tpu_custom_call.1} parent=1 // loop_footer_branch
      %28 = sbr.rel target = $region3
    $region8: #{tpu_custom_call.1} parent=1 // loop_exit
      _
    %4643 = vsyncpa [#allocation3], 1
    %s4644 = scalar_lea.sflag [#allocation3], 1
    %4645 = vsyncpa %s4644, 1
    %4646 = vsyncpa [#allocation7], 1
    %s4647 = scalar_lea.sflag [#allocation7], 1
    %4648 = vsyncpa %s4647, 1
    %4649 = vsyncpa [#allocation10], 1
    %4650 = vsyncpa [#allocation13], 1
    %4651 = vsyncpa [#allocation4], 1
    %s4652 = scalar_lea.sflag [#allocation4], 1
    %4653 = vsyncpa %s4652, 1
    %4654 = vsyncpa [#allocation5], 1
    %s4655 = scalar_lea.sflag [#allocation5], 1
    %4656 = vsyncpa %s4655, 1
    %4657 = vsyncpa [#allocation16], 1

</llo_original>
